<compile_context>
chip_gen: v5e
topology: v5e:2x2
jax: 0.10.0
libtpu: 0.0.40
codegen_flags: <defaults>
</compile_context>

<pallas_src>
import functools
import math

import numpy as np

import jax
import jax.numpy as jnp
from jax import lax
from jax.experimental import pallas as pl
from jax.experimental.pallas import tpu as pltpu


# Slab indices inside the packed weight blobs (shared by prepare_params and kernel).
M_CB, M_PC0, M_R1, M_R1C2, M_R2, M_R2C2, M_R3X, M_R3F, M_R3C2, M_PR = (
    0, 1, 4, 5, 6, 7, 8, 9, 10, 11)
R_CB, R_P, R_1, R_2 = 0, 3, 6, 9
B_CB, B_R1, B_R2, B_R3, B_PR = 0, 1, 2, 3, 4


# ----------------------------------------------------------------------------
# The fused forward kernel
# ----------------------------------------------------------------------------

def _fused_forward_kernel(grow_ref, feat_ref, rb_ref, mb_ref, b_ref,
                          label_ref, samp_ref,
                          *, n_img, H, W, ld, feat_dim):
    f32, bf16 = jnp.float32, jnp.bfloat16
    H2, W2 = H // 2, W // 2
    H4, W4 = H // 4, W // 4
    H8, W8 = H // 8, W // 8
    H16, W16 = H // 16, W // 16
    ld0, ld1, ld2, ld3, ld4 = ld

    def mslab(i, r, c):
        return mb_ref[i, :r, :c]

    def brow(i, w):
        return b_ref[i, :, :w]

    def rgather(base, ho, hi, x_bf):
        # stride-2 row gather: 3 exact 0/1 matmuls (one per ky tap)
        return [jnp.dot(rb_ref[base + k, :ho, :hi], x_bf,
                        preferred_element_type=f32) for k in range(3)]

    def sgather(x, h_img):
        # stride-1 row gather: sublane roll (XLU) + per-image boundary mask (VPU);
        # keeps these taps completely off the MXU.
        rows = x.shape[0]
        r = lax.broadcasted_iota(jnp.int32, (rows, 1), 0) % h_img
        up = jnp.where(r == 0, 0.0, pltpu.roll(x, 1, axis=0))            # row i-1
        dn = jnp.where(r == h_img - 1, 0.0, pltpu.roll(x, rows - 1, axis=0))  # row i+1
        return [up, x, dn]

    def cat3(gs):
        # lane-concat the 3 ky taps -> one ky-merged MXU contraction (bf16 operands)
        return jnp.concatenate(gs, axis=1).astype(bf16)

    relu = lambda v: jnp.maximum(v, 0.0)

    # ---- Gaussian label mask (per-row params precomputed in the wrapper) --------
    nh = n_img * H
    cx = grow_ref[:, 0:1]
    half_isx = grow_ref[:, 1:2]
    dyterm = grow_ref[:, 2:3]
    x_v = lax.broadcasted_iota(jnp.int32, (nh, W), 1).astype(f32)
    dx = x_v - cx
    gauss = jnp.exp(-(dx * dx * half_isx + dyterm))                      # (n*H, W) f32

    # ---- conv_block: Conv(1 -> ld0, s2, p1, bias) + ReLU -------------------------
    g = rgather(R_CB, n_img * H2, n_img * H, gauss.astype(bf16))
    cb = relu(jnp.dot(cat3(g), mslab(M_CB, 3 * W, W2 * ld0),
                      preferred_element_type=f32) + brow(B_CB, W2 * ld0))

    # ---- MaxPool2d(3, s2, p1): max over ky FIRST, then 3 column selections -------
    # (valid because Pc is a 0/1 selection and cb is post-ReLU / non-negative, so
    #  max commutes with the selection and zero-padding == -inf-padding).
    g = rgather(R_P, n_img * H4, n_img * H2, cb.astype(bf16))
    pmax = jnp.maximum(jnp.maximum(g[0], g[1]), g[2]).astype(bf16)
    x0 = None
    for px in range(3):
        tap = jnp.dot(pmax, mslab(M_PC0 + px, W2 * ld0, W4 * ld0),
                      preferred_element_type=f32)
        x0 = tap if x0 is None else jnp.maximum(x0, tap)                 # (n*H4, W4*ld0)

    # ---- res1 (BasicBlock, stride 2): conv1 and downsample share gathers ---------
    g = rgather(R_1, n_img * H8, n_img * H4, x0.astype(bf16))
    t = jnp.dot(cat3(g), mslab(M_R1, 3 * W4 * ld0, 2 * W8 * ld1),
                preferred_element_type=f32) + brow(B_R1, 2 * W8 * ld1)
    y = relu(t[:, :W8 * ld1])
    res = t[:, W8 * ld1:]
    x1 = relu(jnp.dot(cat3(sgather(y, H8)), mslab(M_R1C2, 3 * W8 * ld1, W8 * ld1),
                      preferred_element_type=f32) + res)                 # (n*H8, W8*ld1)

    # ---- res2 (BasicBlock, stride 2) ---------------------------------------------
    g = rgather(R_2, n_img * H16, n_img * H8, x1.astype(bf16))
    t = jnp.dot(cat3(g), mslab(M_R2, 3 * W8 * ld1, 2 * W16 * ld2),
                preferred_element_type=f32) + brow(B_R2, 2 * W16 * ld2)
    y = relu(t[:, :W16 * ld2])
    res = t[:, W16 * ld2:]
    x2 = relu(jnp.dot(cat3(sgather(y, H16)), mslab(M_R2C2, 3 * W16 * ld2, W16 * ld2),
                      preferred_element_type=f32) + res)                 # (n*H16, W16*ld2)

    # ---- res3 (BasicBlock, stride 1) on concat(x2, feat): Cin split, no concat ----
    gx = cat3(sgather(x2, H16))
    gf = cat3(sgather(feat_ref[...], H16))
    t = (jnp.dot(gx, mslab(M_R3X, 3 * W16 * ld2, 2 * W16 * ld3),
                 preferred_element_type=f32)
         + jnp.dot(gf, mslab(M_R3F, 3 * W16 * feat_dim, 2 * W16 * ld3),
                   preferred_element_type=f32)
         + brow(B_R3, 2 * W16 * ld3))
    y = relu(t[:, :W16 * ld3])
    res = t[:, W16 * ld3:]
    x3 = relu(jnp.dot(cat3(sgather(y, H16)), mslab(M_R3C2, 3 * W16 * ld3, W16 * ld3),
                      preferred_element_type=f32) + res)                 # (n*H16, W16*ld3)

    # ---- label_pred (eval-BN folded into weights) + samp_w_pred: one matmul -------
    # TODO(synk): late stages are only 16-64 lanes wide; repack pairs of images into
    # the lane dim at production sizes for unmasked stores / better vreg fill.
    pr = jnp.dot(cat3(sgather(x3, H16)), mslab(M_PR, 3 * W16 * ld3, 2 * W16 * ld4),
                 preferred_element_type=f32) + brow(B_PR, 2 * W16 * ld4)
    label_ref[...] = relu(pr[:, :W16 * ld4])
    samp_ref[...] = pr[:, W16 * ld4:]


# ----------------------------------------------------------------------------
# Parameter init (matches the PyTorch module's init scheme)
# ----------------------------------------------------------------------------

def init_params(key, layer_dims, feat_dim):
    ld = layer_dims

    def conv_w(k, cin, cout):
        n = 3 * 3 * cout
        return jax.random.normal(k, (3, 3, cin, cout), jnp.float32) * math.sqrt(2.0 / n)

    def small_b(k, cout):
        return 0.1 * jax.random.normal(k, (cout,), jnp.float32)

    ks = jax.random.split(key, 16)
    cin3 = ld[2] + feat_dim
    return {
        # conv_block: Conv2d(1, ld0, 3, s=2, p=1, bias=True) + ReLU (use_bn=False)
        "cb_w": conv_w(ks[0], 1, ld[0]), "cb_b": small_b(ks[1], ld[0]),
        # res1 (BasicBlock, stride 2): conv3x3 (no bias) x2 + downsample conv (bias)
        "r1_w1": conv_w(ks[2], ld[0], ld[1]),
        "r1_w2": conv_w(ks[3], ld[1], ld[1]),
        "r1_wd": conv_w(ks[4], ld[0], ld[1]), "r1_bd": small_b(ks[5], ld[1]),
        # res2 (BasicBlock, stride 2)
        "r2_w1": conv_w(ks[6], ld[1], ld[2]),
        "r2_w2": conv_w(ks[7], ld[2], ld[2]),
        "r2_wd": conv_w(ks[8], ld[1], ld[2]), "r2_bd": small_b(ks[9], ld[2]),
        # res3 (BasicBlock, stride 1) on concat(mask_enc, feat)
        "r3_w1": conv_w(ks[10], cin3, ld[3]),
        "r3_w2": conv_w(ks[11], ld[3], ld[3]),
        "r3_wd": conv_w(ks[12], cin3, ld[3]), "r3_bd": small_b(ks[13], ld[3]),
        # label_pred: Conv2d(ld3, ld4, bias=True) + BatchNorm (conv_block default) + ReLU
        "lp_w": conv_w(ks[14], ld[3], ld[4]), "lp_b": small_b(ks[15], ld[4]),
        "lp_bn_gamma": jnp.ones((ld[4],), jnp.float32),
        "lp_bn_beta": jnp.zeros((ld[4],), jnp.float32),
        "lp_bn_mean": jnp.zeros((ld[4],), jnp.float32),
        "lp_bn_var": jnp.ones((ld[4],), jnp.float32),
        # samp_w_pred: weight filled with 0, bias filled with 1 (reference init)
        "sw_w": jnp.zeros((3, 3, ld[3], ld[4]), jnp.float32),
        "sw_b": jnp.ones((ld[4],), jnp.float32),
    }


# ----------------------------------------------------------------------------
# One-time preprocessing: build packed R / M / bias blobs (host-side numpy).
# ----------------------------------------------------------------------------

def prepare_params(params, *, n_img, sz, feat_dim, layer_dims):
    H, W = sz[-2], sz[-1]
    assert H % 16 == 0 and W % 16 == 0
    ld = layer_dims
    H2, W2 = H // 2, W // 2
    H4, W4 = H // 4, W // 4
    H8, W8 = H // 8, W // 8
    H16, W16 = H // 16, W // 16

    def build_r(hi, ho, stride):
        m = np.zeros((3, n_img * ho, n_img * hi), np.float32)
        for ky in range(3):
            for n in range(n_img):
                for i in range(ho):
                    yi = stride * i + ky - 1
                    if 0 <= yi < hi:
                        m[ky, n * ho + i, n * hi + yi] = 1.0
        return m

    def build_m(w, wi, wo, stride):
        # ky-merged banded conv weight: (3*wi*cin, wo*cout)
        w = np.asarray(w, np.float32)
        _, _, cin, cout = w.shape
        m = np.zeros((3, wi * cin, wo * cout), np.float32)
        for ky in range(3):
            for j in range(wo):
                for kx in range(3):
                    xi = stride * j + kx - 1
                    if 0 <= xi < wi:
                        m[ky, xi * cin:(xi + 1) * cin, j * cout:(j + 1) * cout] = w[ky, kx]
        return m.reshape(3 * wi * cin, wo * cout)

    def build_pool_col(wi, wo, c, stride=2):
        m = np.zeros((3, wi * c, wo * c), np.float32)
        for px in range(3):
            for j in range(wo):
                xi = stride * j + px - 1
                if 0 <= xi < wi:
                    for ch in range(c):
                        m[px, xi * c + ch, j * c + ch] = 1.0
        return m

    def fused_m(w_main, w_ds, wi, wo, stride):
        # conv1 and downsample share the same row gathers -> hstack along out cols
        return np.concatenate(
            [build_m(w_main, wi, wo, stride), build_m(w_ds, wi, wo, stride)], axis=1)

    def tile_b(b, wo):
        return np.tile(np.asarray(b, np.float32), wo)

    # Fold eval-mode BatchNorm of label_pred into its conv weight / bias (per channel).
    eps = 1e-5
    gam = np.asarray(params["lp_bn_gamma"], np.float32)
    bet = np.asarray(params["lp_bn_beta"], np.float32)
    mu = np.asarray(params["lp_bn_mean"], np.float32)
    var = np.asarray(params["lp_bn_var"], np.float32)
    scale = gam / np.sqrt(var + eps)
    lp_w = np.asarray(params["lp_w"], np.float32) * scale
    lp_b = (np.asarray(params["lp_b"], np.float32) - mu) * scale + bet

    r3w1 = np.asarray(params["r3_w1"], np.float32)
    r3wd = np.asarray(params["r3_wd"], np.float32)

    # NOTE: the pool's zero-padding shortcut relies on conv_block ending in ReLU
    # (non-negative pooled input); keep that invariant if the activation changes.
    pc = build_pool_col(W2, W4, ld[0])

    m_slabs = [None] * 12
    m_slabs[M_CB] = build_m(params["cb_w"], W, W2, 2)
    m_slabs[M_PC0 + 0] = pc[0]
    m_slabs[M_PC0 + 1] = pc[1]
    m_slabs[M_PC0 + 2] = pc[2]
    m_slabs[M_R1] = fused_m(params["r1_w1"], params["r1_wd"], W4, W8, 2)
    m_slabs[M_R1C2] = build_m(params["r1_w2"], W8, W8, 1)
    m_slabs[M_R2] = fused_m(params["r2_w1"], params["r2_wd"], W8, W16, 2)
    m_slabs[M_R2C2] = build_m(params["r2_w2"], W16, W16, 1)
    m_slabs[M_R3X] = fused_m(r3w1[:, :, :ld[2], :], r3wd[:, :, :ld[2], :], W16, W16, 1)
    m_slabs[M_R3F] = fused_m(r3w1[:, :, ld[2]:, :], r3wd[:, :, ld[2]:, :], W16, W16, 1)
    m_slabs[M_R3C2] = build_m(params["r3_w2"], W16, W16, 1)
    m_slabs[M_PR] = np.concatenate(
        [build_m(lp_w, W16, W16, 1), build_m(params["sw_w"], W16, W16, 1)], axis=1)

    mr = max(s.shape[0] for s in m_slabs)
    mc = max(s.shape[1] for s in m_slabs)
    m_blob = np.zeros((len(m_slabs), mr, mc), np.float32)
    for i, slab in enumerate(m_slabs):
        m_blob[i, :slab.shape[0], :slab.shape[1]] = slab

    r_mats = [build_r(H, H2, 2), build_r(H2, H4, 2),
              build_r(H4, H8, 2), build_r(H8, H16, 2)]
    rr = max(m.shape[1] for m in r_mats)
    rc = max(m.shape[2] for m in r_mats)
    r_blob = np.zeros((3 * len(r_mats), rr, rc), np.float32)
    for li, rm in enumerate(r_mats):
        for ky in range(3):
            r_blob[3 * li + ky, :rm.shape[1], :rm.shape[2]] = rm[ky]

    b_rows = [None] * 5
    b_rows[B_CB] = tile_b(params["cb_b"], W2)
    b_rows[B_R1] = np.concatenate([np.zeros(W8 * ld[1], np.float32),
                                   tile_b(params["r1_bd"], W8)])
    b_rows[B_R2] = np.concatenate([np.zeros(W16 * ld[2], np.float32),
                                   tile_b(params["r2_bd"], W16)])
    b_rows[B_R3] = np.concatenate([np.zeros(W16 * ld[3], np.float32),
                                   tile_b(params["r3_bd"], W16)])
    b_rows[B_PR] = np.concatenate([tile_b(lp_b, W16), tile_b(params["sw_b"], W16)])
    bc = max(v.shape[0] for v in b_rows)
    b_blob = np.zeros((len(b_rows), 1, bc), np.float32)
    for i, v in enumerate(b_rows):
        b_blob[i, 0, :v.shape[0]] = v

    return {
        "r_blob": jnp.asarray(r_blob).astype(jnp.bfloat16),   # exact 0/1 gathers
        "m_blob": jnp.asarray(m_blob).astype(jnp.bfloat16),   # MXU weight operands
        "b_blob": jnp.asarray(b_blob),                        # f32 bias rows
    }


# ----------------------------------------------------------------------------
# Forward wrapper
# ----------------------------------------------------------------------------

def residual_ds16_feat_sw_box_forward(prep, bb, feat, *, sz, n_img, layer_dims, feat_dim):
    """bb: (num_frames, batch, 4) [x1,y1,w,h]; feat: (num_frames, batch, Cf, H/16, W/16)."""
    assert bb.ndim == 3
    num_frames, batch_sz = bb.shape[0], bb.shape[1]
    H, W = sz[-2], sz[-1]
    Hf, Wf = H // 16, W // 16
    ld4 = layer_dims[4]

    # bbox -> per-row Gaussian parameters (torch int() truncation of bbox coords;
    # w/h clamped to >=1 before the inverse-sigma so degenerate boxes don't NaN).
    bbt = jnp.trunc(bb.reshape(-1, 4).astype(jnp.float32))
    cx = bbt[:, 0] + 0.5 * bbt[:, 2]
    cy = bbt[:, 1] + 0.5 * bbt[:, 3]
    w = jnp.maximum(bbt[:, 2], 1.0)
    h = jnp.maximum(bbt[:, 3], 1.0)
    half_isx = 0.5 / (0.25 * w) ** 2
    half_isy = 0.5 / (0.25 * h) ** 2
    y_coord = jnp.arange(H, dtype=jnp.float32)[None, :]                  # (1, H)
    dy = y_coord - cy[:, None]
    dyterm = (half_isy[:, None] * dy * dy).reshape(-1)                   # (n_img*H,)
    grow = jnp.stack([jnp.repeat(cx, H), jnp.repeat(half_isx, H), dyterm], axis=1)

    # feat NCHW -> row layout (n_img*Hf, Wf*Cf)
    featf = feat.reshape(-1, feat_dim, Hf, Wf).astype(jnp.float32)
    feat_rows = jnp.transpose(featf, (0, 2, 3, 1)).reshape(n_img * Hf, Wf * feat_dim)

    kern = functools.partial(_fused_forward_kernel, n_img=n_img, H=H, W=W,
                             ld=tuple(layer_dims), feat_dim=feat_dim)
    vmem = pltpu.MemorySpace.VMEM
    out_sds = jax.ShapeDtypeStruct((n_img * Hf, Wf * ld4), jnp.float32)

    label_rows, samp_rows = pl.pallas_call(
        kern,
        out_shape=(out_sds, out_sds),
        in_specs=[pl.BlockSpec(memory_space=vmem)] * 5,
        out_specs=(pl.BlockSpec(memory_space=vmem),
                   pl.BlockSpec(memory_space=vmem)),
    )(grow, feat_rows, prep["r_blob"], prep["m_blob"], prep["b_blob"])

    def to_nchw(rows):
        x = rows.reshape(n_img, Hf, Wf, ld4)
        x = jnp.transpose(x, (0, 3, 1, 2))
        return x.reshape(num_frames, batch_sz, ld4, Hf, Wf)

    return to_nchw(label_rows), to_nchw(samp_rows)


# ----------------------------------------------------------------------------
# Main
# ----------------------------------------------------------------------------

if __name__ == "__main__":
    layer_dims = (8, 16, 16, 16, 2)
    feat_dim = 16
    num_frames, batch_sz = 2, 2
    sz = (64, 64)
    Hf, Wf = sz[0] // 16, sz[1] // 16
    n_img = num_frames * batch_sz

    key = jax.random.PRNGKey(0)
    kp, kb1, kb2, kf = jax.random.split(key, 4)
    params = init_params(kp, layer_dims, feat_dim)
    prep = prepare_params(params, n_img=n_img, sz=sz, feat_dim=feat_dim,
                          layer_dims=layer_dims)

    xy = jax.random.uniform(kb1, (num_frames, batch_sz, 2), minval=4.0, maxval=20.0)
    wh = jax.random.uniform(kb2, (num_frames, batch_sz, 2), minval=16.0, maxval=40.0)
    bb = jnp.concatenate([xy, wh], axis=-1)                               # (2, 2, 4)
    feat = jax.random.normal(kf, (num_frames, batch_sz, feat_dim, Hf, Wf), jnp.float32)

    fwd = jax.jit(functools.partial(
        residual_ds16_feat_sw_box_forward, sz=sz, n_img=n_img,
        layer_dims=layer_dims, feat_dim=feat_dim))

    label_enc, sample_w = fwd(prep, bb, feat)
    jax.block_until_ready((label_enc, sample_w))

    assert label_enc.shape == (num_frames, batch_sz, layer_dims[4], Hf, Wf)
    assert sample_w.shape == (num_frames, batch_sz, layer_dims[4], Hf, Wf)
    assert bool(jnp.all(jnp.isfinite(label_enc))) and bool(jnp.all(jnp.isfinite(sample_w)))
    print("KERNEL_OK")
</pallas_src>

<mosaic_0001>
module attributes {stable_mosaic.version = 11 : i64} {
  func.func @_fused_forward_kernel(%arg0: memref<256x3xf32, #tpu.memory_space<vmem>>, %arg1: memref<16x64xf32, #tpu.memory_space<vmem>>, %arg2: memref<12x128x256xbf16, #tpu.memory_space<vmem>>, %arg3: memref<12x384x256xbf16, #tpu.memory_space<vmem>>, %arg4: memref<5x1x256xf32, #tpu.memory_space<vmem>>, %arg5: memref<16x8xf32, #tpu.memory_space<vmem>>, %arg6: memref<16x8xf32, #tpu.memory_space<vmem>>) attributes {dimension_semantics = [], scalar_prefetch = 0 : i64, scratch_operands = 0 : i64, tpu.core_type = #tpu.core_type<tc>} {
    %c0 = arith.constant 0 : index
    %c0_0 = arith.constant 0 : index
    %0 = vector.load %arg0[%c0, %c0_0] : memref<256x3xf32, #tpu.memory_space<vmem>>, vector<256x1xf32>
    %c0_1 = arith.constant 0 : index
    %c1 = arith.constant 1 : index
    %1 = vector.load %arg0[%c0_1, %c1] : memref<256x3xf32, #tpu.memory_space<vmem>>, vector<256x1xf32>
    %c0_2 = arith.constant 0 : index
    %c2 = arith.constant 2 : index
    %2 = vector.load %arg0[%c0_2, %c2] : memref<256x3xf32, #tpu.memory_space<vmem>>, vector<256x1xf32>
    %3 = tpu.iota {dimensions = array<i32: 1>} : vector<256x64xi32>
    %4 = arith.sitofp %3 : vector<256x64xi32> to vector<256x64xf32>
    %5 = vector.broadcast %0 : vector<256x1xf32> to vector<256x64xf32>
    %6 = arith.subf %4, %5 : vector<256x64xf32>
    %7 = arith.mulf %6, %6 : vector<256x64xf32>
    %8 = vector.broadcast %1 : vector<256x1xf32> to vector<256x64xf32>
    %9 = arith.mulf %7, %8 : vector<256x64xf32>
    %10 = vector.broadcast %2 : vector<256x1xf32> to vector<256x64xf32>
    %11 = arith.addf %9, %10 : vector<256x64xf32>
    %cst = arith.constant 0.000000e+00 : f32
    %12 = vector.broadcast %cst : f32 to vector<256x64xf32>
    %13 = arith.subf %12, %11 : vector<256x64xf32>
    %14 = math.exp %13 : vector<256x64xf32>
    %15 = arith.truncf %14 : vector<256x64xf32> to vector<256x64xbf16>
    %c0_3 = arith.constant 0 : index
    %c0_4 = arith.constant 0 : index
    %c0_5 = arith.constant 0 : index
    %16 = vector.load %arg2[%c0_3, %c0_4, %c0_5] : memref<12x128x256xbf16, #tpu.memory_space<vmem>>, vector<1x128x256xbf16>
    %17 = vector.shape_cast %16 : vector<1x128x256xbf16> to vector<128x256xbf16>
    %cst_6 = arith.constant dense<0.000000e+00> : vector<128x64xf32>
    %18 = tpu.matmul %17, %15, %cst_6 {dimension_numbers = #tpu.dot_dimension_numbers<[1], [0], [0], [1], [0, 0, 1, 1], [], []>} : vector<128x256xbf16>, vector<256x64xbf16>, vector<128x64xf32> -> vector<128x64xf32>
    %c1_7 = arith.constant 1 : index
    %c0_8 = arith.constant 0 : index
    %c0_9 = arith.constant 0 : index
    %19 = vector.load %arg2[%c1_7, %c0_8, %c0_9] : memref<12x128x256xbf16, #tpu.memory_space<vmem>>, vector<1x128x256xbf16>
    %20 = vector.shape_cast %19 : vector<1x128x256xbf16> to vector<128x256xbf16>
    %cst_10 = arith.constant dense<0.000000e+00> : vector<128x64xf32>
    %21 = tpu.matmul %20, %15, %cst_10 {dimension_numbers = #tpu.dot_dimension_numbers<[1], [0], [0], [1], [0, 0, 1, 1], [], []>} : vector<128x256xbf16>, vector<256x64xbf16>, vector<128x64xf32> -> vector<128x64xf32>
    %c2_11 = arith.constant 2 : index
    %c0_12 = arith.constant 0 : index
    %c0_13 = arith.constant 0 : index
    %22 = vector.load %arg2[%c2_11, %c0_12, %c0_13] : memref<12x128x256xbf16, #tpu.memory_space<vmem>>, vector<1x128x256xbf16>
    %23 = vector.shape_cast %22 : vector<1x128x256xbf16> to vector<128x256xbf16>
    %cst_14 = arith.constant dense<0.000000e+00> : vector<128x64xf32>
    %24 = tpu.matmul %23, %15, %cst_14 {dimension_numbers = #tpu.dot_dimension_numbers<[1], [0], [0], [1], [0, 0, 1, 1], [], []>} : vector<128x256xbf16>, vector<256x64xbf16>, vector<128x64xf32> -> vector<128x64xf32>
    %25 = tpu.concatenate %18, %21, %24 in 1 : vector<128x64xf32>, vector<128x64xf32>, vector<128x64xf32> -> vector<128x192xf32>
    %26 = arith.truncf %25 : vector<128x192xf32> to vector<128x192xbf16>
    %c0_15 = arith.constant 0 : index
    %c0_16 = arith.constant 0 : index
    %c0_17 = arith.constant 0 : index
    %27 = vector.load %arg3[%c0_15, %c0_16, %c0_17] : memref<12x384x256xbf16, #tpu.memory_space<vmem>>, vector<1x192x256xbf16>
    %28 = vector.shape_cast %27 : vector<1x192x256xbf16> to vector<192x256xbf16>
    %cst_18 = arith.constant dense<0.000000e+00> : vector<128x256xf32>
    %29 = tpu.matmul %26, %28, %cst_18 {dimension_numbers = #tpu.dot_dimension_numbers<[1], [0], [0], [1], [0, 0, 1, 1], [], []>} : vector<128x192xbf16>, vector<192x256xbf16>, vector<128x256xf32> -> vector<128x256xf32>
    %c0_19 = arith.constant 0 : index
    %c0_20 = arith.constant 0 : index
    %c0_21 = arith.constant 0 : index
    %30 = vector.load %arg4[%c0_19, %c0_20, %c0_21] : memref<5x1x256xf32, #tpu.memory_space<vmem>>, vector<1x1x256xf32>
    %31 = vector.shape_cast %30 : vector<1x1x256xf32> to vector<1x256xf32>
    %32 = vector.broadcast %31 : vector<1x256xf32> to vector<128x256xf32>
    %33 = arith.addf %29, %32 : vector<128x256xf32>
    %cst_22 = arith.constant 0.000000e+00 : f32
    %34 = vector.broadcast %cst_22 : f32 to vector<128x256xf32>
    %35 = arith.maximumf %33, %34 : vector<128x256xf32>
    %36 = arith.truncf %35 : vector<128x256xf32> to vector<128x256xbf16>
    %c3 = arith.constant 3 : index
    %c0_23 = arith.constant 0 : index
    %c0_24 = arith.constant 0 : index
    %37 = vector.load %arg2[%c3, %c0_23, %c0_24] : memref<12x128x256xbf16, #tpu.memory_space<vmem>>, vector<1x64x128xbf16>
    %38 = vector.shape_cast %37 : vector<1x64x128xbf16> to vector<64x128xbf16>
    %cst_25 = arith.constant dense<0.000000e+00> : vector<64x256xf32>
    %39 = tpu.matmul %38, %36, %cst_25 {dimension_numbers = #tpu.dot_dimension_numbers<[1], [0], [0], [1], [0, 0, 1, 1], [], []>} : vector<64x128xbf16>, vector<128x256xbf16>, vector<64x256xf32> -> vector<64x256xf32>
    %c4 = arith.constant 4 : index
    %c0_26 = arith.constant 0 : index
    %c0_27 = arith.constant 0 : index
    %40 = vector.load %arg2[%c4, %c0_26, %c0_27] : memref<12x128x256xbf16, #tpu.memory_space<vmem>>, vector<1x64x128xbf16>
    %41 = vector.shape_cast %40 : vector<1x64x128xbf16> to vector<64x128xbf16>
    %cst_28 = arith.constant dense<0.000000e+00> : vector<64x256xf32>
    %42 = tpu.matmul %41, %36, %cst_28 {dimension_numbers = #tpu.dot_dimension_numbers<[1], [0], [0], [1], [0, 0, 1, 1], [], []>} : vector<64x128xbf16>, vector<128x256xbf16>, vector<64x256xf32> -> vector<64x256xf32>
    %c5 = arith.constant 5 : index
    %c0_29 = arith.constant 0 : index
    %c0_30 = arith.constant 0 : index
    %43 = vector.load %arg2[%c5, %c0_29, %c0_30] : memref<12x128x256xbf16, #tpu.memory_space<vmem>>, vector<1x64x128xbf16>
    %44 = vector.shape_cast %43 : vector<1x64x128xbf16> to vector<64x128xbf16>
    %cst_31 = arith.constant dense<0.000000e+00> : vector<64x256xf32>
    %45 = tpu.matmul %44, %36, %cst_31 {dimension_numbers = #tpu.dot_dimension_numbers<[1], [0], [0], [1], [0, 0, 1, 1], [], []>} : vector<64x128xbf16>, vector<128x256xbf16>, vector<64x256xf32> -> vector<64x256xf32>
    %46 = arith.maximumf %39, %42 : vector<64x256xf32>
    %47 = arith.maximumf %46, %45 : vector<64x256xf32>
    %48 = arith.truncf %47 : vector<64x256xf32> to vector<64x256xbf16>
    %c1_32 = arith.constant 1 : index
    %c0_33 = arith.constant 0 : index
    %c0_34 = arith.constant 0 : index
    %49 = vector.load %arg3[%c1_32, %c0_33, %c0_34] : memref<12x384x256xbf16, #tpu.memory_space<vmem>>, vector<1x256x128xbf16>
    %50 = vector.shape_cast %49 : vector<1x256x128xbf16> to vector<256x128xbf16>
    %cst_35 = arith.constant dense<0.000000e+00> : vector<64x128xf32>
    %51 = tpu.matmul %48, %50, %cst_35 {dimension_numbers = #tpu.dot_dimension_numbers<[1], [0], [0], [1], [0, 0, 1, 1], [], []>} : vector<64x256xbf16>, vector<256x128xbf16>, vector<64x128xf32> -> vector<64x128xf32>
    %c2_36 = arith.constant 2 : index
    %c0_37 = arith.constant 0 : index
    %c0_38 = arith.constant 0 : index
    %52 = vector.load %arg3[%c2_36, %c0_37, %c0_38] : memref<12x384x256xbf16, #tpu.memory_space<vmem>>, vector<1x256x128xbf16>
    %53 = vector.shape_cast %52 : vector<1x256x128xbf16> to vector<256x128xbf16>
    %cst_39 = arith.constant dense<0.000000e+00> : vector<64x128xf32>
    %54 = tpu.matmul %48, %53, %cst_39 {dimension_numbers = #tpu.dot_dimension_numbers<[1], [0], [0], [1], [0, 0, 1, 1], [], []>} : vector<64x256xbf16>, vector<256x128xbf16>, vector<64x128xf32> -> vector<64x128xf32>
    %55 = arith.maximumf %51, %54 : vector<64x128xf32>
    %c3_40 = arith.constant 3 : index
    %c0_41 = arith.constant 0 : index
    %c0_42 = arith.constant 0 : index
    %56 = vector.load %arg3[%c3_40, %c0_41, %c0_42] : memref<12x384x256xbf16, #tpu.memory_space<vmem>>, vector<1x256x128xbf16>
    %57 = vector.shape_cast %56 : vector<1x256x128xbf16> to vector<256x128xbf16>
    %cst_43 = arith.constant dense<0.000000e+00> : vector<64x128xf32>
    %58 = tpu.matmul %48, %57, %cst_43 {dimension_numbers = #tpu.dot_dimension_numbers<[1], [0], [0], [1], [0, 0, 1, 1], [], []>} : vector<64x256xbf16>, vector<256x128xbf16>, vector<64x128xf32> -> vector<64x128xf32>
    %59 = arith.maximumf %55, %58 : vector<64x128xf32>
    %60 = arith.truncf %59 : vector<64x128xf32> to vector<64x128xbf16>
    %c6 = arith.constant 6 : index
    %c0_44 = arith.constant 0 : index
    %c0_45 = arith.constant 0 : index
    %61 = vector.load %arg2[%c6, %c0_44, %c0_45] : memref<12x128x256xbf16, #tpu.memory_space<vmem>>, vector<1x32x64xbf16>
    %62 = vector.shape_cast %61 : vector<1x32x64xbf16> to vector<32x64xbf16>
    %cst_46 = arith.constant dense<0.000000e+00> : vector<32x128xf32>
    %63 = tpu.matmul %62, %60, %cst_46 {dimension_numbers = #tpu.dot_dimension_numbers<[1], [0], [0], [1], [0, 0, 1, 1], [], []>} : vector<32x64xbf16>, vector<64x128xbf16>, vector<32x128xf32> -> vector<32x128xf32>
    %c7 = arith.constant 7 : index
    %c0_47 = arith.constant 0 : index
    %c0_48 = arith.constant 0 : index
    %64 = vector.load %arg2[%c7, %c0_47, %c0_48] : memref<12x128x256xbf16, #tpu.memory_space<vmem>>, vector<1x32x64xbf16>
    %65 = vector.shape_cast %64 : vector<1x32x64xbf16> to vector<32x64xbf16>
    %cst_49 = arith.constant dense<0.000000e+00> : vector<32x128xf32>
    %66 = tpu.matmul %65, %60, %cst_49 {dimension_numbers = #tpu.dot_dimension_numbers<[1], [0], [0], [1], [0, 0, 1, 1], [], []>} : vector<32x64xbf16>, vector<64x128xbf16>, vector<32x128xf32> -> vector<32x128xf32>
    %c8 = arith.constant 8 : index
    %c0_50 = arith.constant 0 : index
    %c0_51 = arith.constant 0 : index
    %67 = vector.load %arg2[%c8, %c0_50, %c0_51] : memref<12x128x256xbf16, #tpu.memory_space<vmem>>, vector<1x32x64xbf16>
    %68 = vector.shape_cast %67 : vector<1x32x64xbf16> to vector<32x64xbf16>
    %cst_52 = arith.constant dense<0.000000e+00> : vector<32x128xf32>
    %69 = tpu.matmul %68, %60, %cst_52 {dimension_numbers = #tpu.dot_dimension_numbers<[1], [0], [0], [1], [0, 0, 1, 1], [], []>} : vector<32x64xbf16>, vector<64x128xbf16>, vector<32x128xf32> -> vector<32x128xf32>
    %70 = tpu.concatenate %63, %66, %69 in 1 : vector<32x128xf32>, vector<32x128xf32>, vector<32x128xf32> -> vector<32x384xf32>
    %71 = arith.truncf %70 : vector<32x384xf32> to vector<32x384xbf16>
    %c4_53 = arith.constant 4 : index
    %c0_54 = arith.constant 0 : index
    %c0_55 = arith.constant 0 : index
    %72 = vector.load %arg3[%c4_53, %c0_54, %c0_55] : memref<12x384x256xbf16, #tpu.memory_space<vmem>>, vector<1x384x256xbf16>
    %73 = vector.shape_cast %72 : vector<1x384x256xbf16> to vector<384x256xbf16>
    %cst_56 = arith.constant dense<0.000000e+00> : vector<32x256xf32>
    %74 = tpu.matmul %71, %73, %cst_56 {dimension_numbers = #tpu.dot_dimension_numbers<[1], [0], [0], [1], [0, 0, 1, 1], [], []>} : vector<32x384xbf16>, vector<384x256xbf16>, vector<32x256xf32> -> vector<32x256xf32>
    %c1_57 = arith.constant 1 : index
    %c0_58 = arith.constant 0 : index
    %c0_59 = arith.constant 0 : index
    %75 = vector.load %arg4[%c1_57, %c0_58, %c0_59] : memref<5x1x256xf32, #tpu.memory_space<vmem>>, vector<1x1x256xf32>
    %76 = vector.shape_cast %75 : vector<1x1x256xf32> to vector<1x256xf32>
    %77 = vector.broadcast %76 : vector<1x256xf32> to vector<32x256xf32>
    %78 = arith.addf %74, %77 : vector<32x256xf32>
    %79 = vector.extract_strided_slice %78 {offsets = [0, 0], sizes = [32, 128], strides = [1, 1]} : vector<32x256xf32> to vector<32x128xf32>
    %cst_60 = arith.constant 0.000000e+00 : f32
    %80 = vector.broadcast %cst_60 : f32 to vector<32x128xf32>
    %81 = arith.maximumf %79, %80 : vector<32x128xf32>
    %82 = vector.extract_strided_slice %78 {offsets = [0, 128], sizes = [32, 128], strides = [1, 1]} : vector<32x256xf32> to vector<32x128xf32>
    %83 = tpu.iota {dimensions = array<i32: 0>} : vector<32x1xi32>
    %c8_i32 = arith.constant 8 : i32
    %c0_i32 = arith.constant 0 : i32
    %84 = arith.cmpi eq, %c8_i32, %c0_i32 : i32
    %c1_i32 = arith.constant 1 : i32
    %85 = arith.select %84, %c1_i32, %c8_i32 : i32
    %86 = vector.broadcast %85 : i32 to vector<32x1xi32>
    %87 = arith.remsi %83, %86 : vector<32x1xi32>
    %c0_i32_61 = arith.constant 0 : i32
    %88 = vector.broadcast %c0_i32_61 : i32 to vector<32x1xi32>
    %89 = arith.cmpi ne, %87, %88 : vector<32x1xi32>
    %c0_i32_62 = arith.constant 0 : i32
    %90 = vector.broadcast %c0_i32_62 : i32 to vector<32x1xi32>
    %91 = arith.cmpi slt, %87, %90 : vector<32x1xi32>
    %c0_i32_63 = arith.constant 0 : i32
    %92 = arith.cmpi slt, %85, %c0_i32_63 : i32
    %93 = vector.broadcast %92 : i1 to vector<32x1xi1>
    %94 = vector.broadcast %93 : vector<32x1xi1> to vector<32x1xi1>
    %95 = arith.xori %91, %94 : vector<32x1xi1>
    %96 = arith.andi %95, %89 : vector<32x1xi1>
    %97 = vector.broadcast %85 : i32 to vector<32x1xi32>
    %98 = arith.addi %87, %97 : vector<32x1xi32>
    %99 = arith.select %96, %98, %87 : vector<32x1xi1>, vector<32x1xi32>
    %c0_i32_64 = arith.constant 0 : i32
    %100 = vector.broadcast %c0_i32_64 : i32 to vector<32x1xi32>
    %101 = arith.cmpi eq, %99, %100 : vector<32x1xi32>
    %c1_i32_65 = arith.constant 1 : i32
    %102 = tpu.dynamic_rotate %81 by %c1_i32_65 dim 0 : vector<32x128xf32>, i32 -> vector<32x128xf32>
    %cst_66 = arith.constant 0.000000e+00 : f32
    %103 = vector.shape_cast %101 : vector<32x1xi1> to vector<32x1xi1>
    %104 = vector.broadcast %103 : vector<32x1xi1> to vector<32x128xi1>
    %105 = vector.broadcast %cst_66 : f32 to vector<32x128xf32>
    %106 = arith.select %104, %105, %102 : vector<32x128xi1>, vector<32x128xf32>
    %c7_i32 = arith.constant 7 : i32
    %107 = vector.broadcast %c7_i32 : i32 to vector<32x1xi32>
    %108 = arith.cmpi eq, %99, %107 : vector<32x1xi32>
    %c31_i32 = arith.constant 31 : i32
    %109 = tpu.dynamic_rotate %81 by %c31_i32 dim 0 : vector<32x128xf32>, i32 -> vector<32x128xf32>
    %cst_67 = arith.constant 0.000000e+00 : f32
    %110 = vector.shape_cast %108 : vector<32x1xi1> to vector<32x1xi1>
    %111 = vector.broadcast %110 : vector<32x1xi1> to vector<32x128xi1>
    %112 = vector.broadcast %cst_67 : f32 to vector<32x128xf32>
    %113 = arith.select %111, %112, %109 : vector<32x128xi1>, vector<32x128xf32>
    %114 = tpu.concatenate %106, %81, %113 in 1 : vector<32x128xf32>, vector<32x128xf32>, vector<32x128xf32> -> vector<32x384xf32>
    %115 = arith.truncf %114 : vector<32x384xf32> to vector<32x384xbf16>
    %c5_68 = arith.constant 5 : index
    %c0_69 = arith.constant 0 : index
    %c0_70 = arith.constant 0 : index
    %116 = vector.load %arg3[%c5_68, %c0_69, %c0_70] : memref<12x384x256xbf16, #tpu.memory_space<vmem>>, vector<1x384x128xbf16>
    %117 = vector.shape_cast %116 : vector<1x384x128xbf16> to vector<384x128xbf16>
    %cst_71 = arith.constant dense<0.000000e+00> : vector<32x128xf32>
    %118 = tpu.matmul %115, %117, %cst_71 {dimension_numbers = #tpu.dot_dimension_numbers<[1], [0], [0], [1], [0, 0, 1, 1], [], []>} : vector<32x384xbf16>, vector<384x128xbf16>, vector<32x128xf32> -> vector<32x128xf32>
    %119 = arith.addf %118, %82 : vector<32x128xf32>
    %cst_72 = arith.constant 0.000000e+00 : f32
    %120 = vector.broadcast %cst_72 : f32 to vector<32x128xf32>
    %121 = arith.maximumf %119, %120 : vector<32x128xf32>
    %122 = arith.truncf %121 : vector<32x128xf32> to vector<32x128xbf16>
    %c9 = arith.constant 9 : index
    %c0_73 = arith.constant 0 : index
    %c0_74 = arith.constant 0 : index
    %123 = vector.load %arg2[%c9, %c0_73, %c0_74] : memref<12x128x256xbf16, #tpu.memory_space<vmem>>, vector<1x16x32xbf16>
    %124 = vector.shape_cast %123 : vector<1x16x32xbf16> to vector<16x32xbf16>
    %cst_75 = arith.constant dense<0.000000e+00> : vector<16x128xf32>
    %125 = tpu.matmul %124, %122, %cst_75 {dimension_numbers = #tpu.dot_dimension_numbers<[1], [0], [0], [1], [0, 0, 1, 1], [], []>} : vector<16x32xbf16>, vector<32x128xbf16>, vector<16x128xf32> -> vector<16x128xf32>
    %c10 = arith.constant 10 : index
    %c0_76 = arith.constant 0 : index
    %c0_77 = arith.constant 0 : index
    %126 = vector.load %arg2[%c10, %c0_76, %c0_77] : memref<12x128x256xbf16, #tpu.memory_space<vmem>>, vector<1x16x32xbf16>
    %127 = vector.shape_cast %126 : vector<1x16x32xbf16> to vector<16x32xbf16>
    %cst_78 = arith.constant dense<0.000000e+00> : vector<16x128xf32>
    %128 = tpu.matmul %127, %122, %cst_78 {dimension_numbers = #tpu.dot_dimension_numbers<[1], [0], [0], [1], [0, 0, 1, 1], [], []>} : vector<16x32xbf16>, vector<32x128xbf16>, vector<16x128xf32> -> vector<16x128xf32>
    %c11 = arith.constant 11 : index
    %c0_79 = arith.constant 0 : index
    %c0_80 = arith.constant 0 : index
    %129 = vector.load %arg2[%c11, %c0_79, %c0_80] : memref<12x128x256xbf16, #tpu.memory_space<vmem>>, vector<1x16x32xbf16>
    %130 = vector.shape_cast %129 : vector<1x16x32xbf16> to vector<16x32xbf16>
    %cst_81 = arith.constant dense<0.000000e+00> : vector<16x128xf32>
    %131 = tpu.matmul %130, %122, %cst_81 {dimension_numbers = #tpu.dot_dimension_numbers<[1], [0], [0], [1], [0, 0, 1, 1], [], []>} : vector<16x32xbf16>, vector<32x128xbf16>, vector<16x128xf32> -> vector<16x128xf32>
    %132 = tpu.concatenate %125, %128, %131 in 1 : vector<16x128xf32>, vector<16x128xf32>, vector<16x128xf32> -> vector<16x384xf32>
    %133 = arith.truncf %132 : vector<16x384xf32> to vector<16x384xbf16>
    %c6_82 = arith.constant 6 : index
    %c0_83 = arith.constant 0 : index
    %c0_84 = arith.constant 0 : index
    %134 = vector.load %arg3[%c6_82, %c0_83, %c0_84] : memref<12x384x256xbf16, #tpu.memory_space<vmem>>, vector<1x384x128xbf16>
    %135 = vector.shape_cast %134 : vector<1x384x128xbf16> to vector<384x128xbf16>
    %cst_85 = arith.constant dense<0.000000e+00> : vector<16x128xf32>
    %136 = tpu.matmul %133, %135, %cst_85 {dimension_numbers = #tpu.dot_dimension_numbers<[1], [0], [0], [1], [0, 0, 1, 1], [], []>} : vector<16x384xbf16>, vector<384x128xbf16>, vector<16x128xf32> -> vector<16x128xf32>
    %c2_86 = arith.constant 2 : index
    %c0_87 = arith.constant 0 : index
    %c0_88 = arith.constant 0 : index
    %137 = vector.load %arg4[%c2_86, %c0_87, %c0_88] : memref<5x1x256xf32, #tpu.memory_space<vmem>>, vector<1x1x128xf32>
    %138 = vector.shape_cast %137 : vector<1x1x128xf32> to vector<1x128xf32>
    %139 = vector.broadcast %138 : vector<1x128xf32> to vector<16x128xf32>
    %140 = arith.addf %136, %139 : vector<16x128xf32>
    %141 = vector.extract_strided_slice %140 {offsets = [0, 0], sizes = [16, 64], strides = [1, 1]} : vector<16x128xf32> to vector<16x64xf32>
    %cst_89 = arith.constant 0.000000e+00 : f32
    %142 = vector.broadcast %cst_89 : f32 to vector<16x64xf32>
    %143 = arith.maximumf %141, %142 : vector<16x64xf32>
    %144 = vector.extract_strided_slice %140 {offsets = [0, 64], sizes = [16, 64], strides = [1, 1]} : vector<16x128xf32> to vector<16x64xf32>
    %145 = tpu.iota {dimensions = array<i32: 0>} : vector<16x1xi32>
    %c4_i32 = arith.constant 4 : i32
    %c0_i32_90 = arith.constant 0 : i32
    %146 = arith.cmpi eq, %c4_i32, %c0_i32_90 : i32
    %c1_i32_91 = arith.constant 1 : i32
    %147 = arith.select %146, %c1_i32_91, %c4_i32 : i32
    %148 = vector.broadcast %147 : i32 to vector<16x1xi32>
    %149 = arith.remsi %145, %148 : vector<16x1xi32>
    %c0_i32_92 = arith.constant 0 : i32
    %150 = vector.broadcast %c0_i32_92 : i32 to vector<16x1xi32>
    %151 = arith.cmpi ne, %149, %150 : vector<16x1xi32>
    %c0_i32_93 = arith.constant 0 : i32
    %152 = vector.broadcast %c0_i32_93 : i32 to vector<16x1xi32>
    %153 = arith.cmpi slt, %149, %152 : vector<16x1xi32>
    %c0_i32_94 = arith.constant 0 : i32
    %154 = arith.cmpi slt, %147, %c0_i32_94 : i32
    %155 = vector.broadcast %154 : i1 to vector<16x1xi1>
    %156 = vector.broadcast %155 : vector<16x1xi1> to vector<16x1xi1>
    %157 = arith.xori %153, %156 : vector<16x1xi1>
    %158 = arith.andi %157, %151 : vector<16x1xi1>
    %159 = vector.broadcast %147 : i32 to vector<16x1xi32>
    %160 = arith.addi %149, %159 : vector<16x1xi32>
    %161 = arith.select %158, %160, %149 : vector<16x1xi1>, vector<16x1xi32>
    %c0_i32_95 = arith.constant 0 : i32
    %162 = vector.broadcast %c0_i32_95 : i32 to vector<16x1xi32>
    %163 = arith.cmpi eq, %161, %162 : vector<16x1xi32>
    %c1_i32_96 = arith.constant 1 : i32
    %164 = tpu.dynamic_rotate %143 by %c1_i32_96 dim 0 : vector<16x64xf32>, i32 -> vector<16x64xf32>
    %cst_97 = arith.constant 0.000000e+00 : f32
    %165 = vector.shape_cast %163 : vector<16x1xi1> to vector<16x1xi1>
    %166 = vector.broadcast %165 : vector<16x1xi1> to vector<16x64xi1>
    %167 = vector.broadcast %cst_97 : f32 to vector<16x64xf32>
    %168 = arith.select %166, %167, %164 : vector<16x64xi1>, vector<16x64xf32>
    %c3_i32 = arith.constant 3 : i32
    %169 = vector.broadcast %c3_i32 : i32 to vector<16x1xi32>
    %170 = arith.cmpi eq, %161, %169 : vector<16x1xi32>
    %c15_i32 = arith.constant 15 : i32
    %171 = tpu.dynamic_rotate %143 by %c15_i32 dim 0 : vector<16x64xf32>, i32 -> vector<16x64xf32>
    %cst_98 = arith.constant 0.000000e+00 : f32
    %172 = vector.shape_cast %170 : vector<16x1xi1> to vector<16x1xi1>
    %173 = vector.broadcast %172 : vector<16x1xi1> to vector<16x64xi1>
    %174 = vector.broadcast %cst_98 : f32 to vector<16x64xf32>
    %175 = arith.select %173, %174, %171 : vector<16x64xi1>, vector<16x64xf32>
    %176 = tpu.concatenate %168, %143, %175 in 1 : vector<16x64xf32>, vector<16x64xf32>, vector<16x64xf32> -> vector<16x192xf32>
    %177 = arith.truncf %176 : vector<16x192xf32> to vector<16x192xbf16>
    %c7_99 = arith.constant 7 : index
    %c0_100 = arith.constant 0 : index
    %c0_101 = arith.constant 0 : index
    %178 = vector.load %arg3[%c7_99, %c0_100, %c0_101] : memref<12x384x256xbf16, #tpu.memory_space<vmem>>, vector<1x192x64xbf16>
    %179 = vector.shape_cast %178 : vector<1x192x64xbf16> to vector<192x64xbf16>
    %cst_102 = arith.constant dense<0.000000e+00> : vector<16x64xf32>
    %180 = tpu.matmul %177, %179, %cst_102 {dimension_numbers = #tpu.dot_dimension_numbers<[1], [0], [0], [1], [0, 0, 1, 1], [], []>} : vector<16x192xbf16>, vector<192x64xbf16>, vector<16x64xf32> -> vector<16x64xf32>
    %181 = arith.addf %180, %144 : vector<16x64xf32>
    %cst_103 = arith.constant 0.000000e+00 : f32
    %182 = vector.broadcast %cst_103 : f32 to vector<16x64xf32>
    %183 = arith.maximumf %181, %182 : vector<16x64xf32>
    %184 = tpu.iota {dimensions = array<i32: 0>} : vector<16x1xi32>
    %c4_i32_104 = arith.constant 4 : i32
    %c0_i32_105 = arith.constant 0 : i32
    %185 = arith.cmpi eq, %c4_i32_104, %c0_i32_105 : i32
    %c1_i32_106 = arith.constant 1 : i32
    %186 = arith.select %185, %c1_i32_106, %c4_i32_104 : i32
    %187 = vector.broadcast %186 : i32 to vector<16x1xi32>
    %188 = arith.remsi %184, %187 : vector<16x1xi32>
    %c0_i32_107 = arith.constant 0 : i32
    %189 = vector.broadcast %c0_i32_107 : i32 to vector<16x1xi32>
    %190 = arith.cmpi ne, %188, %189 : vector<16x1xi32>
    %c0_i32_108 = arith.constant 0 : i32
    %191 = vector.broadcast %c0_i32_108 : i32 to vector<16x1xi32>
    %192 = arith.cmpi slt, %188, %191 : vector<16x1xi32>
    %c0_i32_109 = arith.constant 0 : i32
    %193 = arith.cmpi slt, %186, %c0_i32_109 : i32
    %194 = vector.broadcast %193 : i1 to vector<16x1xi1>
    %195 = vector.broadcast %194 : vector<16x1xi1> to vector<16x1xi1>
    %196 = arith.xori %192, %195 : vector<16x1xi1>
    %197 = arith.andi %196, %190 : vector<16x1xi1>
    %198 = vector.broadcast %186 : i32 to vector<16x1xi32>
    %199 = arith.addi %188, %198 : vector<16x1xi32>
    %200 = arith.select %197, %199, %188 : vector<16x1xi1>, vector<16x1xi32>
    %c0_i32_110 = arith.constant 0 : i32
    %201 = vector.broadcast %c0_i32_110 : i32 to vector<16x1xi32>
    %202 = arith.cmpi eq, %200, %201 : vector<16x1xi32>
    %c1_i32_111 = arith.constant 1 : i32
    %203 = tpu.dynamic_rotate %183 by %c1_i32_111 dim 0 : vector<16x64xf32>, i32 -> vector<16x64xf32>
    %cst_112 = arith.constant 0.000000e+00 : f32
    %204 = vector.shape_cast %202 : vector<16x1xi1> to vector<16x1xi1>
    %205 = vector.broadcast %204 : vector<16x1xi1> to vector<16x64xi1>
    %206 = vector.broadcast %cst_112 : f32 to vector<16x64xf32>
    %207 = arith.select %205, %206, %203 : vector<16x64xi1>, vector<16x64xf32>
    %c3_i32_113 = arith.constant 3 : i32
    %208 = vector.broadcast %c3_i32_113 : i32 to vector<16x1xi32>
    %209 = arith.cmpi eq, %200, %208 : vector<16x1xi32>
    %c15_i32_114 = arith.constant 15 : i32
    %210 = tpu.dynamic_rotate %183 by %c15_i32_114 dim 0 : vector<16x64xf32>, i32 -> vector<16x64xf32>
    %cst_115 = arith.constant 0.000000e+00 : f32
    %211 = vector.shape_cast %209 : vector<16x1xi1> to vector<16x1xi1>
    %212 = vector.broadcast %211 : vector<16x1xi1> to vector<16x64xi1>
    %213 = vector.broadcast %cst_115 : f32 to vector<16x64xf32>
    %214 = arith.select %212, %213, %210 : vector<16x64xi1>, vector<16x64xf32>
    %215 = tpu.concatenate %207, %183, %214 in 1 : vector<16x64xf32>, vector<16x64xf32>, vector<16x64xf32> -> vector<16x192xf32>
    %216 = arith.truncf %215 : vector<16x192xf32> to vector<16x192xbf16>
    %c0_116 = arith.constant 0 : index
    %c0_117 = arith.constant 0 : index
    %217 = vector.load %arg1[%c0_116, %c0_117] : memref<16x64xf32, #tpu.memory_space<vmem>>, vector<16x64xf32>
    %218 = tpu.iota {dimensions = array<i32: 0>} : vector<16x1xi32>
    %c4_i32_118 = arith.constant 4 : i32
    %c0_i32_119 = arith.constant 0 : i32
    %219 = arith.cmpi eq, %c4_i32_118, %c0_i32_119 : i32
    %c1_i32_120 = arith.constant 1 : i32
    %220 = arith.select %219, %c1_i32_120, %c4_i32_118 : i32
    %221 = vector.broadcast %220 : i32 to vector<16x1xi32>
    %222 = arith.remsi %218, %221 : vector<16x1xi32>
    %c0_i32_121 = arith.constant 0 : i32
    %223 = vector.broadcast %c0_i32_121 : i32 to vector<16x1xi32>
    %224 = arith.cmpi ne, %222, %223 : vector<16x1xi32>
    %c0_i32_122 = arith.constant 0 : i32
    %225 = vector.broadcast %c0_i32_122 : i32 to vector<16x1xi32>
    %226 = arith.cmpi slt, %222, %225 : vector<16x1xi32>
    %c0_i32_123 = arith.constant 0 : i32
    %227 = arith.cmpi slt, %220, %c0_i32_123 : i32
    %228 = vector.broadcast %227 : i1 to vector<16x1xi1>
    %229 = vector.broadcast %228 : vector<16x1xi1> to vector<16x1xi1>
    %230 = arith.xori %226, %229 : vector<16x1xi1>
    %231 = arith.andi %230, %224 : vector<16x1xi1>
    %232 = vector.broadcast %220 : i32 to vector<16x1xi32>
    %233 = arith.addi %222, %232 : vector<16x1xi32>
    %234 = arith.select %231, %233, %222 : vector<16x1xi1>, vector<16x1xi32>
    %c0_i32_124 = arith.constant 0 : i32
    %235 = vector.broadcast %c0_i32_124 : i32 to vector<16x1xi32>
    %236 = arith.cmpi eq, %234, %235 : vector<16x1xi32>
    %c1_i32_125 = arith.constant 1 : i32
    %237 = tpu.dynamic_rotate %217 by %c1_i32_125 dim 0 : vector<16x64xf32>, i32 -> vector<16x64xf32>
    %cst_126 = arith.constant 0.000000e+00 : f32
    %238 = vector.shape_cast %236 : vector<16x1xi1> to vector<16x1xi1>
    %239 = vector.broadcast %238 : vector<16x1xi1> to vector<16x64xi1>
    %240 = vector.broadcast %cst_126 : f32 to vector<16x64xf32>
    %241 = arith.select %239, %240, %237 : vector<16x64xi1>, vector<16x64xf32>
    %c3_i32_127 = arith.constant 3 : i32
    %242 = vector.broadcast %c3_i32_127 : i32 to vector<16x1xi32>
    %243 = arith.cmpi eq, %234, %242 : vector<16x1xi32>
    %c15_i32_128 = arith.constant 15 : i32
    %244 = tpu.dynamic_rotate %217 by %c15_i32_128 dim 0 : vector<16x64xf32>, i32 -> vector<16x64xf32>
    %cst_129 = arith.constant 0.000000e+00 : f32
    %245 = vector.shape_cast %243 : vector<16x1xi1> to vector<16x1xi1>
    %246 = vector.broadcast %245 : vector<16x1xi1> to vector<16x64xi1>
    %247 = vector.broadcast %cst_129 : f32 to vector<16x64xf32>
    %248 = arith.select %246, %247, %244 : vector<16x64xi1>, vector<16x64xf32>
    %249 = tpu.concatenate %241, %217, %248 in 1 : vector<16x64xf32>, vector<16x64xf32>, vector<16x64xf32> -> vector<16x192xf32>
    %250 = arith.truncf %249 : vector<16x192xf32> to vector<16x192xbf16>
    %c8_130 = arith.constant 8 : index
    %c0_131 = arith.constant 0 : index
    %c0_132 = arith.constant 0 : index
    %251 = vector.load %arg3[%c8_130, %c0_131, %c0_132] : memref<12x384x256xbf16, #tpu.memory_space<vmem>>, vector<1x192x128xbf16>
    %252 = vector.shape_cast %251 : vector<1x192x128xbf16> to vector<192x128xbf16>
    %cst_133 = arith.constant dense<0.000000e+00> : vector<16x128xf32>
    %253 = tpu.matmul %216, %252, %cst_133 {dimension_numbers = #tpu.dot_dimension_numbers<[1], [0], [0], [1], [0, 0, 1, 1], [], []>} : vector<16x192xbf16>, vector<192x128xbf16>, vector<16x128xf32> -> vector<16x128xf32>
    %c9_134 = arith.constant 9 : index
    %c0_135 = arith.constant 0 : index
    %c0_136 = arith.constant 0 : index
    %254 = vector.load %arg3[%c9_134, %c0_135, %c0_136] : memref<12x384x256xbf16, #tpu.memory_space<vmem>>, vector<1x192x128xbf16>
    %255 = vector.shape_cast %254 : vector<1x192x128xbf16> to vector<192x128xbf16>
    %cst_137 = arith.constant dense<0.000000e+00> : vector<16x128xf32>
    %256 = tpu.matmul %250, %255, %cst_137 {dimension_numbers = #tpu.dot_dimension_numbers<[1], [0], [0], [1], [0, 0, 1, 1], [], []>} : vector<16x192xbf16>, vector<192x128xbf16>, vector<16x128xf32> -> vector<16x128xf32>
    %257 = arith.addf %253, %256 : vector<16x128xf32>
    %c3_138 = arith.constant 3 : index
    %c0_139 = arith.constant 0 : index
    %c0_140 = arith.constant 0 : index
    %258 = vector.load %arg4[%c3_138, %c0_139, %c0_140] : memref<5x1x256xf32, #tpu.memory_space<vmem>>, vector<1x1x128xf32>
    %259 = vector.shape_cast %258 : vector<1x1x128xf32> to vector<1x128xf32>
    %260 = vector.broadcast %259 : vector<1x128xf32> to vector<16x128xf32>
    %261 = arith.addf %257, %260 : vector<16x128xf32>
    %262 = vector.extract_strided_slice %261 {offsets = [0, 0], sizes = [16, 64], strides = [1, 1]} : vector<16x128xf32> to vector<16x64xf32>
    %cst_141 = arith.constant 0.000000e+00 : f32
    %263 = vector.broadcast %cst_141 : f32 to vector<16x64xf32>
    %264 = arith.maximumf %262, %263 : vector<16x64xf32>
    %265 = vector.extract_strided_slice %261 {offsets = [0, 64], sizes = [16, 64], strides = [1, 1]} : vector<16x128xf32> to vector<16x64xf32>
    %266 = tpu.iota {dimensions = array<i32: 0>} : vector<16x1xi32>
    %c4_i32_142 = arith.constant 4 : i32
    %c0_i32_143 = arith.constant 0 : i32
    %267 = arith.cmpi eq, %c4_i32_142, %c0_i32_143 : i32
    %c1_i32_144 = arith.constant 1 : i32
    %268 = arith.select %267, %c1_i32_144, %c4_i32_142 : i32
    %269 = vector.broadcast %268 : i32 to vector<16x1xi32>
    %270 = arith.remsi %266, %269 : vector<16x1xi32>
    %c0_i32_145 = arith.constant 0 : i32
    %271 = vector.broadcast %c0_i32_145 : i32 to vector<16x1xi32>
    %272 = arith.cmpi ne, %270, %271 : vector<16x1xi32>
    %c0_i32_146 = arith.constant 0 : i32
    %273 = vector.broadcast %c0_i32_146 : i32 to vector<16x1xi32>
    %274 = arith.cmpi slt, %270, %273 : vector<16x1xi32>
    %c0_i32_147 = arith.constant 0 : i32
    %275 = arith.cmpi slt, %268, %c0_i32_147 : i32
    %276 = vector.broadcast %275 : i1 to vector<16x1xi1>
    %277 = vector.broadcast %276 : vector<16x1xi1> to vector<16x1xi1>
    %278 = arith.xori %274, %277 : vector<16x1xi1>
    %279 = arith.andi %278, %272 : vector<16x1xi1>
    %280 = vector.broadcast %268 : i32 to vector<16x1xi32>
    %281 = arith.addi %270, %280 : vector<16x1xi32>
    %282 = arith.select %279, %281, %270 : vector<16x1xi1>, vector<16x1xi32>
    %c0_i32_148 = arith.constant 0 : i32
    %283 = vector.broadcast %c0_i32_148 : i32 to vector<16x1xi32>
    %284 = arith.cmpi eq, %282, %283 : vector<16x1xi32>
    %c1_i32_149 = arith.constant 1 : i32
    %285 = tpu.dynamic_rotate %264 by %c1_i32_149 dim 0 : vector<16x64xf32>, i32 -> vector<16x64xf32>
    %cst_150 = arith.constant 0.000000e+00 : f32
    %286 = vector.shape_cast %284 : vector<16x1xi1> to vector<16x1xi1>
    %287 = vector.broadcast %286 : vector<16x1xi1> to vector<16x64xi1>
    %288 = vector.broadcast %cst_150 : f32 to vector<16x64xf32>
    %289 = arith.select %287, %288, %285 : vector<16x64xi1>, vector<16x64xf32>
    %c3_i32_151 = arith.constant 3 : i32
    %290 = vector.broadcast %c3_i32_151 : i32 to vector<16x1xi32>
    %291 = arith.cmpi eq, %282, %290 : vector<16x1xi32>
    %c15_i32_152 = arith.constant 15 : i32
    %292 = tpu.dynamic_rotate %264 by %c15_i32_152 dim 0 : vector<16x64xf32>, i32 -> vector<16x64xf32>
    %cst_153 = arith.constant 0.000000e+00 : f32
    %293 = vector.shape_cast %291 : vector<16x1xi1> to vector<16x1xi1>
    %294 = vector.broadcast %293 : vector<16x1xi1> to vector<16x64xi1>
    %295 = vector.broadcast %cst_153 : f32 to vector<16x64xf32>
    %296 = arith.select %294, %295, %292 : vector<16x64xi1>, vector<16x64xf32>
    %297 = tpu.concatenate %289, %264, %296 in 1 : vector<16x64xf32>, vector<16x64xf32>, vector<16x64xf32> -> vector<16x192xf32>
    %298 = arith.truncf %297 : vector<16x192xf32> to vector<16x192xbf16>
    %c10_154 = arith.constant 10 : index
    %c0_155 = arith.constant 0 : index
    %c0_156 = arith.constant 0 : index
    %299 = vector.load %arg3[%c10_154, %c0_155, %c0_156] : memref<12x384x256xbf16, #tpu.memory_space<vmem>>, vector<1x192x64xbf16>
    %300 = vector.shape_cast %299 : vector<1x192x64xbf16> to vector<192x64xbf16>
    %cst_157 = arith.constant dense<0.000000e+00> : vector<16x64xf32>
    %301 = tpu.matmul %298, %300, %cst_157 {dimension_numbers = #tpu.dot_dimension_numbers<[1], [0], [0], [1], [0, 0, 1, 1], [], []>} : vector<16x192xbf16>, vector<192x64xbf16>, vector<16x64xf32> -> vector<16x64xf32>
    %302 = arith.addf %301, %265 : vector<16x64xf32>
    %cst_158 = arith.constant 0.000000e+00 : f32
    %303 = vector.broadcast %cst_158 : f32 to vector<16x64xf32>
    %304 = arith.maximumf %302, %303 : vector<16x64xf32>
    %305 = tpu.iota {dimensions = array<i32: 0>} : vector<16x1xi32>
    %c4_i32_159 = arith.constant 4 : i32
    %c0_i32_160 = arith.constant 0 : i32
    %306 = arith.cmpi eq, %c4_i32_159, %c0_i32_160 : i32
    %c1_i32_161 = arith.constant 1 : i32
    %307 = arith.select %306, %c1_i32_161, %c4_i32_159 : i32
    %308 = vector.broadcast %307 : i32 to vector<16x1xi32>
    %309 = arith.remsi %305, %308 : vector<16x1xi32>
    %c0_i32_162 = arith.constant 0 : i32
    %310 = vector.broadcast %c0_i32_162 : i32 to vector<16x1xi32>
    %311 = arith.cmpi ne, %309, %310 : vector<16x1xi32>
    %c0_i32_163 = arith.constant 0 : i32
    %312 = vector.broadcast %c0_i32_163 : i32 to vector<16x1xi32>
    %313 = arith.cmpi slt, %309, %312 : vector<16x1xi32>
    %c0_i32_164 = arith.constant 0 : i32
    %314 = arith.cmpi slt, %307, %c0_i32_164 : i32
    %315 = vector.broadcast %314 : i1 to vector<16x1xi1>
    %316 = vector.broadcast %315 : vector<16x1xi1> to vector<16x1xi1>
    %317 = arith.xori %313, %316 : vector<16x1xi1>
    %318 = arith.andi %317, %311 : vector<16x1xi1>
    %319 = vector.broadcast %307 : i32 to vector<16x1xi32>
    %320 = arith.addi %309, %319 : vector<16x1xi32>
    %321 = arith.select %318, %320, %309 : vector<16x1xi1>, vector<16x1xi32>
    %c0_i32_165 = arith.constant 0 : i32
    %322 = vector.broadcast %c0_i32_165 : i32 to vector<16x1xi32>
    %323 = arith.cmpi eq, %321, %322 : vector<16x1xi32>
    %c1_i32_166 = arith.constant 1 : i32
    %324 = tpu.dynamic_rotate %304 by %c1_i32_166 dim 0 : vector<16x64xf32>, i32 -> vector<16x64xf32>
    %cst_167 = arith.constant 0.000000e+00 : f32
    %325 = vector.shape_cast %323 : vector<16x1xi1> to vector<16x1xi1>
    %326 = vector.broadcast %325 : vector<16x1xi1> to vector<16x64xi1>
    %327 = vector.broadcast %cst_167 : f32 to vector<16x64xf32>
    %328 = arith.select %326, %327, %324 : vector<16x64xi1>, vector<16x64xf32>
    %c3_i32_168 = arith.constant 3 : i32
    %329 = vector.broadcast %c3_i32_168 : i32 to vector<16x1xi32>
    %330 = arith.cmpi eq, %321, %329 : vector<16x1xi32>
    %c15_i32_169 = arith.constant 15 : i32
    %331 = tpu.dynamic_rotate %304 by %c15_i32_169 dim 0 : vector<16x64xf32>, i32 -> vector<16x64xf32>
    %cst_170 = arith.constant 0.000000e+00 : f32
    %332 = vector.shape_cast %330 : vector<16x1xi1> to vector<16x1xi1>
    %333 = vector.broadcast %332 : vector<16x1xi1> to vector<16x64xi1>
    %334 = vector.broadcast %cst_170 : f32 to vector<16x64xf32>
    %335 = arith.select %333, %334, %331 : vector<16x64xi1>, vector<16x64xf32>
    %336 = tpu.concatenate %328, %304, %335 in 1 : vector<16x64xf32>, vector<16x64xf32>, vector<16x64xf32> -> vector<16x192xf32>
    %337 = arith.truncf %336 : vector<16x192xf32> to vector<16x192xbf16>
    %c11_171 = arith.constant 11 : index
    %c0_172 = arith.constant 0 : index
    %c0_173 = arith.constant 0 : index
    %338 = vector.load %arg3[%c11_171, %c0_172, %c0_173] : memref<12x384x256xbf16, #tpu.memory_space<vmem>>, vector<1x192x16xbf16>
    %339 = vector.shape_cast %338 : vector<1x192x16xbf16> to vector<192x16xbf16>
    %cst_174 = arith.constant dense<0.000000e+00> : vector<16x16xf32>
    %340 = tpu.matmul %337, %339, %cst_174 {dimension_numbers = #tpu.dot_dimension_numbers<[1], [0], [0], [1], [0, 0, 1, 1], [], []>} : vector<16x192xbf16>, vector<192x16xbf16>, vector<16x16xf32> -> vector<16x16xf32>
    %c4_175 = arith.constant 4 : index
    %c0_176 = arith.constant 0 : index
    %c0_177 = arith.constant 0 : index
    %341 = vector.load %arg4[%c4_175, %c0_176, %c0_177] : memref<5x1x256xf32, #tpu.memory_space<vmem>>, vector<1x1x16xf32>
    %342 = vector.shape_cast %341 : vector<1x1x16xf32> to vector<1x16xf32>
    %343 = vector.broadcast %342 : vector<1x16xf32> to vector<16x16xf32>
    %344 = arith.addf %340, %343 : vector<16x16xf32>
    %345 = vector.extract_strided_slice %344 {offsets = [0, 0], sizes = [16, 8], strides = [1, 1]} : vector<16x16xf32> to vector<16x8xf32>
    %cst_178 = arith.constant 0.000000e+00 : f32
    %346 = vector.broadcast %cst_178 : f32 to vector<16x8xf32>
    %347 = arith.maximumf %345, %346 : vector<16x8xf32>
    %c0_179 = arith.constant 0 : index
    %c0_180 = arith.constant 0 : index
    %348 = vector.load %arg5[%c0_179, %c0_180] : memref<16x8xf32, #tpu.memory_space<vmem>>, vector<16x8xf32>
    tpu.vector_store %arg5[%c0_179, %c0_180], %347 {strides = array<i32>} : memref<16x8xf32, #tpu.memory_space<vmem>>, vector<16x8xf32>,
    %349 = vector.extract_strided_slice %344 {offsets = [0, 8], sizes = [16, 8], strides = [1, 1]} : vector<16x16xf32> to vector<16x8xf32>
    %c0_181 = arith.constant 0 : index
    %c0_182 = arith.constant 0 : index
    %350 = vector.load %arg6[%c0_181, %c0_182] : memref<16x8xf32, #tpu.memory_space<vmem>>, vector<16x8xf32>
    tpu.vector_store %arg6[%c0_181, %c0_182], %349 {strides = array<i32>} : memref<16x8xf32, #tpu.memory_space<vmem>>, vector<16x8xf32>,
    return
  }
}

</mosaic_0001>

<llo_original>
// kernel: residual_ds16_feat_sw_box_forward.1
$region0: #{residual_ds16_feat_sw_box_forward.1}
  #allocation0 [shape = 'u32[]', space=smem, size = 0x4, offset = 0x4, fixed_abs, tag = 'smem constant byte address 0x4 - core index']
  #allocation1 [shape = 'u32[72,128]{1,0:T(1,128)}', space=vmem, size = 0x9000, scoped, tag = 'internal scratch']
  %s0 = inlined_call_operand.vmem [shape: f32[256,3], index: 0, kind: input, shape index: {}]
  %s1 = inlined_call_operand.vmem [shape: f32[16,64], index: 1, kind: input, shape index: {}]
  %s2 = inlined_call_operand.hbm [shape: bf16[12,128,256], index: 2, kind: input, shape index: {}]
  %s3 = inlined_call_operand.hbm [shape: bf16[12,384,256], index: 3, kind: input, shape index: {}]
  %s4 = inlined_call_operand.hbm [shape: f32[5,1,256], index: 4, kind: input, shape index: {}]
  %s5 = inlined_call_operand.vmem [shape: f32[16,8], index: 5, kind: output, shape index: {0}]
  %s6 = inlined_call_operand.vmem [shape: f32[16,8], index: 6, kind: output, shape index: {1}]
  %7 = xla_tuple %s5, %s6
  %s8 = sld [smem:[#allocation0]]
  $region50: #{residual_ds16_feat_sw_box_forward.1} parent=0
    _
  %s10 = ssub.s32 1, %s8
  %s11 = scalar_select 0, %s10, %s8
  $region1: #{residual_ds16_feat_sw_box_forward.1} parent=0
    #allocation2 [shape = 'u8[786432]{0}', space=vmem, size = 0xc0000, scoped, tag = 'input window, operand 2, single buffered']
    #allocation3 [shape = 's32[1]{0}', space=sflag, size = 0x4, scoped, tag = 'scoped memory for residual_ds16_feat_sw_box_forward.1']
    #allocation4 [shape = 'u8[2359296]{0}', space=vmem, size = 0x240000, scoped, tag = 'input window, operand 3, single buffered']
    #allocation5 [shape = 's32[1]{0}', space=sflag, size = 0x4, scoped, tag = 'scoped memory for residual_ds16_feat_sw_box_forward.1']
    #allocation6 [shape = 'u8[5120]{0}', space=vmem, size = 0x1400, scoped, tag = 'input window, operand 4, single buffered']
    %12 = vsyncpa [#allocation3], 0
    %13 = vsyncpa [#allocation5], 0
    // Predicated region
    $region2: #{residual_ds16_feat_sw_box_forward.1} parent=1 // pred_check
      _
    $region3: #{residual_ds16_feat_sw_box_forward.1} parent=1 // pred_check_branch
      %15 = sbr.rel (0) target = $region5
    $region4: #{residual_ds16_feat_sw_box_forward.1} parent=1 // pred_region
      _
    $region5: #{residual_ds16_feat_sw_box_forward.1} parent=1 // pred_fallthru
      _
    // Predicated region
    $region6: #{residual_ds16_feat_sw_box_forward.1} parent=1 // pred_check
      _
    $region7: #{residual_ds16_feat_sw_box_forward.1} parent=1 // pred_check_branch
      %17 = sbr.rel (0) target = $region9
    $region8: #{residual_ds16_feat_sw_box_forward.1} parent=1 // pred_region
      _
    $region9: #{residual_ds16_feat_sw_box_forward.1} parent=1 // pred_fallthru
      _
    // Predicated region
    $region10: #{residual_ds16_feat_sw_box_forward.1} parent=1 // pred_check
      _
    $region11: #{residual_ds16_feat_sw_box_forward.1} parent=1 // pred_check_branch
      %19 = sbr.rel (0) target = $region13
    $region12: #{residual_ds16_feat_sw_box_forward.1} parent=1 // pred_region
      %21 = vsyncadd [#allocation3], 0
      %s22 = sshll.u32 %s2, 4
      %s23 = int_to_ptr.hbm [resolvable:$true] %s22
      %s24 = sshll.u32 [#allocation2], 4
      %s25 = int_to_ptr.vmem [resolvable:$true] %s24
      %30 = dma.hbm_to_vmem [thread:$0]  %s23, 24576, %s25, [#allocation3], 128, 128, 8
    $region13: #{residual_ds16_feat_sw_box_forward.1} parent=1 // pred_fallthru
      _
    // Predicated region
    $region14: #{residual_ds16_feat_sw_box_forward.1} parent=1 // pred_check
      _
    $region15: #{residual_ds16_feat_sw_box_forward.1} parent=1 // pred_check_branch
      %32 = sbr.rel (0) target = $region17
    $region16: #{residual_ds16_feat_sw_box_forward.1} parent=1 // pred_region
      %34 = vsyncadd [#allocation5], 0
      %s35 = sshll.u32 %s3, 4
      %s36 = int_to_ptr.hbm [resolvable:$true] %s35
      %s37 = sshll.u32 [#allocation4], 4
      %s38 = int_to_ptr.vmem [resolvable:$true] %s37
      %43 = dma.hbm_to_vmem [thread:$0]  %s36, 73728, %s38, [#allocation5], 128, 128, 8
    $region17: #{residual_ds16_feat_sw_box_forward.1} parent=1 // pred_fallthru
      _
    // Predicated region
    $region18: #{residual_ds16_feat_sw_box_forward.1} parent=1 // pred_check
      _
    $region19: #{residual_ds16_feat_sw_box_forward.1} parent=1 // pred_check_branch
      %45 = sbr.rel (0) target = $region21
    $region20: #{residual_ds16_feat_sw_box_forward.1} parent=1 // pred_region
      %47 = vsyncadd [#allocation5], 0
      %s48 = sshll.u32 %s4, 4
      %s49 = int_to_ptr.hbm [resolvable:$true] %s48
      %s50 = sshll.u32 [#allocation6], 4
      %s51 = int_to_ptr.vmem [resolvable:$true] %s50
      %56 = dma.hbm_to_vmem [thread:$0]  %s49, 160, %s51, [#allocation5], 32, 32, 2
    $region21: #{residual_ds16_feat_sw_box_forward.1} parent=1 // pred_fallthru
      _
    // Predicated region
    $region22: #{residual_ds16_feat_sw_box_forward.1} parent=1 // pred_check
      _
    $region23: #{residual_ds16_feat_sw_box_forward.1} parent=1 // pred_check_branch
      %58 = sbr.rel (0) target = $region25
    $region24: #{residual_ds16_feat_sw_box_forward.1} parent=1 // pred_region
      %60 = dma.done [#allocation3], 24576
    $region25: #{residual_ds16_feat_sw_box_forward.1} parent=1 // pred_fallthru
      _
    // Predicated region
    $region26: #{residual_ds16_feat_sw_box_forward.1} parent=1 // pred_check
      _
    $region27: #{residual_ds16_feat_sw_box_forward.1} parent=1 // pred_check_branch
      %62 = sbr.rel (0) target = $region29
    $region28: #{residual_ds16_feat_sw_box_forward.1} parent=1 // pred_region
      %64 = dma.done [#allocation5], 73728
    $region29: #{residual_ds16_feat_sw_box_forward.1} parent=1 // pred_fallthru
      _
    // Predicated region
    $region30: #{residual_ds16_feat_sw_box_forward.1} parent=1 // pred_check
      _
    $region31: #{residual_ds16_feat_sw_box_forward.1} parent=1 // pred_check_branch
      %66 = sbr.rel (0) target = $region33
    $region32: #{residual_ds16_feat_sw_box_forward.1} parent=1 // pred_region
      %68 = dma.done [#allocation5], 160
    $region33: #{residual_ds16_feat_sw_box_forward.1} parent=1 // pred_fallthru
      _
    %v70 = vld [vmem:[%s0] sm:$0xff]
    %v71 = vld [vmem:[%s0 + $0x8] sm:$0xff]
    %v72 = vld [vmem:[%s0 + $0x10] sm:$0xff]
    %v73 = vld [vmem:[%s0 + $0x18] sm:$0xff]
    %v74 = vld [vmem:[%s0 + $0x20] sm:$0xff]
    %v75 = vld [vmem:[%s0 + $0x28] sm:$0xff]
    %v76 = vld [vmem:[%s0 + $0x30] sm:$0xff]
    %v77 = vld [vmem:[%s0 + $0x38] sm:$0xff]
    %v78 = vld [vmem:[%s0 + $0x40] sm:$0xff]
    %v79 = vld [vmem:[%s0 + $0x48] sm:$0xff]
    %v80 = vld [vmem:[%s0 + $0x50] sm:$0xff]
    %v81 = vld [vmem:[%s0 + $0x58] sm:$0xff]
    %v82 = vld [vmem:[%s0 + $0x60] sm:$0xff]
    %v83 = vld [vmem:[%s0 + $0x68] sm:$0xff]
    %v84 = vld [vmem:[%s0 + $0x70] sm:$0xff]
    %v85 = vld [vmem:[%s0 + $0x78] sm:$0xff]
    %v86 = vld [vmem:[%s0 + $0x80] sm:$0xff]
    %v87 = vld [vmem:[%s0 + $0x88] sm:$0xff]
    %v88 = vld [vmem:[%s0 + $0x90] sm:$0xff]
    %v89 = vld [vmem:[%s0 + $0x98] sm:$0xff]
    %v90 = vld [vmem:[%s0 + $0xa0] sm:$0xff]
    %v91 = vld [vmem:[%s0 + $0xa8] sm:$0xff]
    %v92 = vld [vmem:[%s0 + $0xb0] sm:$0xff]
    %v93 = vld [vmem:[%s0 + $0xb8] sm:$0xff]
    %v94 = vld [vmem:[%s0 + $0xc0] sm:$0xff]
    %v95 = vld [vmem:[%s0 + $0xc8] sm:$0xff]
    %v96 = vld [vmem:[%s0 + $0xd0] sm:$0xff]
    %v97 = vld [vmem:[%s0 + $0xd8] sm:$0xff]
    %v98 = vld [vmem:[%s0 + $0xe0] sm:$0xff]
    %v99 = vld [vmem:[%s0 + $0xe8] sm:$0xff]
    %v100 = vld [vmem:[%s0 + $0xf0] sm:$0xff]
    %v101 = vld [vmem:[%s0 + $0xf8] sm:$0xff]
    %v102 = vlaneseq
    %v103 = vand.u32 %v102, 127
    %v104 = vcvt.s32.f32 %v103
    %106 = vset.pattern.permute.xlu0 0
    %107 = vperm.xlu0 %106, %v70
    %v108 = vpop.permute.xlu0 %107
    %111 = vset.pattern.permute.xlu0 0
    %112 = vperm.xlu0 %111, %v71
    %v113 = vpop.permute.xlu0 %112
    %116 = vset.pattern.permute.xlu0 0
    %117 = vperm.xlu0 %116, %v72
    %v118 = vpop.permute.xlu0 %117
    %121 = vset.pattern.permute.xlu0 0
    %122 = vperm.xlu0 %121, %v73
    %v123 = vpop.permute.xlu0 %122
    %126 = vset.pattern.permute.xlu0 0
    %127 = vperm.xlu0 %126, %v74
    %v128 = vpop.permute.xlu0 %127
    %131 = vset.pattern.permute.xlu0 0
    %132 = vperm.xlu0 %131, %v75
    %v133 = vpop.permute.xlu0 %132
    %136 = vset.pattern.permute.xlu0 0
    %137 = vperm.xlu0 %136, %v76
    %v138 = vpop.permute.xlu0 %137
    %141 = vset.pattern.permute.xlu0 0
    %142 = vperm.xlu0 %141, %v77
    %v143 = vpop.permute.xlu0 %142
    %146 = vset.pattern.permute.xlu0 0
    %147 = vperm.xlu0 %146, %v78
    %v148 = vpop.permute.xlu0 %147
    %151 = vset.pattern.permute.xlu0 0
    %152 = vperm.xlu0 %151, %v79
    %v153 = vpop.permute.xlu0 %152
    %156 = vset.pattern.permute.xlu0 0
    %157 = vperm.xlu0 %156, %v80
    %v158 = vpop.permute.xlu0 %157
    %161 = vset.pattern.permute.xlu0 0
    %162 = vperm.xlu0 %161, %v81
    %v163 = vpop.permute.xlu0 %162
    %166 = vset.pattern.permute.xlu0 0
    %167 = vperm.xlu0 %166, %v82
    %v168 = vpop.permute.xlu0 %167
    %171 = vset.pattern.permute.xlu0 0
    %172 = vperm.xlu0 %171, %v83
    %v173 = vpop.permute.xlu0 %172
    %176 = vset.pattern.permute.xlu0 0
    %177 = vperm.xlu0 %176, %v84
    %v178 = vpop.permute.xlu0 %177
    %181 = vset.pattern.permute.xlu0 0
    %182 = vperm.xlu0 %181, %v85
    %v183 = vpop.permute.xlu0 %182
    %186 = vset.pattern.permute.xlu0 0
    %187 = vperm.xlu0 %186, %v86
    %v188 = vpop.permute.xlu0 %187
    %191 = vset.pattern.permute.xlu0 0
    %192 = vperm.xlu0 %191, %v87
    %v193 = vpop.permute.xlu0 %192
    %196 = vset.pattern.permute.xlu0 0
    %197 = vperm.xlu0 %196, %v88
    %v198 = vpop.permute.xlu0 %197
    %201 = vset.pattern.permute.xlu0 0
    %202 = vperm.xlu0 %201, %v89
    %v203 = vpop.permute.xlu0 %202
    %206 = vset.pattern.permute.xlu0 0
    %207 = vperm.xlu0 %206, %v90
    %v208 = vpop.permute.xlu0 %207
    %211 = vset.pattern.permute.xlu0 0
    %212 = vperm.xlu0 %211, %v91
    %v213 = vpop.permute.xlu0 %212
    %216 = vset.pattern.permute.xlu0 0
    %217 = vperm.xlu0 %216, %v92
    %v218 = vpop.permute.xlu0 %217
    %221 = vset.pattern.permute.xlu0 0
    %222 = vperm.xlu0 %221, %v93
    %v223 = vpop.permute.xlu0 %222
    %226 = vset.pattern.permute.xlu0 0
    %227 = vperm.xlu0 %226, %v94
    %v228 = vpop.permute.xlu0 %227
    %231 = vset.pattern.permute.xlu0 0
    %232 = vperm.xlu0 %231, %v95
    %v233 = vpop.permute.xlu0 %232
    %236 = vset.pattern.permute.xlu0 0
    %237 = vperm.xlu0 %236, %v96
    %v238 = vpop.permute.xlu0 %237
    %241 = vset.pattern.permute.xlu0 0
    %242 = vperm.xlu0 %241, %v97
    %v243 = vpop.permute.xlu0 %242
    %246 = vset.pattern.permute.xlu0 0
    %247 = vperm.xlu0 %246, %v98
    %v248 = vpop.permute.xlu0 %247
    %251 = vset.pattern.permute.xlu0 0
    %252 = vperm.xlu0 %251, %v99
    %v253 = vpop.permute.xlu0 %252
    %256 = vset.pattern.permute.xlu0 0
    %257 = vperm.xlu0 %256, %v100
    %v258 = vpop.permute.xlu0 %257
    %261 = vset.pattern.permute.xlu0 0
    %262 = vperm.xlu0 %261, %v101
    %v263 = vpop.permute.xlu0 %262
    %v265 = vsub.f32 %v104, %v108
    %v266 = vsub.f32 %v104, %v113
    %v267 = vsub.f32 %v104, %v118
    %v268 = vsub.f32 %v104, %v123
    %v269 = vsub.f32 %v104, %v128
    %v270 = vsub.f32 %v104, %v133
    %v271 = vsub.f32 %v104, %v138
    %v272 = vsub.f32 %v104, %v143
    %v273 = vsub.f32 %v104, %v148
    %v274 = vsub.f32 %v104, %v153
    %v275 = vsub.f32 %v104, %v158
    %v276 = vsub.f32 %v104, %v163
    %v277 = vsub.f32 %v104, %v168
    %v278 = vsub.f32 %v104, %v173
    %v279 = vsub.f32 %v104, %v178
    %v280 = vsub.f32 %v104, %v183
    %v281 = vsub.f32 %v104, %v188
    %v282 = vsub.f32 %v104, %v193
    %v283 = vsub.f32 %v104, %v198
    %v284 = vsub.f32 %v104, %v203
    %v285 = vsub.f32 %v104, %v208
    %v286 = vsub.f32 %v104, %v213
    %v287 = vsub.f32 %v104, %v218
    %v288 = vsub.f32 %v104, %v223
    %v289 = vsub.f32 %v104, %v228
    %v290 = vsub.f32 %v104, %v233
    %v291 = vsub.f32 %v104, %v238
    %v292 = vsub.f32 %v104, %v243
    %v293 = vsub.f32 %v104, %v248
    %v294 = vsub.f32 %v104, %v253
    %v295 = vsub.f32 %v104, %v258
    %v296 = vsub.f32 %v104, %v263
    %v297 = vmul.f32 %v265, %v265
    %v298 = vmul.f32 %v266, %v266
    %v299 = vmul.f32 %v267, %v267
    %v300 = vmul.f32 %v268, %v268
    %v301 = vmul.f32 %v269, %v269
    %v302 = vmul.f32 %v270, %v270
    %v303 = vmul.f32 %v271, %v271
    %v304 = vmul.f32 %v272, %v272
    %v305 = vmul.f32 %v273, %v273
    %v306 = vmul.f32 %v274, %v274
    %v307 = vmul.f32 %v275, %v275
    %v308 = vmul.f32 %v276, %v276
    %v309 = vmul.f32 %v277, %v277
    %v310 = vmul.f32 %v278, %v278
    %v311 = vmul.f32 %v279, %v279
    %v312 = vmul.f32 %v280, %v280
    %v313 = vmul.f32 %v281, %v281
    %v314 = vmul.f32 %v282, %v282
    %v315 = vmul.f32 %v283, %v283
    %v316 = vmul.f32 %v284, %v284
    %v317 = vmul.f32 %v285, %v285
    %v318 = vmul.f32 %v286, %v286
    %v319 = vmul.f32 %v287, %v287
    %v320 = vmul.f32 %v288, %v288
    %v321 = vmul.f32 %v289, %v289
    %v322 = vmul.f32 %v290, %v290
    %v323 = vmul.f32 %v291, %v291
    %v324 = vmul.f32 %v292, %v292
    %v325 = vmul.f32 %v293, %v293
    %v326 = vmul.f32 %v294, %v294
    %v327 = vmul.f32 %v295, %v295
    %v328 = vmul.f32 %v296, %v296
    %329 = vset.pattern.permute.xlu0 1
    %330 = vperm.xlu0 %329, %v70
    %v331 = vpop.permute.xlu0 %330
    %333 = vset.pattern.permute.xlu0 1
    %334 = vperm.xlu0 %333, %v71
    %v335 = vpop.permute.xlu0 %334
    %337 = vset.pattern.permute.xlu0 1
    %338 = vperm.xlu0 %337, %v72
    %v339 = vpop.permute.xlu0 %338
    %341 = vset.pattern.permute.xlu0 1
    %342 = vperm.xlu0 %341, %v73
    %v343 = vpop.permute.xlu0 %342
    %345 = vset.pattern.permute.xlu0 1
    %346 = vperm.xlu0 %345, %v74
    %v347 = vpop.permute.xlu0 %346
    %349 = vset.pattern.permute.xlu0 1
    %350 = vperm.xlu0 %349, %v75
    %v351 = vpop.permute.xlu0 %350
    %353 = vset.pattern.permute.xlu0 1
    %354 = vperm.xlu0 %353, %v76
    %v355 = vpop.permute.xlu0 %354
    %357 = vset.pattern.permute.xlu0 1
    %358 = vperm.xlu0 %357, %v77
    %v359 = vpop.permute.xlu0 %358
    %361 = vset.pattern.permute.xlu0 1
    %362 = vperm.xlu0 %361, %v78
    %v363 = vpop.permute.xlu0 %362
    %365 = vset.pattern.permute.xlu0 1
    %366 = vperm.xlu0 %365, %v79
    %v367 = vpop.permute.xlu0 %366
    %369 = vset.pattern.permute.xlu0 1
    %370 = vperm.xlu0 %369, %v80
    %v371 = vpop.permute.xlu0 %370
    %373 = vset.pattern.permute.xlu0 1
    %374 = vperm.xlu0 %373, %v81
    %v375 = vpop.permute.xlu0 %374
    %377 = vset.pattern.permute.xlu0 1
    %378 = vperm.xlu0 %377, %v82
    %v379 = vpop.permute.xlu0 %378
    %381 = vset.pattern.permute.xlu0 1
    %382 = vperm.xlu0 %381, %v83
    %v383 = vpop.permute.xlu0 %382
    %385 = vset.pattern.permute.xlu0 1
    %386 = vperm.xlu0 %385, %v84
    %v387 = vpop.permute.xlu0 %386
    %389 = vset.pattern.permute.xlu0 1
    %390 = vperm.xlu0 %389, %v85
    %v391 = vpop.permute.xlu0 %390
    %393 = vset.pattern.permute.xlu0 1
    %394 = vperm.xlu0 %393, %v86
    %v395 = vpop.permute.xlu0 %394
    %397 = vset.pattern.permute.xlu0 1
    %398 = vperm.xlu0 %397, %v87
    %v399 = vpop.permute.xlu0 %398
    %401 = vset.pattern.permute.xlu0 1
    %402 = vperm.xlu0 %401, %v88
    %v403 = vpop.permute.xlu0 %402
    %405 = vset.pattern.permute.xlu0 1
    %406 = vperm.xlu0 %405, %v89
    %v407 = vpop.permute.xlu0 %406
    %409 = vset.pattern.permute.xlu0 1
    %410 = vperm.xlu0 %409, %v90
    %v411 = vpop.permute.xlu0 %410
    %413 = vset.pattern.permute.xlu0 1
    %414 = vperm.xlu0 %413, %v91
    %v415 = vpop.permute.xlu0 %414
    %417 = vset.pattern.permute.xlu0 1
    %418 = vperm.xlu0 %417, %v92
    %v419 = vpop.permute.xlu0 %418
    %421 = vset.pattern.permute.xlu0 1
    %422 = vperm.xlu0 %421, %v93
    %v423 = vpop.permute.xlu0 %422
    %425 = vset.pattern.permute.xlu0 1
    %426 = vperm.xlu0 %425, %v94
    %v427 = vpop.permute.xlu0 %426
    %429 = vset.pattern.permute.xlu0 1
    %430 = vperm.xlu0 %429, %v95
    %v431 = vpop.permute.xlu0 %430
    %433 = vset.pattern.permute.xlu0 1
    %434 = vperm.xlu0 %433, %v96
    %v435 = vpop.permute.xlu0 %434
    %437 = vset.pattern.permute.xlu0 1
    %438 = vperm.xlu0 %437, %v97
    %v439 = vpop.permute.xlu0 %438
    %441 = vset.pattern.permute.xlu0 1
    %442 = vperm.xlu0 %441, %v98
    %v443 = vpop.permute.xlu0 %442
    %445 = vset.pattern.permute.xlu0 1
    %446 = vperm.xlu0 %445, %v99
    %v447 = vpop.permute.xlu0 %446
    %449 = vset.pattern.permute.xlu0 1
    %450 = vperm.xlu0 %449, %v100
    %v451 = vpop.permute.xlu0 %450
    %453 = vset.pattern.permute.xlu0 1
    %454 = vperm.xlu0 %453, %v101
    %v455 = vpop.permute.xlu0 %454
    %v457 = vmul.f32 %v297, %v331
    %v458 = vmul.f32 %v298, %v335
    %v459 = vmul.f32 %v299, %v339
    %v460 = vmul.f32 %v300, %v343
    %v461 = vmul.f32 %v301, %v347
    %v462 = vmul.f32 %v302, %v351
    %v463 = vmul.f32 %v303, %v355
    %v464 = vmul.f32 %v304, %v359
    %v465 = vmul.f32 %v305, %v363
    %v466 = vmul.f32 %v306, %v367
    %v467 = vmul.f32 %v307, %v371
    %v468 = vmul.f32 %v308, %v375
    %v469 = vmul.f32 %v309, %v379
    %v470 = vmul.f32 %v310, %v383
    %v471 = vmul.f32 %v311, %v387
    %v472 = vmul.f32 %v312, %v391
    %v473 = vmul.f32 %v313, %v395
    %v474 = vmul.f32 %v314, %v399
    %v475 = vmul.f32 %v315, %v403
    %v476 = vmul.f32 %v316, %v407
    %v477 = vmul.f32 %v317, %v411
    %v478 = vmul.f32 %v318, %v415
    %v479 = vmul.f32 %v319, %v419
    %v480 = vmul.f32 %v320, %v423
    %v481 = vmul.f32 %v321, %v427
    %v482 = vmul.f32 %v322, %v431
    %v483 = vmul.f32 %v323, %v435
    %v484 = vmul.f32 %v324, %v439
    %v485 = vmul.f32 %v325, %v443
    %v486 = vmul.f32 %v326, %v447
    %v487 = vmul.f32 %v327, %v451
    %v488 = vmul.f32 %v328, %v455
    %489 = vset.pattern.permute.xlu0 2
    %490 = vperm.xlu0 %489, %v70
    %v491 = vpop.permute.xlu0 %490
    %493 = vset.pattern.permute.xlu0 2
    %494 = vperm.xlu0 %493, %v71
    %v495 = vpop.permute.xlu0 %494
    %497 = vset.pattern.permute.xlu0 2
    %498 = vperm.xlu0 %497, %v72
    %v499 = vpop.permute.xlu0 %498
    %501 = vset.pattern.permute.xlu0 2
    %502 = vperm.xlu0 %501, %v73
    %v503 = vpop.permute.xlu0 %502
    %505 = vset.pattern.permute.xlu0 2
    %506 = vperm.xlu0 %505, %v74
    %v507 = vpop.permute.xlu0 %506
    %509 = vset.pattern.permute.xlu0 2
    %510 = vperm.xlu0 %509, %v75
    %v511 = vpop.permute.xlu0 %510
    %513 = vset.pattern.permute.xlu0 2
    %514 = vperm.xlu0 %513, %v76
    %v515 = vpop.permute.xlu0 %514
    %517 = vset.pattern.permute.xlu0 2
    %518 = vperm.xlu0 %517, %v77
    %v519 = vpop.permute.xlu0 %518
    %521 = vset.pattern.permute.xlu0 2
    %522 = vperm.xlu0 %521, %v78
    %v523 = vpop.permute.xlu0 %522
    %525 = vset.pattern.permute.xlu0 2
    %526 = vperm.xlu0 %525, %v79
    %v527 = vpop.permute.xlu0 %526
    %529 = vset.pattern.permute.xlu0 2
    %530 = vperm.xlu0 %529, %v80
    %v531 = vpop.permute.xlu0 %530
    %533 = vset.pattern.permute.xlu0 2
    %534 = vperm.xlu0 %533, %v81
    %v535 = vpop.permute.xlu0 %534
    %537 = vset.pattern.permute.xlu0 2
    %538 = vperm.xlu0 %537, %v82
    %v539 = vpop.permute.xlu0 %538
    %541 = vset.pattern.permute.xlu0 2
    %542 = vperm.xlu0 %541, %v83
    %v543 = vpop.permute.xlu0 %542
    %545 = vset.pattern.permute.xlu0 2
    %546 = vperm.xlu0 %545, %v84
    %v547 = vpop.permute.xlu0 %546
    %549 = vset.pattern.permute.xlu0 2
    %550 = vperm.xlu0 %549, %v85
    %v551 = vpop.permute.xlu0 %550
    %553 = vset.pattern.permute.xlu0 2
    %554 = vperm.xlu0 %553, %v86
    %v555 = vpop.permute.xlu0 %554
    %557 = vset.pattern.permute.xlu0 2
    %558 = vperm.xlu0 %557, %v87
    %v559 = vpop.permute.xlu0 %558
    %561 = vset.pattern.permute.xlu0 2
    %562 = vperm.xlu0 %561, %v88
    %v563 = vpop.permute.xlu0 %562
    %565 = vset.pattern.permute.xlu0 2
    %566 = vperm.xlu0 %565, %v89
    %v567 = vpop.permute.xlu0 %566
    %569 = vset.pattern.permute.xlu0 2
    %570 = vperm.xlu0 %569, %v90
    %v571 = vpop.permute.xlu0 %570
    %573 = vset.pattern.permute.xlu0 2
    %574 = vperm.xlu0 %573, %v91
    %v575 = vpop.permute.xlu0 %574
    %577 = vset.pattern.permute.xlu0 2
    %578 = vperm.xlu0 %577, %v92
    %v579 = vpop.permute.xlu0 %578
    %581 = vset.pattern.permute.xlu0 2
    %582 = vperm.xlu0 %581, %v93
    %v583 = vpop.permute.xlu0 %582
    %585 = vset.pattern.permute.xlu0 2
    %586 = vperm.xlu0 %585, %v94
    %v587 = vpop.permute.xlu0 %586
    %589 = vset.pattern.permute.xlu0 2
    %590 = vperm.xlu0 %589, %v95
    %v591 = vpop.permute.xlu0 %590
    %593 = vset.pattern.permute.xlu0 2
    %594 = vperm.xlu0 %593, %v96
    %v595 = vpop.permute.xlu0 %594
    %597 = vset.pattern.permute.xlu0 2
    %598 = vperm.xlu0 %597, %v97
    %v599 = vpop.permute.xlu0 %598
    %601 = vset.pattern.permute.xlu0 2
    %602 = vperm.xlu0 %601, %v98
    %v603 = vpop.permute.xlu0 %602
    %605 = vset.pattern.permute.xlu0 2
    %606 = vperm.xlu0 %605, %v99
    %v607 = vpop.permute.xlu0 %606
    %609 = vset.pattern.permute.xlu0 2
    %610 = vperm.xlu0 %609, %v100
    %v611 = vpop.permute.xlu0 %610
    %613 = vset.pattern.permute.xlu0 2
    %614 = vperm.xlu0 %613, %v101
    %v615 = vpop.permute.xlu0 %614
    %v617 = vadd.f32 %v457, %v491
    %v618 = vadd.f32 %v458, %v495
    %v619 = vadd.f32 %v459, %v499
    %v620 = vadd.f32 %v460, %v503
    %v621 = vadd.f32 %v461, %v507
    %v622 = vadd.f32 %v462, %v511
    %v623 = vadd.f32 %v463, %v515
    %v624 = vadd.f32 %v464, %v519
    %v625 = vadd.f32 %v465, %v523
    %v626 = vadd.f32 %v466, %v527
    %v627 = vadd.f32 %v467, %v531
    %v628 = vadd.f32 %v468, %v535
    %v629 = vadd.f32 %v469, %v539
    %v630 = vadd.f32 %v470, %v543
    %v631 = vadd.f32 %v471, %v547
    %v632 = vadd.f32 %v472, %v551
    %v633 = vadd.f32 %v473, %v555
    %v634 = vadd.f32 %v474, %v559
    %v635 = vadd.f32 %v475, %v563
    %v636 = vadd.f32 %v476, %v567
    %v637 = vadd.f32 %v477, %v571
    %v638 = vadd.f32 %v478, %v575
    %v639 = vadd.f32 %v479, %v579
    %v640 = vadd.f32 %v480, %v583
    %v641 = vadd.f32 %v481, %v587
    %v642 = vadd.f32 %v482, %v591
    %v643 = vadd.f32 %v483, %v595
    %v644 = vadd.f32 %v484, %v599
    %v645 = vadd.f32 %v485, %v603
    %v646 = vadd.f32 %v486, %v607
    %v647 = vadd.f32 %v487, %v611
    %v648 = vadd.f32 %v488, %v615
    %v649 = vsub.f32 0.0, %v617
    %v650 = vsub.f32 0.0, %v618
    %v651 = vsub.f32 0.0, %v619
    %v652 = vsub.f32 0.0, %v620
    %v653 = vsub.f32 0.0, %v621
    %v654 = vsub.f32 0.0, %v622
    %v655 = vsub.f32 0.0, %v623
    %v656 = vsub.f32 0.0, %v624
    %v657 = vsub.f32 0.0, %v625
    %v658 = vsub.f32 0.0, %v626
    %v659 = vsub.f32 0.0, %v627
    %v660 = vsub.f32 0.0, %v628
    %v661 = vsub.f32 0.0, %v629
    %v662 = vsub.f32 0.0, %v630
    %v663 = vsub.f32 0.0, %v631
    %v664 = vsub.f32 0.0, %v632
    %v665 = vsub.f32 0.0, %v633
    %v666 = vsub.f32 0.0, %v634
    %v667 = vsub.f32 0.0, %v635
    %v668 = vsub.f32 0.0, %v636
    %v669 = vsub.f32 0.0, %v637
    %v670 = vsub.f32 0.0, %v638
    %v671 = vsub.f32 0.0, %v639
    %v672 = vsub.f32 0.0, %v640
    %v673 = vsub.f32 0.0, %v641
    %v674 = vsub.f32 0.0, %v642
    %v675 = vsub.f32 0.0, %v643
    %v676 = vsub.f32 0.0, %v644
    %v677 = vsub.f32 0.0, %v645
    %v678 = vsub.f32 0.0, %v646
    %v679 = vsub.f32 0.0, %v647
    %v680 = vsub.f32 0.0, %v648
    %v681 = vmul.f32 %v649, 1.442695
    %v682 = vpow.pop %v681
    %v683 = vmul.f32 %v650, 1.442695
    %v684 = vpow.pop %v683
    %v685 = vmul.f32 %v651, 1.442695
    %v686 = vpow.pop %v685
    %v687 = vmul.f32 %v652, 1.442695
    %v688 = vpow.pop %v687
    %v689 = vmul.f32 %v653, 1.442695
    %v690 = vpow.pop %v689
    %v691 = vmul.f32 %v654, 1.442695
    %v692 = vpow.pop %v691
    %v693 = vmul.f32 %v655, 1.442695
    %v694 = vpow.pop %v693
    %v695 = vmul.f32 %v656, 1.442695
    %v696 = vpow.pop %v695
    %v697 = vmul.f32 %v657, 1.442695
    %v698 = vpow.pop %v697
    %v699 = vmul.f32 %v658, 1.442695
    %v700 = vpow.pop %v699
    %v701 = vmul.f32 %v659, 1.442695
    %v702 = vpow.pop %v701
    %v703 = vmul.f32 %v660, 1.442695
    %v704 = vpow.pop %v703
    %v705 = vmul.f32 %v661, 1.442695
    %v706 = vpow.pop %v705
    %v707 = vmul.f32 %v662, 1.442695
    %v708 = vpow.pop %v707
    %v709 = vmul.f32 %v663, 1.442695
    %v710 = vpow.pop %v709
    %v711 = vmul.f32 %v664, 1.442695
    %v712 = vpow.pop %v711
    %v713 = vmul.f32 %v665, 1.442695
    %v714 = vpow.pop %v713
    %v715 = vmul.f32 %v666, 1.442695
    %v716 = vpow.pop %v715
    %v717 = vmul.f32 %v667, 1.442695
    %v718 = vpow.pop %v717
    %v719 = vmul.f32 %v668, 1.442695
    %v720 = vpow.pop %v719
    %v721 = vmul.f32 %v669, 1.442695
    %v722 = vpow.pop %v721
    %v723 = vmul.f32 %v670, 1.442695
    %v724 = vpow.pop %v723
    %v725 = vmul.f32 %v671, 1.442695
    %v726 = vpow.pop %v725
    %v727 = vmul.f32 %v672, 1.442695
    %v728 = vpow.pop %v727
    %v729 = vmul.f32 %v673, 1.442695
    %v730 = vpow.pop %v729
    %v731 = vmul.f32 %v674, 1.442695
    %v732 = vpow.pop %v731
    %v733 = vmul.f32 %v675, 1.442695
    %v734 = vpow.pop %v733
    %v735 = vmul.f32 %v676, 1.442695
    %v736 = vpow.pop %v735
    %v737 = vmul.f32 %v677, 1.442695
    %v738 = vpow.pop %v737
    %v739 = vmul.f32 %v678, 1.442695
    %v740 = vpow.pop %v739
    %v741 = vmul.f32 %v679, 1.442695
    %v742 = vpow.pop %v741
    %v743 = vmul.f32 %v680, 1.442695
    %v744 = vpow.pop %v743
    %v745 = vpack.c.bf16 %v684, %v682
    %v746 = vpack.c.bf16 %v688, %v686
    %v747 = vpack.c.bf16 %v692, %v690
    %v748 = vpack.c.bf16 %v696, %v694
    %v749 = vpack.c.bf16 %v700, %v698
    %v750 = vpack.c.bf16 %v704, %v702
    %v751 = vpack.c.bf16 %v708, %v706
    %v752 = vpack.c.bf16 %v712, %v710
    %v753 = vpack.c.bf16 %v716, %v714
    %v754 = vpack.c.bf16 %v720, %v718
    %v755 = vpack.c.bf16 %v724, %v722
    %v756 = vpack.c.bf16 %v728, %v726
    %v757 = vpack.c.bf16 %v732, %v730
    %v758 = vpack.c.bf16 %v736, %v734
    %v759 = vpack.c.bf16 %v740, %v738
    %v760 = vpack.c.bf16 %v744, %v742
    %v761 = vld [vmem:[#allocation2] sm:$0xff]
    %v762 = vld [vmem:[#allocation2 + $0x8] sm:$0xff]
    %v763 = vld [vmem:[#allocation2 + $0x10] sm:$0xff]
    %v764 = vld [vmem:[#allocation2 + $0x18] sm:$0xff]
    %v765 = vld [vmem:[#allocation2 + $0x20] sm:$0xff]
    %v766 = vld [vmem:[#allocation2 + $0x28] sm:$0xff]
    %v767 = vld [vmem:[#allocation2 + $0x30] sm:$0xff]
    %v768 = vld [vmem:[#allocation2 + $0x38] sm:$0xff]
    %v769 = vld [vmem:[#allocation2 + $0x40] sm:$0xff]
    %v770 = vld [vmem:[#allocation2 + $0x48] sm:$0xff]
    %v771 = vld [vmem:[#allocation2 + $0x50] sm:$0xff]
    %v772 = vld [vmem:[#allocation2 + $0x58] sm:$0xff]
    %v773 = vld [vmem:[#allocation2 + $0x60] sm:$0xff]
    %v774 = vld [vmem:[#allocation2 + $0x68] sm:$0xff]
    %v775 = vld [vmem:[#allocation2 + $0x70] sm:$0xff]
    %v776 = vld [vmem:[#allocation2 + $0x78] sm:$0xff]
    %v793 = vunpack.c.l.b16 %v761
    %v794 = vunpack.c.h.b16 %v761
    %v795 = vunpack.c.l.b16 %v762
    %v796 = vunpack.c.h.b16 %v762
    %v797 = vunpack.c.l.b16 %v763
    %v798 = vunpack.c.h.b16 %v763
    %v799 = vunpack.c.l.b16 %v764
    %v800 = vunpack.c.h.b16 %v764
    %v801 = vunpack.c.l.b16 %v765
    %v802 = vunpack.c.h.b16 %v765
    %v803 = vunpack.c.l.b16 %v766
    %v804 = vunpack.c.h.b16 %v766
    %v805 = vunpack.c.l.b16 %v767
    %v806 = vunpack.c.h.b16 %v767
    %v807 = vunpack.c.l.b16 %v768
    %v808 = vunpack.c.h.b16 %v768
    %v809 = vunpack.c.l.b16 %v769
    %v810 = vunpack.c.h.b16 %v769
    %v811 = vunpack.c.l.b16 %v770
    %v812 = vunpack.c.h.b16 %v770
    %v813 = vunpack.c.l.b16 %v771
    %v814 = vunpack.c.h.b16 %v771
    %v815 = vunpack.c.l.b16 %v772
    %v816 = vunpack.c.h.b16 %v772
    %v817 = vunpack.c.l.b16 %v773
    %v818 = vunpack.c.h.b16 %v773
    %v819 = vunpack.c.l.b16 %v774
    %v820 = vunpack.c.h.b16 %v774
    %v821 = vunpack.c.l.b16 %v775
    %v822 = vunpack.c.h.b16 %v775
    %v823 = vunpack.c.l.b16 %v776
    %v824 = vunpack.c.h.b16 %v776
    %v825 = vpack.c.b16 %v795, %v793
    %v826 = vpack.c.b16 %v796, %v794
    %v827 = vpack.c.b16 %v799, %v797
    %v828 = vpack.c.b16 %v800, %v798
    %v829 = vpack.c.b16 %v803, %v801
    %v830 = vpack.c.b16 %v804, %v802
    %v831 = vpack.c.b16 %v807, %v805
    %v832 = vpack.c.b16 %v808, %v806
    %v833 = vpack.c.b16 %v811, %v809
    %v834 = vpack.c.b16 %v812, %v810
    %v835 = vpack.c.b16 %v815, %v813
    %v836 = vpack.c.b16 %v816, %v814
    %v837 = vpack.c.b16 %v819, %v817
    %v838 = vpack.c.b16 %v820, %v818
    %v839 = vpack.c.b16 %v823, %v821
    %v840 = vpack.c.b16 %v824, %v822
    %857 = vmatpush.bf16.msra.mxu0 %v752
    %858 = vmatpush.bf16.msra.mxu0 %v751
    %859 = vmatpush.bf16.msra.mxu0 %v750
    %860 = vmatpush.bf16.msra.mxu0 %v749
    %861 = vmatpush.bf16.msra.mxu0 %v748
    %862 = vmatpush.bf16.msra.mxu0 %v747
    %863 = vmatpush.bf16.msra.mxu0 %v746
    %864 = vmatpush.bf16.msra.mxu0 %v745
    %865 = vmatmul.bf16.gmra.mxu0 %v825
    %v866 = vpop.f32.mrf.mxu0
    %v867 = vadd.f32 0.0, %v866
    %v868 = vpop.f32.mrf.mxu0
    %v869 = vadd.f32 0.0, %v868
    %870 = vmatmul.bf16.gmra.mxu0 %v827
    %v871 = vpop.f32.mrf.mxu0
    %v872 = vadd.f32 0.0, %v871
    %v873 = vpop.f32.mrf.mxu0
    %v874 = vadd.f32 0.0, %v873
    %875 = vmatmul.bf16.gmra.mxu0 %v829
    %v876 = vpop.f32.mrf.mxu0
    %v877 = vadd.f32 0.0, %v876
    %v878 = vpop.f32.mrf.mxu0
    %v879 = vadd.f32 0.0, %v878
    %880 = vmatmul.bf16.gmra.mxu0 %v831
    %v881 = vpop.f32.mrf.mxu0
    %v882 = vadd.f32 0.0, %v881
    %v883 = vpop.f32.mrf.mxu0
    %v884 = vadd.f32 0.0, %v883
    %885 = vmatmul.bf16.gmra.mxu0 %v833
    %v886 = vpop.f32.mrf.mxu0
    %v887 = vadd.f32 0.0, %v886
    %v888 = vpop.f32.mrf.mxu0
    %v889 = vadd.f32 0.0, %v888
    %890 = vmatmul.bf16.gmra.mxu0 %v835
    %v891 = vpop.f32.mrf.mxu0
    %v892 = vadd.f32 0.0, %v891
    %v893 = vpop.f32.mrf.mxu0
    %v894 = vadd.f32 0.0, %v893
    %895 = vmatmul.bf16.gmra.mxu0 %v837
    %v896 = vpop.f32.mrf.mxu0
    %v897 = vadd.f32 0.0, %v896
    %v898 = vpop.f32.mrf.mxu0
    %v899 = vadd.f32 0.0, %v898
    %900 = vmatmul.bf16.gmra.mxu0 %v839
    %v901 = vpop.f32.mrf.mxu0
    %v902 = vadd.f32 0.0, %v901
    %v903 = vpop.f32.mrf.mxu0
    %v904 = vadd.f32 0.0, %v903
    %905 = vdwg.mxu0
    %906 = vmatpush.bf16.msra.mxu0 %v760
    %907 = vmatpush.bf16.msra.mxu0 %v759
    %908 = vmatpush.bf16.msra.mxu0 %v758
    %909 = vmatpush.bf16.msra.mxu0 %v757
    %910 = vmatpush.bf16.msra.mxu0 %v756
    %911 = vmatpush.bf16.msra.mxu0 %v755
    %912 = vmatpush.bf16.msra.mxu0 %v754
    %913 = vmatpush.bf16.msra.mxu0 %v753
    %914 = vmatmul.bf16.gmra.mxu0 %v826
    %v915 = vpop.f32.mrf.mxu0
    %v916 = vadd.f32 %v867, %v915
    %v917 = vpop.f32.mrf.mxu0
    %v918 = vadd.f32 %v869, %v917
    %919 = vmatmul.bf16.gmra.mxu0 %v828
    %v920 = vpop.f32.mrf.mxu0
    %v921 = vadd.f32 %v872, %v920
    %v922 = vpop.f32.mrf.mxu0
    %v923 = vadd.f32 %v874, %v922
    %924 = vmatmul.bf16.gmra.mxu0 %v830
    %v925 = vpop.f32.mrf.mxu0
    %v926 = vadd.f32 %v877, %v925
    %v927 = vpop.f32.mrf.mxu0
    %v928 = vadd.f32 %v879, %v927
    %929 = vmatmul.bf16.gmra.mxu0 %v832
    %v930 = vpop.f32.mrf.mxu0
    %v931 = vadd.f32 %v882, %v930
    %v932 = vpop.f32.mrf.mxu0
    %v933 = vadd.f32 %v884, %v932
    %934 = vmatmul.bf16.gmra.mxu0 %v834
    %v935 = vpop.f32.mrf.mxu0
    %v936 = vadd.f32 %v887, %v935
    %v937 = vpop.f32.mrf.mxu0
    %v938 = vadd.f32 %v889, %v937
    %939 = vmatmul.bf16.gmra.mxu0 %v836
    %v940 = vpop.f32.mrf.mxu0
    %v941 = vadd.f32 %v892, %v940
    %v942 = vpop.f32.mrf.mxu0
    %v943 = vadd.f32 %v894, %v942
    %944 = vmatmul.bf16.gmra.mxu0 %v838
    %v945 = vpop.f32.mrf.mxu0
    %v946 = vadd.f32 %v897, %v945
    %v947 = vpop.f32.mrf.mxu0
    %v948 = vadd.f32 %v899, %v947
    %949 = vmatmul.bf16.gmra.mxu0 %v840
    %v950 = vpop.f32.mrf.mxu0
    %v951 = vadd.f32 %v902, %v950
    %v952 = vpop.f32.mrf.mxu0
    %v953 = vadd.f32 %v904, %v952
    %954 = vdwg.mxu0
    %s955 = scalar_lea.vmem [#allocation2], 128
    %v956 = vld [vmem:[%s955] sm:$0xff]
    %v957 = vld [vmem:[%s955 + $0x8] sm:$0xff]
    %v958 = vld [vmem:[%s955 + $0x10] sm:$0xff]
    %v959 = vld [vmem:[%s955 + $0x18] sm:$0xff]
    %v960 = vld [vmem:[%s955 + $0x20] sm:$0xff]
    %v961 = vld [vmem:[%s955 + $0x28] sm:$0xff]
    %v962 = vld [vmem:[%s955 + $0x30] sm:$0xff]
    %v963 = vld [vmem:[%s955 + $0x38] sm:$0xff]
    %v964 = vld [vmem:[%s955 + $0x40] sm:$0xff]
    %v965 = vld [vmem:[%s955 + $0x48] sm:$0xff]
    %v966 = vld [vmem:[%s955 + $0x50] sm:$0xff]
    %v967 = vld [vmem:[%s955 + $0x58] sm:$0xff]
    %v968 = vld [vmem:[%s955 + $0x60] sm:$0xff]
    %v969 = vld [vmem:[%s955 + $0x68] sm:$0xff]
    %v970 = vld [vmem:[%s955 + $0x70] sm:$0xff]
    %v971 = vld [vmem:[%s955 + $0x78] sm:$0xff]
    %v988 = vunpack.c.l.b16 %v956
    %v989 = vunpack.c.h.b16 %v956
    %v990 = vunpack.c.l.b16 %v957
    %v991 = vunpack.c.h.b16 %v957
    %v992 = vunpack.c.l.b16 %v958
    %v993 = vunpack.c.h.b16 %v958
    %v994 = vunpack.c.l.b16 %v959
    %v995 = vunpack.c.h.b16 %v959
    %v996 = vunpack.c.l.b16 %v960
    %v997 = vunpack.c.h.b16 %v960
    %v998 = vunpack.c.l.b16 %v961
    %v999 = vunpack.c.h.b16 %v961
    %v1000 = vunpack.c.l.b16 %v962
    %v1001 = vunpack.c.h.b16 %v962
    %v1002 = vunpack.c.l.b16 %v963
    %v1003 = vunpack.c.h.b16 %v963
    %v1004 = vunpack.c.l.b16 %v964
    %v1005 = vunpack.c.h.b16 %v964
    %v1006 = vunpack.c.l.b16 %v965
    %v1007 = vunpack.c.h.b16 %v965
    %v1008 = vunpack.c.l.b16 %v966
    %v1009 = vunpack.c.h.b16 %v966
    %v1010 = vunpack.c.l.b16 %v967
    %v1011 = vunpack.c.h.b16 %v967
    %v1012 = vunpack.c.l.b16 %v968
    %v1013 = vunpack.c.h.b16 %v968
    %v1014 = vunpack.c.l.b16 %v969
    %v1015 = vunpack.c.h.b16 %v969
    %v1016 = vunpack.c.l.b16 %v970
    %v1017 = vunpack.c.h.b16 %v970
    %v1018 = vunpack.c.l.b16 %v971
    %v1019 = vunpack.c.h.b16 %v971
    %v1020 = vpack.c.b16 %v990, %v988
    %v1021 = vpack.c.b16 %v991, %v989
    %v1022 = vpack.c.b16 %v994, %v992
    %v1023 = vpack.c.b16 %v995, %v993
    %v1024 = vpack.c.b16 %v998, %v996
    %v1025 = vpack.c.b16 %v999, %v997
    %v1026 = vpack.c.b16 %v1002, %v1000
    %v1027 = vpack.c.b16 %v1003, %v1001
    %v1028 = vpack.c.b16 %v1006, %v1004
    %v1029 = vpack.c.b16 %v1007, %v1005
    %v1030 = vpack.c.b16 %v1010, %v1008
    %v1031 = vpack.c.b16 %v1011, %v1009
    %v1032 = vpack.c.b16 %v1014, %v1012
    %v1033 = vpack.c.b16 %v1015, %v1013
    %v1034 = vpack.c.b16 %v1018, %v1016
    %v1035 = vpack.c.b16 %v1019, %v1017
    %1052 = vmatpush.bf16.msra.mxu0 %v752
    %1053 = vmatpush.bf16.msra.mxu0 %v751
    %1054 = vmatpush.bf16.msra.mxu0 %v750
    %1055 = vmatpush.bf16.msra.mxu0 %v749
    %1056 = vmatpush.bf16.msra.mxu0 %v748
    %1057 = vmatpush.bf16.msra.mxu0 %v747
    %1058 = vmatpush.bf16.msra.mxu0 %v746
    %1059 = vmatpush.bf16.msra.mxu0 %v745
    %1060 = vmatmul.bf16.gmra.mxu0 %v1020
    %v1061 = vpop.f32.mrf.mxu0
    %v1062 = vadd.f32 0.0, %v1061
    %v1063 = vpop.f32.mrf.mxu0
    %v1064 = vadd.f32 0.0, %v1063
    %1065 = vmatmul.bf16.gmra.mxu0 %v1022
    %v1066 = vpop.f32.mrf.mxu0
    %v1067 = vadd.f32 0.0, %v1066
    %v1068 = vpop.f32.mrf.mxu0
    %v1069 = vadd.f32 0.0, %v1068
    %1070 = vmatmul.bf16.gmra.mxu0 %v1024
    %v1071 = vpop.f32.mrf.mxu0
    %v1072 = vadd.f32 0.0, %v1071
    %v1073 = vpop.f32.mrf.mxu0
    %v1074 = vadd.f32 0.0, %v1073
    %1075 = vmatmul.bf16.gmra.mxu0 %v1026
    %v1076 = vpop.f32.mrf.mxu0
    %v1077 = vadd.f32 0.0, %v1076
    %v1078 = vpop.f32.mrf.mxu0
    %v1079 = vadd.f32 0.0, %v1078
    %1080 = vmatmul.bf16.gmra.mxu0 %v1028
    %v1081 = vpop.f32.mrf.mxu0
    %v1082 = vadd.f32 0.0, %v1081
    %v1083 = vpop.f32.mrf.mxu0
    %v1084 = vadd.f32 0.0, %v1083
    %1085 = vmatmul.bf16.gmra.mxu0 %v1030
    %v1086 = vpop.f32.mrf.mxu0
    %v1087 = vadd.f32 0.0, %v1086
    %v1088 = vpop.f32.mrf.mxu0
    %v1089 = vadd.f32 0.0, %v1088
    %1090 = vmatmul.bf16.gmra.mxu0 %v1032
    %v1091 = vpop.f32.mrf.mxu0
    %v1092 = vadd.f32 0.0, %v1091
    %v1093 = vpop.f32.mrf.mxu0
    %v1094 = vadd.f32 0.0, %v1093
    %1095 = vmatmul.bf16.gmra.mxu0 %v1034
    %v1096 = vpop.f32.mrf.mxu0
    %v1097 = vadd.f32 0.0, %v1096
    %v1098 = vpop.f32.mrf.mxu0
    %v1099 = vadd.f32 0.0, %v1098
    %1100 = vdwg.mxu0
    %1101 = vmatpush.bf16.msra.mxu0 %v760
    %1102 = vmatpush.bf16.msra.mxu0 %v759
    %1103 = vmatpush.bf16.msra.mxu0 %v758
    %1104 = vmatpush.bf16.msra.mxu0 %v757
    %1105 = vmatpush.bf16.msra.mxu0 %v756
    %1106 = vmatpush.bf16.msra.mxu0 %v755
    %1107 = vmatpush.bf16.msra.mxu0 %v754
    %1108 = vmatpush.bf16.msra.mxu0 %v753
    %1109 = vmatmul.bf16.gmra.mxu0 %v1021
    %v1110 = vpop.f32.mrf.mxu0
    %v1111 = vadd.f32 %v1062, %v1110
    %v1112 = vpop.f32.mrf.mxu0
    %v1113 = vadd.f32 %v1064, %v1112
    %1114 = vmatmul.bf16.gmra.mxu0 %v1023
    %v1115 = vpop.f32.mrf.mxu0
    %v1116 = vadd.f32 %v1067, %v1115
    %v1117 = vpop.f32.mrf.mxu0
    %v1118 = vadd.f32 %v1069, %v1117
    %1119 = vmatmul.bf16.gmra.mxu0 %v1025
    %v1120 = vpop.f32.mrf.mxu0
    %v1121 = vadd.f32 %v1072, %v1120
    %v1122 = vpop.f32.mrf.mxu0
    %v1123 = vadd.f32 %v1074, %v1122
    %1124 = vmatmul.bf16.gmra.mxu0 %v1027
    %v1125 = vpop.f32.mrf.mxu0
    %v1126 = vadd.f32 %v1077, %v1125
    %v1127 = vpop.f32.mrf.mxu0
    %v1128 = vadd.f32 %v1079, %v1127
    %1129 = vmatmul.bf16.gmra.mxu0 %v1029
    %v1130 = vpop.f32.mrf.mxu0
    %v1131 = vadd.f32 %v1082, %v1130
    %v1132 = vpop.f32.mrf.mxu0
    %v1133 = vadd.f32 %v1084, %v1132
    %1134 = vmatmul.bf16.gmra.mxu0 %v1031
    %v1135 = vpop.f32.mrf.mxu0
    %v1136 = vadd.f32 %v1087, %v1135
    %v1137 = vpop.f32.mrf.mxu0
    %v1138 = vadd.f32 %v1089, %v1137
    %1139 = vmatmul.bf16.gmra.mxu0 %v1033
    %v1140 = vpop.f32.mrf.mxu0
    %v1141 = vadd.f32 %v1092, %v1140
    %v1142 = vpop.f32.mrf.mxu0
    %v1143 = vadd.f32 %v1094, %v1142
    %1144 = vmatmul.bf16.gmra.mxu0 %v1035
    %v1145 = vpop.f32.mrf.mxu0
    %v1146 = vadd.f32 %v1097, %v1145
    %v1147 = vpop.f32.mrf.mxu0
    %v1148 = vadd.f32 %v1099, %v1147
    %1149 = vdwg.mxu0
    %s1150 = scalar_lea.vmem [#allocation2], 256
    %v1151 = vld [vmem:[%s1150] sm:$0xff]
    %v1152 = vld [vmem:[%s1150 + $0x8] sm:$0xff]
    %v1153 = vld [vmem:[%s1150 + $0x10] sm:$0xff]
    %v1154 = vld [vmem:[%s1150 + $0x18] sm:$0xff]
    %v1155 = vld [vmem:[%s1150 + $0x20] sm:$0xff]
    %v1156 = vld [vmem:[%s1150 + $0x28] sm:$0xff]
    %v1157 = vld [vmem:[%s1150 + $0x30] sm:$0xff]
    %v1158 = vld [vmem:[%s1150 + $0x38] sm:$0xff]
    %v1159 = vld [vmem:[%s1150 + $0x40] sm:$0xff]
    %v1160 = vld [vmem:[%s1150 + $0x48] sm:$0xff]
    %v1161 = vld [vmem:[%s1150 + $0x50] sm:$0xff]
    %v1162 = vld [vmem:[%s1150 + $0x58] sm:$0xff]
    %v1163 = vld [vmem:[%s1150 + $0x60] sm:$0xff]
    %v1164 = vld [vmem:[%s1150 + $0x68] sm:$0xff]
    %v1165 = vld [vmem:[%s1150 + $0x70] sm:$0xff]
    %v1166 = vld [vmem:[%s1150 + $0x78] sm:$0xff]
    %v1183 = vunpack.c.l.b16 %v1151
    %v1184 = vunpack.c.h.b16 %v1151
    %v1185 = vunpack.c.l.b16 %v1152
    %v1186 = vunpack.c.h.b16 %v1152
    %v1187 = vunpack.c.l.b16 %v1153
    %v1188 = vunpack.c.h.b16 %v1153
    %v1189 = vunpack.c.l.b16 %v1154
    %v1190 = vunpack.c.h.b16 %v1154
    %v1191 = vunpack.c.l.b16 %v1155
    %v1192 = vunpack.c.h.b16 %v1155
    %v1193 = vunpack.c.l.b16 %v1156
    %v1194 = vunpack.c.h.b16 %v1156
    %v1195 = vunpack.c.l.b16 %v1157
    %v1196 = vunpack.c.h.b16 %v1157
    %v1197 = vunpack.c.l.b16 %v1158
    %v1198 = vunpack.c.h.b16 %v1158
    %v1199 = vunpack.c.l.b16 %v1159
    %v1200 = vunpack.c.h.b16 %v1159
    %v1201 = vunpack.c.l.b16 %v1160
    %v1202 = vunpack.c.h.b16 %v1160
    %v1203 = vunpack.c.l.b16 %v1161
    %v1204 = vunpack.c.h.b16 %v1161
    %v1205 = vunpack.c.l.b16 %v1162
    %v1206 = vunpack.c.h.b16 %v1162
    %v1207 = vunpack.c.l.b16 %v1163
    %v1208 = vunpack.c.h.b16 %v1163
    %v1209 = vunpack.c.l.b16 %v1164
    %v1210 = vunpack.c.h.b16 %v1164
    %v1211 = vunpack.c.l.b16 %v1165
    %v1212 = vunpack.c.h.b16 %v1165
    %v1213 = vunpack.c.l.b16 %v1166
    %v1214 = vunpack.c.h.b16 %v1166
    %v1215 = vpack.c.b16 %v1185, %v1183
    %v1216 = vpack.c.b16 %v1186, %v1184
    %v1217 = vpack.c.b16 %v1189, %v1187
    %v1218 = vpack.c.b16 %v1190, %v1188
    %v1219 = vpack.c.b16 %v1193, %v1191
    %v1220 = vpack.c.b16 %v1194, %v1192
    %v1221 = vpack.c.b16 %v1197, %v1195
    %v1222 = vpack.c.b16 %v1198, %v1196
    %v1223 = vpack.c.b16 %v1201, %v1199
    %v1224 = vpack.c.b16 %v1202, %v1200
    %v1225 = vpack.c.b16 %v1205, %v1203
    %v1226 = vpack.c.b16 %v1206, %v1204
    %v1227 = vpack.c.b16 %v1209, %v1207
    %v1228 = vpack.c.b16 %v1210, %v1208
    %v1229 = vpack.c.b16 %v1213, %v1211
    %v1230 = vpack.c.b16 %v1214, %v1212
    %1247 = vmatpush.bf16.msra.mxu0 %v752
    %1248 = vmatpush.bf16.msra.mxu0 %v751
    %1249 = vmatpush.bf16.msra.mxu0 %v750
    %1250 = vmatpush.bf16.msra.mxu0 %v749
    %1251 = vmatpush.bf16.msra.mxu0 %v748
    %1252 = vmatpush.bf16.msra.mxu0 %v747
    %1253 = vmatpush.bf16.msra.mxu0 %v746
    %1254 = vmatpush.bf16.msra.mxu0 %v745
    %1255 = vmatmul.bf16.gmra.mxu0 %v1215
    %v1256 = vpop.f32.mrf.mxu0
    %v1257 = vadd.f32 0.0, %v1256
    %v1258 = vpop.f32.mrf.mxu0
    %v1259 = vadd.f32 0.0, %v1258
    %1260 = vmatmul.bf16.gmra.mxu0 %v1217
    %v1261 = vpop.f32.mrf.mxu0
    %v1262 = vadd.f32 0.0, %v1261
    %v1263 = vpop.f32.mrf.mxu0
    %v1264 = vadd.f32 0.0, %v1263
    %1265 = vmatmul.bf16.gmra.mxu0 %v1219
    %v1266 = vpop.f32.mrf.mxu0
    %v1267 = vadd.f32 0.0, %v1266
    %v1268 = vpop.f32.mrf.mxu0
    %v1269 = vadd.f32 0.0, %v1268
    %1270 = vmatmul.bf16.gmra.mxu0 %v1221
    %v1271 = vpop.f32.mrf.mxu0
    %v1272 = vadd.f32 0.0, %v1271
    %v1273 = vpop.f32.mrf.mxu0
    %v1274 = vadd.f32 0.0, %v1273
    %1275 = vmatmul.bf16.gmra.mxu0 %v1223
    %v1276 = vpop.f32.mrf.mxu0
    %v1277 = vadd.f32 0.0, %v1276
    %v1278 = vpop.f32.mrf.mxu0
    %v1279 = vadd.f32 0.0, %v1278
    %1280 = vmatmul.bf16.gmra.mxu0 %v1225
    %v1281 = vpop.f32.mrf.mxu0
    %v1282 = vadd.f32 0.0, %v1281
    %v1283 = vpop.f32.mrf.mxu0
    %v1284 = vadd.f32 0.0, %v1283
    %1285 = vmatmul.bf16.gmra.mxu0 %v1227
    %v1286 = vpop.f32.mrf.mxu0
    %v1287 = vadd.f32 0.0, %v1286
    %v1288 = vpop.f32.mrf.mxu0
    %v1289 = vadd.f32 0.0, %v1288
    %1290 = vmatmul.bf16.gmra.mxu0 %v1229
    %v1291 = vpop.f32.mrf.mxu0
    %v1292 = vadd.f32 0.0, %v1291
    %v1293 = vpop.f32.mrf.mxu0
    %v1294 = vadd.f32 0.0, %v1293
    %1295 = vdwg.mxu0
    %1296 = vmatpush.bf16.msra.mxu0 %v760
    %1297 = vmatpush.bf16.msra.mxu0 %v759
    %1298 = vmatpush.bf16.msra.mxu0 %v758
    %1299 = vmatpush.bf16.msra.mxu0 %v757
    %1300 = vmatpush.bf16.msra.mxu0 %v756
    %1301 = vmatpush.bf16.msra.mxu0 %v755
    %1302 = vmatpush.bf16.msra.mxu0 %v754
    %1303 = vmatpush.bf16.msra.mxu0 %v753
    %1304 = vmatmul.bf16.gmra.mxu0 %v1216
    %v1305 = vpop.f32.mrf.mxu0
    %v1306 = vadd.f32 %v1257, %v1305
    %v1307 = vpop.f32.mrf.mxu0
    %v1308 = vadd.f32 %v1259, %v1307
    %1309 = vmatmul.bf16.gmra.mxu0 %v1218
    %v1310 = vpop.f32.mrf.mxu0
    %v1311 = vadd.f32 %v1262, %v1310
    %v1312 = vpop.f32.mrf.mxu0
    %v1313 = vadd.f32 %v1264, %v1312
    %1314 = vmatmul.bf16.gmra.mxu0 %v1220
    %v1315 = vpop.f32.mrf.mxu0
    %v1316 = vadd.f32 %v1267, %v1315
    %v1317 = vpop.f32.mrf.mxu0
    %v1318 = vadd.f32 %v1269, %v1317
    %1319 = vmatmul.bf16.gmra.mxu0 %v1222
    %v1320 = vpop.f32.mrf.mxu0
    %v1321 = vadd.f32 %v1272, %v1320
    %v1322 = vpop.f32.mrf.mxu0
    %v1323 = vadd.f32 %v1274, %v1322
    %1324 = vmatmul.bf16.gmra.mxu0 %v1224
    %v1325 = vpop.f32.mrf.mxu0
    %v1326 = vadd.f32 %v1277, %v1325
    %v1327 = vpop.f32.mrf.mxu0
    %v1328 = vadd.f32 %v1279, %v1327
    %1329 = vmatmul.bf16.gmra.mxu0 %v1226
    %v1330 = vpop.f32.mrf.mxu0
    %v1331 = vadd.f32 %v1282, %v1330
    %v1332 = vpop.f32.mrf.mxu0
    %v1333 = vadd.f32 %v1284, %v1332
    %1334 = vmatmul.bf16.gmra.mxu0 %v1228
    %v1335 = vpop.f32.mrf.mxu0
    %v1336 = vadd.f32 %v1287, %v1335
    %v1337 = vpop.f32.mrf.mxu0
    %v1338 = vadd.f32 %v1289, %v1337
    %1339 = vmatmul.bf16.gmra.mxu0 %v1230
    %v1340 = vpop.f32.mrf.mxu0
    %v1341 = vadd.f32 %v1292, %v1340
    %v1342 = vpop.f32.mrf.mxu0
    %v1343 = vadd.f32 %v1294, %v1342
    %1344 = vdwg.mxu0
    %1361 = vrot.lane.b32.xlu0 %v1111, 64
    %v1362 = vpop.permute.xlu0 %1361
    %1363 = vrot.lane.b32.xlu0 %v1113, 64
    %v1364 = vpop.permute.xlu0 %1363
    %1365 = vrot.lane.b32.xlu0 %v1116, 64
    %v1366 = vpop.permute.xlu0 %1365
    %1367 = vrot.lane.b32.xlu0 %v1118, 64
    %v1368 = vpop.permute.xlu0 %1367
    %1369 = vrot.lane.b32.xlu0 %v1121, 64
    %v1370 = vpop.permute.xlu0 %1369
    %1371 = vrot.lane.b32.xlu0 %v1123, 64
    %v1372 = vpop.permute.xlu0 %1371
    %1373 = vrot.lane.b32.xlu0 %v1126, 64
    %v1374 = vpop.permute.xlu0 %1373
    %1375 = vrot.lane.b32.xlu0 %v1128, 64
    %v1376 = vpop.permute.xlu0 %1375
    %1377 = vrot.lane.b32.xlu0 %v1131, 64
    %v1378 = vpop.permute.xlu0 %1377
    %1379 = vrot.lane.b32.xlu0 %v1133, 64
    %v1380 = vpop.permute.xlu0 %1379
    %1381 = vrot.lane.b32.xlu0 %v1136, 64
    %v1382 = vpop.permute.xlu0 %1381
    %1383 = vrot.lane.b32.xlu0 %v1138, 64
    %v1384 = vpop.permute.xlu0 %1383
    %1385 = vrot.lane.b32.xlu0 %v1141, 64
    %v1386 = vpop.permute.xlu0 %1385
    %1387 = vrot.lane.b32.xlu0 %v1143, 64
    %v1388 = vpop.permute.xlu0 %1387
    %1389 = vrot.lane.b32.xlu0 %v1146, 64
    %v1390 = vpop.permute.xlu0 %1389
    %1391 = vrot.lane.b32.xlu0 %v1148, 64
    %v1392 = vpop.permute.xlu0 %1391
    %vm1409 = vcmask 523264
    %v1410 = vsel %vm1409, %v916, %v1362
    %v1411 = vsel %vm1409, %v918, %v1364
    %v1412 = vsel %vm1409, %v921, %v1366
    %v1413 = vsel %vm1409, %v923, %v1368
    %v1414 = vsel %vm1409, %v926, %v1370
    %v1415 = vsel %vm1409, %v928, %v1372
    %v1416 = vsel %vm1409, %v931, %v1374
    %v1417 = vsel %vm1409, %v933, %v1376
    %v1418 = vsel %vm1409, %v936, %v1378
    %v1419 = vsel %vm1409, %v938, %v1380
    %v1420 = vsel %vm1409, %v941, %v1382
    %v1421 = vsel %vm1409, %v943, %v1384
    %v1422 = vsel %vm1409, %v946, %v1386
    %v1423 = vsel %vm1409, %v948, %v1388
    %v1424 = vsel %vm1409, %v951, %v1390
    %v1425 = vsel %vm1409, %v953, %v1392
    %v1426 = vpack.c.bf16 %v1411, %v1410
    %v1427 = vpack.c.bf16 %v1308, %v1306
    %v1428 = vpack.c.bf16 %v1413, %v1412
    %v1429 = vpack.c.bf16 %v1313, %v1311
    %v1430 = vpack.c.bf16 %v1415, %v1414
    %v1431 = vpack.c.bf16 %v1318, %v1316
    %v1432 = vpack.c.bf16 %v1417, %v1416
    %v1433 = vpack.c.bf16 %v1323, %v1321
    %v1434 = vpack.c.bf16 %v1419, %v1418
    %v1435 = vpack.c.bf16 %v1328, %v1326
    %v1436 = vpack.c.bf16 %v1421, %v1420
    %v1437 = vpack.c.bf16 %v1333, %v1331
    %v1438 = vpack.c.bf16 %v1423, %v1422
    %v1439 = vpack.c.bf16 %v1338, %v1336
    %v1440 = vpack.c.bf16 %v1425, %v1424
    %v1441 = vpack.c.bf16 %v1343, %v1341
    %v1442 = vld [vmem:[#allocation4] sm:$0xff]
    %v1443 = vld [vmem:[#allocation4 + $0x8] sm:$0xff]
    %v1444 = vld [vmem:[#allocation4 + $0x10] sm:$0xff]
    %v1445 = vld [vmem:[#allocation4 + $0x18] sm:$0xff]
    %v1446 = vld [vmem:[#allocation4 + $0x20] sm:$0xff]
    %v1447 = vld [vmem:[#allocation4 + $0x28] sm:$0xff]
    %v1448 = vld [vmem:[#allocation4 + $0x30] sm:$0xff]
    %v1449 = vld [vmem:[#allocation4 + $0x38] sm:$0xff]
    %v1450 = vld [vmem:[#allocation4 + $0x40] sm:$0xff]
    %v1451 = vld [vmem:[#allocation4 + $0x48] sm:$0xff]
    %v1452 = vld [vmem:[#allocation4 + $0x50] sm:$0xff]
    %v1453 = vld [vmem:[#allocation4 + $0x58] sm:$0xff]
    %v1454 = vld [vmem:[#allocation4 + $0x60] sm:$0xff]
    %v1455 = vld [vmem:[#allocation4 + $0x68] sm:$0xff]
    %v1456 = vld [vmem:[#allocation4 + $0x70] sm:$0xff]
    %v1457 = vld [vmem:[#allocation4 + $0x78] sm:$0xff]
    %v1458 = vld [vmem:[#allocation4 + $0x80] sm:$0xff]
    %v1459 = vld [vmem:[#allocation4 + $0x88] sm:$0xff]
    %v1460 = vld [vmem:[#allocation4 + $0x90] sm:$0xff]
    %v1461 = vld [vmem:[#allocation4 + $0x98] sm:$0xff]
    %v1462 = vld [vmem:[#allocation4 + $0xa0] sm:$0xff]
    %v1463 = vld [vmem:[#allocation4 + $0xa8] sm:$0xff]
    %v1464 = vld [vmem:[#allocation4 + $0xb0] sm:$0xff]
    %v1465 = vld [vmem:[#allocation4 + $0xb8] sm:$0xff]
    %v1466 = vld [vmem:[#allocation6] sm:$0x3]
    %v1468 = vperm.slane %v1466, 0
    %v1469 = vperm.slane %v1466, 1
    %v1496 = vunpack.c.l.b16 %v1442
    %v1497 = vunpack.c.h.b16 %v1442
    %v1498 = vunpack.c.l.b16 %v1443
    %v1499 = vunpack.c.h.b16 %v1443
    %v1500 = vunpack.c.l.b16 %v1444
    %v1501 = vunpack.c.h.b16 %v1444
    %v1502 = vunpack.c.l.b16 %v1445
    %v1503 = vunpack.c.h.b16 %v1445
    %v1504 = vunpack.c.l.b16 %v1446
    %v1505 = vunpack.c.h.b16 %v1446
    %v1506 = vunpack.c.l.b16 %v1447
    %v1507 = vunpack.c.h.b16 %v1447
    %v1508 = vunpack.c.l.b16 %v1448
    %v1509 = vunpack.c.h.b16 %v1448
    %v1510 = vunpack.c.l.b16 %v1449
    %v1511 = vunpack.c.h.b16 %v1449
    %v1512 = vunpack.c.l.b16 %v1450
    %v1513 = vunpack.c.h.b16 %v1450
    %v1514 = vunpack.c.l.b16 %v1451
    %v1515 = vunpack.c.h.b16 %v1451
    %v1516 = vunpack.c.l.b16 %v1452
    %v1517 = vunpack.c.h.b16 %v1452
    %v1518 = vunpack.c.l.b16 %v1453
    %v1519 = vunpack.c.h.b16 %v1453
    %v1520 = vunpack.c.l.b16 %v1454
    %v1521 = vunpack.c.h.b16 %v1454
    %v1522 = vunpack.c.l.b16 %v1455
    %v1523 = vunpack.c.h.b16 %v1455
    %v1524 = vunpack.c.l.b16 %v1456
    %v1525 = vunpack.c.h.b16 %v1456
    %v1526 = vunpack.c.l.b16 %v1457
    %v1527 = vunpack.c.h.b16 %v1457
    %v1528 = vunpack.c.l.b16 %v1458
    %v1529 = vunpack.c.h.b16 %v1458
    %v1530 = vunpack.c.l.b16 %v1459
    %v1531 = vunpack.c.h.b16 %v1459
    %v1532 = vunpack.c.l.b16 %v1460
    %v1533 = vunpack.c.h.b16 %v1460
    %v1534 = vunpack.c.l.b16 %v1461
    %v1535 = vunpack.c.h.b16 %v1461
    %v1536 = vunpack.c.l.b16 %v1462
    %v1537 = vunpack.c.h.b16 %v1462
    %v1538 = vunpack.c.l.b16 %v1463
    %v1539 = vunpack.c.h.b16 %v1463
    %v1540 = vunpack.c.l.b16 %v1464
    %v1541 = vunpack.c.h.b16 %v1464
    %v1542 = vunpack.c.l.b16 %v1465
    %v1543 = vunpack.c.h.b16 %v1465
    %v1544 = vpack.c.b16 %v1498, %v1496
    %v1545 = vpack.c.b16 %v1499, %v1497
    %v1546 = vpack.c.b16 %v1502, %v1500
    %v1547 = vpack.c.b16 %v1503, %v1501
    %v1548 = vpack.c.b16 %v1506, %v1504
    %v1549 = vpack.c.b16 %v1507, %v1505
    %v1550 = vpack.c.b16 %v1510, %v1508
    %v1551 = vpack.c.b16 %v1511, %v1509
    %v1552 = vpack.c.b16 %v1514, %v1512
    %v1553 = vpack.c.b16 %v1515, %v1513
    %v1554 = vpack.c.b16 %v1518, %v1516
    %v1555 = vpack.c.b16 %v1519, %v1517
    %v1556 = vpack.c.b16 %v1522, %v1520
    %v1557 = vpack.c.b16 %v1523, %v1521
    %v1558 = vpack.c.b16 %v1526, %v1524
    %v1559 = vpack.c.b16 %v1527, %v1525
    %v1560 = vpack.c.b16 %v1530, %v1528
    %v1561 = vpack.c.b16 %v1531, %v1529
    %v1562 = vpack.c.b16 %v1534, %v1532
    %v1563 = vpack.c.b16 %v1535, %v1533
    %v1564 = vpack.c.b16 %v1538, %v1536
    %v1565 = vpack.c.b16 %v1539, %v1537
    %v1566 = vpack.c.b16 %v1542, %v1540
    %v1567 = vpack.c.b16 %v1543, %v1541
    %v1593 = vsel %vm1409, %v1427, 0
    %v1596 = vsel %vm1409, %v1429, 0
    %v1599 = vsel %vm1409, %v1431, 0
    %v1602 = vsel %vm1409, %v1433, 0
    %v1605 = vsel %vm1409, %v1435, 0
    %v1608 = vsel %vm1409, %v1437, 0
    %v1611 = vsel %vm1409, %v1439, 0
    %v1614 = vsel %vm1409, %v1441, 0
    %1616 = vmatpush.bf16.msra.mxu0 %v1558
    %1617 = vmatpush.bf16.msra.mxu0 %v1556
    %1618 = vmatpush.bf16.msra.mxu0 %v1554
    %1619 = vmatpush.bf16.msra.mxu0 %v1552
    %1620 = vmatpush.bf16.msra.mxu0 %v1550
    %1621 = vmatpush.bf16.msra.mxu0 %v1548
    %1622 = vmatpush.bf16.msra.mxu0 %v1546
    %1623 = vmatpush.bf16.msra.mxu0 %v1544
    %1624 = vmatmul.bf16.gmra.mxu0 %v1426
    %v1625 = vpop.f32.mrf.mxu0
    %v1626 = vadd.f32 %v1468, %v1625
    %v1627 = vpop.f32.mrf.mxu0
    %v1628 = vadd.f32 %v1468, %v1627
    %1629 = vmatmul.bf16.gmra.mxu0 %v1428
    %v1630 = vpop.f32.mrf.mxu0
    %v1631 = vadd.f32 %v1468, %v1630
    %v1632 = vpop.f32.mrf.mxu0
    %v1633 = vadd.f32 %v1468, %v1632
    %1634 = vmatmul.bf16.gmra.mxu0 %v1430
    %v1635 = vpop.f32.mrf.mxu0
    %v1636 = vadd.f32 %v1468, %v1635
    %v1637 = vpop.f32.mrf.mxu0
    %v1638 = vadd.f32 %v1468, %v1637
    %1639 = vmatmul.bf16.gmra.mxu0 %v1432
    %v1640 = vpop.f32.mrf.mxu0
    %v1641 = vadd.f32 %v1468, %v1640
    %v1642 = vpop.f32.mrf.mxu0
    %v1643 = vadd.f32 %v1468, %v1642
    %1644 = vmatmul.bf16.gmra.mxu0 %v1434
    %v1645 = vpop.f32.mrf.mxu0
    %v1646 = vadd.f32 %v1468, %v1645
    %v1647 = vpop.f32.mrf.mxu0
    %v1648 = vadd.f32 %v1468, %v1647
    %1649 = vmatmul.bf16.gmra.mxu0 %v1436
    %v1650 = vpop.f32.mrf.mxu0
    %v1651 = vadd.f32 %v1468, %v1650
    %v1652 = vpop.f32.mrf.mxu0
    %v1653 = vadd.f32 %v1468, %v1652
    %1654 = vmatmul.bf16.gmra.mxu0 %v1438
    %v1655 = vpop.f32.mrf.mxu0
    %v1656 = vadd.f32 %v1468, %v1655
    %v1657 = vpop.f32.mrf.mxu0
    %v1658 = vadd.f32 %v1468, %v1657
    %1659 = vmatmul.bf16.gmra.mxu0 %v1440
    %v1660 = vpop.f32.mrf.mxu0
    %v1661 = vadd.f32 %v1468, %v1660
    %v1662 = vpop.f32.mrf.mxu0
    %v1663 = vadd.f32 %v1468, %v1662
    %1664 = vdwg.mxu0
    %1665 = vmatpush.bf16.msra.mxu0 0
    %1666 = vmatpush.bf16.msra.mxu0 0
    %1667 = vmatpush.bf16.msra.mxu0 0
    %1668 = vmatpush.bf16.msra.mxu0 0
    %1669 = vmatpush.bf16.msra.mxu0 %v1566
    %1670 = vmatpush.bf16.msra.mxu0 %v1564
    %1671 = vmatpush.bf16.msra.mxu0 %v1562
    %1672 = vmatpush.bf16.msra.mxu0 %v1560
    %1673 = vmatmul.bf16.gmra.mxu0 %v1593
    %v1674 = vpop.f32.mrf.mxu0
    %v1675 = vadd.f32 %v1626, %v1674
    %v1676 = vpop.f32.mrf.mxu0
    %v1677 = vadd.f32 %v1628, %v1676
    %1678 = vmatmul.bf16.gmra.mxu0 %v1596
    %v1679 = vpop.f32.mrf.mxu0
    %v1680 = vadd.f32 %v1631, %v1679
    %v1681 = vpop.f32.mrf.mxu0
    %v1682 = vadd.f32 %v1633, %v1681
    %1683 = vmatmul.bf16.gmra.mxu0 %v1599
    %v1684 = vpop.f32.mrf.mxu0
    %v1685 = vadd.f32 %v1636, %v1684
    %v1686 = vpop.f32.mrf.mxu0
    %v1687 = vadd.f32 %v1638, %v1686
    %1688 = vmatmul.bf16.gmra.mxu0 %v1602
    %v1689 = vpop.f32.mrf.mxu0
    %v1690 = vadd.f32 %v1641, %v1689
    %v1691 = vpop.f32.mrf.mxu0
    %v1692 = vadd.f32 %v1643, %v1691
    %1693 = vmatmul.bf16.gmra.mxu0 %v1605
    %v1694 = vpop.f32.mrf.mxu0
    %v1695 = vadd.f32 %v1646, %v1694
    %v1696 = vpop.f32.mrf.mxu0
    %v1697 = vadd.f32 %v1648, %v1696
    %1698 = vmatmul.bf16.gmra.mxu0 %v1608
    %v1699 = vpop.f32.mrf.mxu0
    %v1700 = vadd.f32 %v1651, %v1699
    %v1701 = vpop.f32.mrf.mxu0
    %v1702 = vadd.f32 %v1653, %v1701
    %1703 = vmatmul.bf16.gmra.mxu0 %v1611
    %v1704 = vpop.f32.mrf.mxu0
    %v1705 = vadd.f32 %v1656, %v1704
    %v1706 = vpop.f32.mrf.mxu0
    %v1707 = vadd.f32 %v1658, %v1706
    %1708 = vmatmul.bf16.gmra.mxu0 %v1614
    %v1709 = vpop.f32.mrf.mxu0
    %v1710 = vadd.f32 %v1661, %v1709
    %v1711 = vpop.f32.mrf.mxu0
    %v1712 = vadd.f32 %v1663, %v1711
    %1713 = vdwg.mxu0
    %1714 = vmatpush.bf16.msra.mxu0 %v1559
    %1715 = vmatpush.bf16.msra.mxu0 %v1557
    %1716 = vmatpush.bf16.msra.mxu0 %v1555
    %1717 = vmatpush.bf16.msra.mxu0 %v1553
    %1718 = vmatpush.bf16.msra.mxu0 %v1551
    %1719 = vmatpush.bf16.msra.mxu0 %v1549
    %1720 = vmatpush.bf16.msra.mxu0 %v1547
    %1721 = vmatpush.bf16.msra.mxu0 %v1545
    %1722 = vmatmul.bf16.gmra.mxu0 %v1426
    %v1723 = vpop.f32.mrf.mxu0
    %v1724 = vadd.f32 %v1469, %v1723
    %v1725 = vpop.f32.mrf.mxu0
    %v1726 = vadd.f32 %v1469, %v1725
    %1727 = vmatmul.bf16.gmra.mxu0 %v1428
    %v1728 = vpop.f32.mrf.mxu0
    %v1729 = vadd.f32 %v1469, %v1728
    %v1730 = vpop.f32.mrf.mxu0
    %v1731 = vadd.f32 %v1469, %v1730
    %1732 = vmatmul.bf16.gmra.mxu0 %v1430
    %v1733 = vpop.f32.mrf.mxu0
    %v1734 = vadd.f32 %v1469, %v1733
    %v1735 = vpop.f32.mrf.mxu0
    %v1736 = vadd.f32 %v1469, %v1735
    %1737 = vmatmul.bf16.gmra.mxu0 %v1432
    %v1738 = vpop.f32.mrf.mxu0
    %v1739 = vadd.f32 %v1469, %v1738
    %v1740 = vpop.f32.mrf.mxu0
    %v1741 = vadd.f32 %v1469, %v1740
    %1742 = vmatmul.bf16.gmra.mxu0 %v1434
    %v1743 = vpop.f32.mrf.mxu0
    %v1744 = vadd.f32 %v1469, %v1743
    %v1745 = vpop.f32.mrf.mxu0
    %v1746 = vadd.f32 %v1469, %v1745
    %1747 = vmatmul.bf16.gmra.mxu0 %v1436
    %v1748 = vpop.f32.mrf.mxu0
    %v1749 = vadd.f32 %v1469, %v1748
    %v1750 = vpop.f32.mrf.mxu0
    %v1751 = vadd.f32 %v1469, %v1750
    %1752 = vmatmul.bf16.gmra.mxu0 %v1438
    %v1753 = vpop.f32.mrf.mxu0
    %v1754 = vadd.f32 %v1469, %v1753
    %v1755 = vpop.f32.mrf.mxu0
    %v1756 = vadd.f32 %v1469, %v1755
    %1757 = vmatmul.bf16.gmra.mxu0 %v1440
    %v1758 = vpop.f32.mrf.mxu0
    %v1759 = vadd.f32 %v1469, %v1758
    %v1760 = vpop.f32.mrf.mxu0
    %v1761 = vadd.f32 %v1469, %v1760
    %1762 = vdwg.mxu0
    %1763 = vmatpush.bf16.msra.mxu0 0
    %1764 = vmatpush.bf16.msra.mxu0 0
    %1765 = vmatpush.bf16.msra.mxu0 0
    %1766 = vmatpush.bf16.msra.mxu0 0
    %1767 = vmatpush.bf16.msra.mxu0 %v1567
    %1768 = vmatpush.bf16.msra.mxu0 %v1565
    %1769 = vmatpush.bf16.msra.mxu0 %v1563
    %1770 = vmatpush.bf16.msra.mxu0 %v1561
    %1771 = vmatmul.bf16.gmra.mxu0 %v1593
    %v1772 = vpop.f32.mrf.mxu0
    %v1773 = vadd.f32 %v1724, %v1772
    %v1774 = vpop.f32.mrf.mxu0
    %v1775 = vadd.f32 %v1726, %v1774
    %1776 = vmatmul.bf16.gmra.mxu0 %v1596
    %v1777 = vpop.f32.mrf.mxu0
    %v1778 = vadd.f32 %v1729, %v1777
    %v1779 = vpop.f32.mrf.mxu0
    %v1780 = vadd.f32 %v1731, %v1779
    %1781 = vmatmul.bf16.gmra.mxu0 %v1599
    %v1782 = vpop.f32.mrf.mxu0
    %v1783 = vadd.f32 %v1734, %v1782
    %v1784 = vpop.f32.mrf.mxu0
    %v1785 = vadd.f32 %v1736, %v1784
    %1786 = vmatmul.bf16.gmra.mxu0 %v1602
    %v1787 = vpop.f32.mrf.mxu0
    %v1788 = vadd.f32 %v1739, %v1787
    %v1789 = vpop.f32.mrf.mxu0
    %v1790 = vadd.f32 %v1741, %v1789
    %1791 = vmatmul.bf16.gmra.mxu0 %v1605
    %v1792 = vpop.f32.mrf.mxu0
    %v1793 = vadd.f32 %v1744, %v1792
    %v1794 = vpop.f32.mrf.mxu0
    %v1795 = vadd.f32 %v1746, %v1794
    %1796 = vmatmul.bf16.gmra.mxu0 %v1608
    %v1797 = vpop.f32.mrf.mxu0
    %v1798 = vadd.f32 %v1749, %v1797
    %v1799 = vpop.f32.mrf.mxu0
    %v1800 = vadd.f32 %v1751, %v1799
    %1801 = vmatmul.bf16.gmra.mxu0 %v1611
    %v1802 = vpop.f32.mrf.mxu0
    %v1803 = vadd.f32 %v1754, %v1802
    %v1804 = vpop.f32.mrf.mxu0
    %v1805 = vadd.f32 %v1756, %v1804
    %1806 = vmatmul.bf16.gmra.mxu0 %v1614
    %v1807 = vpop.f32.mrf.mxu0
    %v1808 = vadd.f32 %v1759, %v1807
    %v1809 = vpop.f32.mrf.mxu0
    %v1810 = vadd.f32 %v1761, %v1809
    %1811 = vdwg.mxu0
    %v1812 = vmax.f32 %v1675, 0.0
    %v1813 = vmax.f32 %v1773, 0.0
    %v1814 = vmax.f32 %v1677, 0.0
    %v1815 = vmax.f32 %v1775, 0.0
    %v1816 = vmax.f32 %v1680, 0.0
    %v1817 = vmax.f32 %v1778, 0.0
    %v1818 = vmax.f32 %v1682, 0.0
    %v1819 = vmax.f32 %v1780, 0.0
    %v1820 = vmax.f32 %v1685, 0.0
    %v1821 = vmax.f32 %v1783, 0.0
    %v1822 = vmax.f32 %v1687, 0.0
    %v1823 = vmax.f32 %v1785, 0.0
    %v1824 = vmax.f32 %v1690, 0.0
    %v1825 = vmax.f32 %v1788, 0.0
    %v1826 = vmax.f32 %v1692, 0.0
    %v1827 = vmax.f32 %v1790, 0.0
    %v1828 = vmax.f32 %v1695, 0.0
    %v1829 = vmax.f32 %v1793, 0.0
    %v1830 = vmax.f32 %v1697, 0.0
    %v1831 = vmax.f32 %v1795, 0.0
    %v1832 = vmax.f32 %v1700, 0.0
    %v1833 = vmax.f32 %v1798, 0.0
    %v1834 = vmax.f32 %v1702, 0.0
    %v1835 = vmax.f32 %v1800, 0.0
    %v1836 = vmax.f32 %v1705, 0.0
    %v1837 = vmax.f32 %v1803, 0.0
    %v1838 = vmax.f32 %v1707, 0.0
    %v1839 = vmax.f32 %v1805, 0.0
    %v1840 = vmax.f32 %v1710, 0.0
    %v1841 = vmax.f32 %v1808, 0.0
    %v1842 = vmax.f32 %v1712, 0.0
    %v1843 = vmax.f32 %v1810, 0.0
    %v1844 = vpack.c.bf16 %v1814, %v1812
    %v1845 = vpack.c.bf16 %v1815, %v1813
    %v1846 = vpack.c.bf16 %v1818, %v1816
    %v1847 = vpack.c.bf16 %v1819, %v1817
    %v1848 = vpack.c.bf16 %v1822, %v1820
    %v1849 = vpack.c.bf16 %v1823, %v1821
    %v1850 = vpack.c.bf16 %v1826, %v1824
    %v1851 = vpack.c.bf16 %v1827, %v1825
    %v1852 = vpack.c.bf16 %v1830, %v1828
    %v1853 = vpack.c.bf16 %v1831, %v1829
    %v1854 = vpack.c.bf16 %v1834, %v1832
    %v1855 = vpack.c.bf16 %v1835, %v1833
    %v1856 = vpack.c.bf16 %v1838, %v1836
    %v1857 = vpack.c.bf16 %v1839, %v1837
    %v1858 = vpack.c.bf16 %v1842, %v1840
    %v1859 = vpack.c.bf16 %v1843, %v1841
    %s1860 = scalar_lea.vmem [#allocation2], 384
    %v1861 = vld [vmem:[%s1860] sm:$0xf]
    %v1862 = vld [vmem:[%s1860 + $0x8] sm:$0xf]
    %v1863 = vld [vmem:[%s1860 + $0x10] sm:$0xf]
    %v1864 = vld [vmem:[%s1860 + $0x18] sm:$0xf]
    %v1865 = vld [vmem:[%s1860 + $0x20] sm:$0xf]
    %v1866 = vld [vmem:[%s1860 + $0x28] sm:$0xf]
    %v1867 = vld [vmem:[%s1860 + $0x30] sm:$0xf]
    %v1868 = vld [vmem:[%s1860 + $0x38] sm:$0xf]
    %v1877 = vunpack.c.l.b16 %v1861
    %v1878 = vunpack.c.l.b16 %v1862
    %v1879 = vunpack.c.l.b16 %v1863
    %v1880 = vunpack.c.l.b16 %v1864
    %v1881 = vunpack.c.l.b16 %v1865
    %v1882 = vunpack.c.l.b16 %v1866
    %v1883 = vunpack.c.l.b16 %v1867
    %v1884 = vunpack.c.l.b16 %v1868
    %v1885 = vpack.c.b16 %v1878, %v1877
    %v1886 = vpack.c.b16 %v1880, %v1879
    %v1887 = vpack.c.b16 %v1882, %v1881
    %v1888 = vpack.c.b16 %v1884, %v1883
    %1893 = vmatpush.bf16.msra.mxu0 %v1858
    %1894 = vmatpush.bf16.msra.mxu0 %v1856
    %1895 = vmatpush.bf16.msra.mxu0 %v1854
    %1896 = vmatpush.bf16.msra.mxu0 %v1852
    %1897 = vmatpush.bf16.msra.mxu0 %v1850
    %1898 = vmatpush.bf16.msra.mxu0 %v1848
    %1899 = vmatpush.bf16.msra.mxu0 %v1846
    %1900 = vmatpush.bf16.msra.mxu0 %v1844
    %1901 = vmatmul.bf16.gmra.mxu0 %v1885
    %v1902 = vpop.f32.mrf.mxu0
    %v1903 = vadd.f32 0.0, %v1902
    %v1904 = vpop.f32.mrf.mxu0
    %v1905 = vadd.f32 0.0, %v1904
    %1906 = vmatmul.bf16.gmra.mxu0 %v1886
    %v1907 = vpop.f32.mrf.mxu0
    %v1908 = vadd.f32 0.0, %v1907
    %v1909 = vpop.f32.mrf.mxu0
    %v1910 = vadd.f32 0.0, %v1909
    %1911 = vmatmul.bf16.gmra.mxu0 %v1887
    %v1912 = vpop.f32.mrf.mxu0
    %v1913 = vadd.f32 0.0, %v1912
    %v1914 = vpop.f32.mrf.mxu0
    %v1915 = vadd.f32 0.0, %v1914
    %1916 = vmatmul.bf16.gmra.mxu0 %v1888
    %v1917 = vpop.f32.mrf.mxu0
    %v1918 = vadd.f32 0.0, %v1917
    %v1919 = vpop.f32.mrf.mxu0
    %v1920 = vadd.f32 0.0, %v1919
    %1921 = vdwg.mxu0
    %1922 = vmatpush.bf16.msra.mxu0 %v1859
    %1923 = vmatpush.bf16.msra.mxu0 %v1857
    %1924 = vmatpush.bf16.msra.mxu0 %v1855
    %1925 = vmatpush.bf16.msra.mxu0 %v1853
    %1926 = vmatpush.bf16.msra.mxu0 %v1851
    %1927 = vmatpush.bf16.msra.mxu0 %v1849
    %1928 = vmatpush.bf16.msra.mxu0 %v1847
    %1929 = vmatpush.bf16.msra.mxu0 %v1845
    %1930 = vmatmul.bf16.gmra.mxu0 %v1885
    %v1931 = vpop.f32.mrf.mxu0
    %v1932 = vadd.f32 0.0, %v1931
    %v1933 = vpop.f32.mrf.mxu0
    %v1934 = vadd.f32 0.0, %v1933
    %1935 = vmatmul.bf16.gmra.mxu0 %v1886
    %v1936 = vpop.f32.mrf.mxu0
    %v1937 = vadd.f32 0.0, %v1936
    %v1938 = vpop.f32.mrf.mxu0
    %v1939 = vadd.f32 0.0, %v1938
    %1940 = vmatmul.bf16.gmra.mxu0 %v1887
    %v1941 = vpop.f32.mrf.mxu0
    %v1942 = vadd.f32 0.0, %v1941
    %v1943 = vpop.f32.mrf.mxu0
    %v1944 = vadd.f32 0.0, %v1943
    %1945 = vmatmul.bf16.gmra.mxu0 %v1888
    %v1946 = vpop.f32.mrf.mxu0
    %v1947 = vadd.f32 0.0, %v1946
    %v1948 = vpop.f32.mrf.mxu0
    %v1949 = vadd.f32 0.0, %v1948
    %1950 = vdwg.mxu0
    %s1951 = scalar_lea.vmem [#allocation2], 512
    %v1952 = vld [vmem:[%s1951] sm:$0xf]
    %v1953 = vld [vmem:[%s1951 + $0x8] sm:$0xf]
    %v1954 = vld [vmem:[%s1951 + $0x10] sm:$0xf]
    %v1955 = vld [vmem:[%s1951 + $0x18] sm:$0xf]
    %v1956 = vld [vmem:[%s1951 + $0x20] sm:$0xf]
    %v1957 = vld [vmem:[%s1951 + $0x28] sm:$0xf]
    %v1958 = vld [vmem:[%s1951 + $0x30] sm:$0xf]
    %v1959 = vld [vmem:[%s1951 + $0x38] sm:$0xf]
    %v1968 = vunpack.c.l.b16 %v1952
    %v1969 = vunpack.c.l.b16 %v1953
    %v1970 = vunpack.c.l.b16 %v1954
    %v1971 = vunpack.c.l.b16 %v1955
    %v1972 = vunpack.c.l.b16 %v1956
    %v1973 = vunpack.c.l.b16 %v1957
    %v1974 = vunpack.c.l.b16 %v1958
    %v1975 = vunpack.c.l.b16 %v1959
    %v1976 = vpack.c.b16 %v1969, %v1968
    %v1977 = vpack.c.b16 %v1971, %v1970
    %v1978 = vpack.c.b16 %v1973, %v1972
    %v1979 = vpack.c.b16 %v1975, %v1974
    %1984 = vmatpush.bf16.msra.mxu0 %v1858
    %1985 = vmatpush.bf16.msra.mxu0 %v1856
    %1986 = vmatpush.bf16.msra.mxu0 %v1854
    %1987 = vmatpush.bf16.msra.mxu0 %v1852
    %1988 = vmatpush.bf16.msra.mxu0 %v1850
    %1989 = vmatpush.bf16.msra.mxu0 %v1848
    %1990 = vmatpush.bf16.msra.mxu0 %v1846
    %1991 = vmatpush.bf16.msra.mxu0 %v1844
    %1992 = vmatmul.bf16.gmra.mxu0 %v1976
    %v1993 = vpop.f32.mrf.mxu0
    %v1994 = vadd.f32 0.0, %v1993
    %v1995 = vpop.f32.mrf.mxu0
    %v1996 = vadd.f32 0.0, %v1995
    %1997 = vmatmul.bf16.gmra.mxu0 %v1977
    %v1998 = vpop.f32.mrf.mxu0
    %v1999 = vadd.f32 0.0, %v1998
    %v2000 = vpop.f32.mrf.mxu0
    %v2001 = vadd.f32 0.0, %v2000
    %2002 = vmatmul.bf16.gmra.mxu0 %v1978
    %v2003 = vpop.f32.mrf.mxu0
    %v2004 = vadd.f32 0.0, %v2003
    %v2005 = vpop.f32.mrf.mxu0
    %v2006 = vadd.f32 0.0, %v2005
    %2007 = vmatmul.bf16.gmra.mxu0 %v1979
    %v2008 = vpop.f32.mrf.mxu0
    %v2009 = vadd.f32 0.0, %v2008
    %v2010 = vpop.f32.mrf.mxu0
    %v2011 = vadd.f32 0.0, %v2010
    %2012 = vdwg.mxu0
    %2013 = vmatpush.bf16.msra.mxu0 %v1859
    %2014 = vmatpush.bf16.msra.mxu0 %v1857
    %2015 = vmatpush.bf16.msra.mxu0 %v1855
    %2016 = vmatpush.bf16.msra.mxu0 %v1853
    %2017 = vmatpush.bf16.msra.mxu0 %v1851
    %2018 = vmatpush.bf16.msra.mxu0 %v1849
    %2019 = vmatpush.bf16.msra.mxu0 %v1847
    %2020 = vmatpush.bf16.msra.mxu0 %v1845
    %2021 = vmatmul.bf16.gmra.mxu0 %v1976
    %v2022 = vpop.f32.mrf.mxu0
    %v2023 = vadd.f32 0.0, %v2022
    %v2024 = vpop.f32.mrf.mxu0
    %v2025 = vadd.f32 0.0, %v2024
    %2026 = vmatmul.bf16.gmra.mxu0 %v1977
    %v2027 = vpop.f32.mrf.mxu0
    %v2028 = vadd.f32 0.0, %v2027
    %v2029 = vpop.f32.mrf.mxu0
    %v2030 = vadd.f32 0.0, %v2029
    %2031 = vmatmul.bf16.gmra.mxu0 %v1978
    %v2032 = vpop.f32.mrf.mxu0
    %v2033 = vadd.f32 0.0, %v2032
    %v2034 = vpop.f32.mrf.mxu0
    %v2035 = vadd.f32 0.0, %v2034
    %2036 = vmatmul.bf16.gmra.mxu0 %v1979
    %v2037 = vpop.f32.mrf.mxu0
    %v2038 = vadd.f32 0.0, %v2037
    %v2039 = vpop.f32.mrf.mxu0
    %v2040 = vadd.f32 0.0, %v2039
    %2041 = vdwg.mxu0
    %s2042 = scalar_lea.vmem [#allocation2], 640
    %v2043 = vld [vmem:[%s2042] sm:$0xf]
    %v2044 = vld [vmem:[%s2042 + $0x8] sm:$0xf]
    %v2045 = vld [vmem:[%s2042 + $0x10] sm:$0xf]
    %v2046 = vld [vmem:[%s2042 + $0x18] sm:$0xf]
    %v2047 = vld [vmem:[%s2042 + $0x20] sm:$0xf]
    %v2048 = vld [vmem:[%s2042 + $0x28] sm:$0xf]
    %v2049 = vld [vmem:[%s2042 + $0x30] sm:$0xf]
    %v2050 = vld [vmem:[%s2042 + $0x38] sm:$0xf]
    %v2059 = vunpack.c.l.b16 %v2043
    %v2060 = vunpack.c.l.b16 %v2044
    %v2061 = vunpack.c.l.b16 %v2045
    %v2062 = vunpack.c.l.b16 %v2046
    %v2063 = vunpack.c.l.b16 %v2047
    %v2064 = vunpack.c.l.b16 %v2048
    %v2065 = vunpack.c.l.b16 %v2049
    %v2066 = vunpack.c.l.b16 %v2050
    %v2067 = vpack.c.b16 %v2060, %v2059
    %v2068 = vpack.c.b16 %v2062, %v2061
    %v2069 = vpack.c.b16 %v2064, %v2063
    %v2070 = vpack.c.b16 %v2066, %v2065
    %2075 = vmatpush.bf16.msra.mxu0 %v1858
    %2076 = vmatpush.bf16.msra.mxu0 %v1856
    %2077 = vmatpush.bf16.msra.mxu0 %v1854
    %2078 = vmatpush.bf16.msra.mxu0 %v1852
    %2079 = vmatpush.bf16.msra.mxu0 %v1850
    %2080 = vmatpush.bf16.msra.mxu0 %v1848
    %2081 = vmatpush.bf16.msra.mxu0 %v1846
    %2082 = vmatpush.bf16.msra.mxu0 %v1844
    %2083 = vmatmul.bf16.gmra.mxu0 %v2067
    %v2084 = vpop.f32.mrf.mxu0
    %v2085 = vadd.f32 0.0, %v2084
    %v2086 = vpop.f32.mrf.mxu0
    %v2087 = vadd.f32 0.0, %v2086
    %2088 = vmatmul.bf16.gmra.mxu0 %v2068
    %v2089 = vpop.f32.mrf.mxu0
    %v2090 = vadd.f32 0.0, %v2089
    %v2091 = vpop.f32.mrf.mxu0
    %v2092 = vadd.f32 0.0, %v2091
    %2093 = vmatmul.bf16.gmra.mxu0 %v2069
    %v2094 = vpop.f32.mrf.mxu0
    %v2095 = vadd.f32 0.0, %v2094
    %v2096 = vpop.f32.mrf.mxu0
    %v2097 = vadd.f32 0.0, %v2096
    %2098 = vmatmul.bf16.gmra.mxu0 %v2070
    %v2099 = vpop.f32.mrf.mxu0
    %v2100 = vadd.f32 0.0, %v2099
    %v2101 = vpop.f32.mrf.mxu0
    %v2102 = vadd.f32 0.0, %v2101
    %2103 = vdwg.mxu0
    %2104 = vmatpush.bf16.msra.mxu0 %v1859
    %2105 = vmatpush.bf16.msra.mxu0 %v1857
    %2106 = vmatpush.bf16.msra.mxu0 %v1855
    %2107 = vmatpush.bf16.msra.mxu0 %v1853
    %2108 = vmatpush.bf16.msra.mxu0 %v1851
    %2109 = vmatpush.bf16.msra.mxu0 %v1849
    %2110 = vmatpush.bf16.msra.mxu0 %v1847
    %2111 = vmatpush.bf16.msra.mxu0 %v1845
    %2112 = vmatmul.bf16.gmra.mxu0 %v2067
    %v2113 = vpop.f32.mrf.mxu0
    %v2114 = vadd.f32 0.0, %v2113
    %v2115 = vpop.f32.mrf.mxu0
    %v2116 = vadd.f32 0.0, %v2115
    %2117 = vmatmul.bf16.gmra.mxu0 %v2068
    %v2118 = vpop.f32.mrf.mxu0
    %v2119 = vadd.f32 0.0, %v2118
    %v2120 = vpop.f32.mrf.mxu0
    %v2121 = vadd.f32 0.0, %v2120
    %2122 = vmatmul.bf16.gmra.mxu0 %v2069
    %v2123 = vpop.f32.mrf.mxu0
    %v2124 = vadd.f32 0.0, %v2123
    %v2125 = vpop.f32.mrf.mxu0
    %v2126 = vadd.f32 0.0, %v2125
    %2127 = vmatmul.bf16.gmra.mxu0 %v2070
    %v2128 = vpop.f32.mrf.mxu0
    %v2129 = vadd.f32 0.0, %v2128
    %v2130 = vpop.f32.mrf.mxu0
    %v2131 = vadd.f32 0.0, %v2130
    %2132 = vdwg.mxu0
    %v2133 = vmax.f32 %v1903, %v1994
    %v2134 = vmax.f32 %v1932, %v2023
    %v2135 = vmax.f32 %v1905, %v1996
    %v2136 = vmax.f32 %v1934, %v2025
    %v2137 = vmax.f32 %v1908, %v1999
    %v2138 = vmax.f32 %v1937, %v2028
    %v2139 = vmax.f32 %v1910, %v2001
    %v2140 = vmax.f32 %v1939, %v2030
    %v2141 = vmax.f32 %v1913, %v2004
    %v2142 = vmax.f32 %v1942, %v2033
    %v2143 = vmax.f32 %v1915, %v2006
    %v2144 = vmax.f32 %v1944, %v2035
    %v2145 = vmax.f32 %v1918, %v2009
    %v2146 = vmax.f32 %v1947, %v2038
    %v2147 = vmax.f32 %v1920, %v2011
    %v2148 = vmax.f32 %v1949, %v2040
    %v2149 = vmax.f32 %v2133, %v2085
    %v2150 = vmax.f32 %v2134, %v2114
    %v2151 = vmax.f32 %v2135, %v2087
    %v2152 = vmax.f32 %v2136, %v2116
    %v2153 = vmax.f32 %v2137, %v2090
    %v2154 = vmax.f32 %v2138, %v2119
    %v2155 = vmax.f32 %v2139, %v2092
    %v2156 = vmax.f32 %v2140, %v2121
    %v2157 = vmax.f32 %v2141, %v2095
    %v2158 = vmax.f32 %v2142, %v2124
    %v2159 = vmax.f32 %v2143, %v2097
    %v2160 = vmax.f32 %v2144, %v2126
    %v2161 = vmax.f32 %v2145, %v2100
    %v2162 = vmax.f32 %v2146, %v2129
    %v2163 = vmax.f32 %v2147, %v2102
    %v2164 = vmax.f32 %v2148, %v2131
    %v2165 = vpack.c.bf16 %v2151, %v2149
    %v2166 = vpack.c.bf16 %v2152, %v2150
    %v2167 = vpack.c.bf16 %v2155, %v2153
    %v2168 = vpack.c.bf16 %v2156, %v2154
    %v2169 = vpack.c.bf16 %v2159, %v2157
    %v2170 = vpack.c.bf16 %v2160, %v2158
    %v2171 = vpack.c.bf16 %v2163, %v2161
    %v2172 = vpack.c.bf16 %v2164, %v2162
    %s2173 = scalar_lea.vmem [#allocation4], 384
    %v2174 = vld [vmem:[%s2173] sm:$0xf]
    %v2175 = vld [vmem:[%s2173 + $0x8] sm:$0xf]
    %v2176 = vld [vmem:[%s2173 + $0x10] sm:$0xf]
    %v2177 = vld [vmem:[%s2173 + $0x18] sm:$0xf]
    %v2178 = vld [vmem:[%s2173 + $0x20] sm:$0xf]
    %v2179 = vld [vmem:[%s2173 + $0x28] sm:$0xf]
    %v2180 = vld [vmem:[%s2173 + $0x30] sm:$0xf]
    %v2181 = vld [vmem:[%s2173 + $0x38] sm:$0xf]
    %v2182 = vld [vmem:[%s2173 + $0x40] sm:$0xf]
    %v2183 = vld [vmem:[%s2173 + $0x48] sm:$0xf]
    %v2184 = vld [vmem:[%s2173 + $0x50] sm:$0xf]
    %v2185 = vld [vmem:[%s2173 + $0x58] sm:$0xf]
    %v2186 = vld [vmem:[%s2173 + $0x60] sm:$0xf]
    %v2187 = vld [vmem:[%s2173 + $0x68] sm:$0xf]
    %v2188 = vld [vmem:[%s2173 + $0x70] sm:$0xf]
    %v2189 = vld [vmem:[%s2173 + $0x78] sm:$0xf]
    %v2190 = vld [vmem:[%s2173 + $0x80] sm:$0xf]
    %v2191 = vld [vmem:[%s2173 + $0x88] sm:$0xf]
    %v2192 = vld [vmem:[%s2173 + $0x90] sm:$0xf]
    %v2193 = vld [vmem:[%s2173 + $0x98] sm:$0xf]
    %v2194 = vld [vmem:[%s2173 + $0xa0] sm:$0xf]
    %v2195 = vld [vmem:[%s2173 + $0xa8] sm:$0xf]
    %v2196 = vld [vmem:[%s2173 + $0xb0] sm:$0xf]
    %v2197 = vld [vmem:[%s2173 + $0xb8] sm:$0xf]
    %v2198 = vld [vmem:[%s2173 + $0xc0] sm:$0xf]
    %v2199 = vld [vmem:[%s2173 + $0xc8] sm:$0xf]
    %v2200 = vld [vmem:[%s2173 + $0xd0] sm:$0xf]
    %v2201 = vld [vmem:[%s2173 + $0xd8] sm:$0xf]
    %v2202 = vld [vmem:[%s2173 + $0xe0] sm:$0xf]
    %v2203 = vld [vmem:[%s2173 + $0xe8] sm:$0xf]
    %v2204 = vld [vmem:[%s2173 + $0xf0] sm:$0xf]
    %v2205 = vld [vmem:[%s2173 + $0xf8] sm:$0xf]
    %v2238 = vunpack.c.l.b16 %v2174
    %v2239 = vunpack.c.l.b16 %v2175
    %v2240 = vunpack.c.l.b16 %v2176
    %v2241 = vunpack.c.l.b16 %v2177
    %v2242 = vunpack.c.l.b16 %v2178
    %v2243 = vunpack.c.l.b16 %v2179
    %v2244 = vunpack.c.l.b16 %v2180
    %v2245 = vunpack.c.l.b16 %v2181
    %v2246 = vunpack.c.l.b16 %v2182
    %v2247 = vunpack.c.l.b16 %v2183
    %v2248 = vunpack.c.l.b16 %v2184
    %v2249 = vunpack.c.l.b16 %v2185
    %v2250 = vunpack.c.l.b16 %v2186
    %v2251 = vunpack.c.l.b16 %v2187
    %v2252 = vunpack.c.l.b16 %v2188
    %v2253 = vunpack.c.l.b16 %v2189
    %v2254 = vunpack.c.l.b16 %v2190
    %v2255 = vunpack.c.l.b16 %v2191
    %v2256 = vunpack.c.l.b16 %v2192
    %v2257 = vunpack.c.l.b16 %v2193
    %v2258 = vunpack.c.l.b16 %v2194
    %v2259 = vunpack.c.l.b16 %v2195
    %v2260 = vunpack.c.l.b16 %v2196
    %v2261 = vunpack.c.l.b16 %v2197
    %v2262 = vunpack.c.l.b16 %v2198
    %v2263 = vunpack.c.l.b16 %v2199
    %v2264 = vunpack.c.l.b16 %v2200
    %v2265 = vunpack.c.l.b16 %v2201
    %v2266 = vunpack.c.l.b16 %v2202
    %v2267 = vunpack.c.l.b16 %v2203
    %v2268 = vunpack.c.l.b16 %v2204
    %v2269 = vunpack.c.l.b16 %v2205
    %v2270 = vpack.c.b16 %v2239, %v2238
    %v2271 = vpack.c.b16 %v2241, %v2240
    %v2272 = vpack.c.b16 %v2243, %v2242
    %v2273 = vpack.c.b16 %v2245, %v2244
    %v2274 = vpack.c.b16 %v2247, %v2246
    %v2275 = vpack.c.b16 %v2249, %v2248
    %v2276 = vpack.c.b16 %v2251, %v2250
    %v2277 = vpack.c.b16 %v2253, %v2252
    %v2278 = vpack.c.b16 %v2255, %v2254
    %v2279 = vpack.c.b16 %v2257, %v2256
    %v2280 = vpack.c.b16 %v2259, %v2258
    %v2281 = vpack.c.b16 %v2261, %v2260
    %v2282 = vpack.c.b16 %v2263, %v2262
    %v2283 = vpack.c.b16 %v2265, %v2264
    %v2284 = vpack.c.b16 %v2267, %v2266
    %v2285 = vpack.c.b16 %v2269, %v2268
    %2302 = vmatpush.bf16.msra.mxu0 %v2277
    %2303 = vmatpush.bf16.msra.mxu0 %v2276
    %2304 = vmatpush.bf16.msra.mxu0 %v2275
    %2305 = vmatpush.bf16.msra.mxu0 %v2274
    %2306 = vmatpush.bf16.msra.mxu0 %v2273
    %2307 = vmatpush.bf16.msra.mxu0 %v2272
    %2308 = vmatpush.bf16.msra.mxu0 %v2271
    %2309 = vmatpush.bf16.msra.mxu0 %v2270
    %2310 = vmatmul.bf16.gmra.mxu0 %v2165
    %v2311 = vpop.f32.mrf.mxu0
    %v2312 = vadd.f32 0.0, %v2311
    %v2313 = vpop.f32.mrf.mxu0
    %v2314 = vadd.f32 0.0, %v2313
    %2315 = vmatmul.bf16.gmra.mxu0 %v2167
    %v2316 = vpop.f32.mrf.mxu0
    %v2317 = vadd.f32 0.0, %v2316
    %v2318 = vpop.f32.mrf.mxu0
    %v2319 = vadd.f32 0.0, %v2318
    %2320 = vmatmul.bf16.gmra.mxu0 %v2169
    %v2321 = vpop.f32.mrf.mxu0
    %v2322 = vadd.f32 0.0, %v2321
    %v2323 = vpop.f32.mrf.mxu0
    %v2324 = vadd.f32 0.0, %v2323
    %2325 = vmatmul.bf16.gmra.mxu0 %v2171
    %v2326 = vpop.f32.mrf.mxu0
    %v2327 = vadd.f32 0.0, %v2326
    %v2328 = vpop.f32.mrf.mxu0
    %v2329 = vadd.f32 0.0, %v2328
    %2330 = vdwg.mxu0
    %2331 = vmatpush.bf16.msra.mxu0 %v2285
    %2332 = vmatpush.bf16.msra.mxu0 %v2284
    %2333 = vmatpush.bf16.msra.mxu0 %v2283
    %2334 = vmatpush.bf16.msra.mxu0 %v2282
    %2335 = vmatpush.bf16.msra.mxu0 %v2281
    %2336 = vmatpush.bf16.msra.mxu0 %v2280
    %2337 = vmatpush.bf16.msra.mxu0 %v2279
    %2338 = vmatpush.bf16.msra.mxu0 %v2278
    %2339 = vmatmul.bf16.gmra.mxu0 %v2166
    %v2340 = vpop.f32.mrf.mxu0
    %v2341 = vadd.f32 %v2312, %v2340
    %v2342 = vpop.f32.mrf.mxu0
    %v2343 = vadd.f32 %v2314, %v2342
    %2344 = vmatmul.bf16.gmra.mxu0 %v2168
    %v2345 = vpop.f32.mrf.mxu0
    %v2346 = vadd.f32 %v2317, %v2345
    %v2347 = vpop.f32.mrf.mxu0
    %v2348 = vadd.f32 %v2319, %v2347
    %2349 = vmatmul.bf16.gmra.mxu0 %v2170
    %v2350 = vpop.f32.mrf.mxu0
    %v2351 = vadd.f32 %v2322, %v2350
    %v2352 = vpop.f32.mrf.mxu0
    %v2353 = vadd.f32 %v2324, %v2352
    %2354 = vmatmul.bf16.gmra.mxu0 %v2172
    %v2355 = vpop.f32.mrf.mxu0
    %v2356 = vadd.f32 %v2327, %v2355
    %v2357 = vpop.f32.mrf.mxu0
    %v2358 = vadd.f32 %v2329, %v2357
    %2359 = vdwg.mxu0
    %s2360 = scalar_lea.vmem [#allocation4], 768
    %v2361 = vld [vmem:[%s2360] sm:$0xf]
    %v2362 = vld [vmem:[%s2360 + $0x8] sm:$0xf]
    %v2363 = vld [vmem:[%s2360 + $0x10] sm:$0xf]
    %v2364 = vld [vmem:[%s2360 + $0x18] sm:$0xf]
    %v2365 = vld [vmem:[%s2360 + $0x20] sm:$0xf]
    %v2366 = vld [vmem:[%s2360 + $0x28] sm:$0xf]
    %v2367 = vld [vmem:[%s2360 + $0x30] sm:$0xf]
    %v2368 = vld [vmem:[%s2360 + $0x38] sm:$0xf]
    %v2369 = vld [vmem:[%s2360 + $0x40] sm:$0xf]
    %v2370 = vld [vmem:[%s2360 + $0x48] sm:$0xf]
    %v2371 = vld [vmem:[%s2360 + $0x50] sm:$0xf]
    %v2372 = vld [vmem:[%s2360 + $0x58] sm:$0xf]
    %v2373 = vld [vmem:[%s2360 + $0x60] sm:$0xf]
    %v2374 = vld [vmem:[%s2360 + $0x68] sm:$0xf]
    %v2375 = vld [vmem:[%s2360 + $0x70] sm:$0xf]
    %v2376 = vld [vmem:[%s2360 + $0x78] sm:$0xf]
    %v2377 = vld [vmem:[%s2360 + $0x80] sm:$0xf]
    %v2378 = vld [vmem:[%s2360 + $0x88] sm:$0xf]
    %v2379 = vld [vmem:[%s2360 + $0x90] sm:$0xf]
    %v2380 = vld [vmem:[%s2360 + $0x98] sm:$0xf]
    %v2381 = vld [vmem:[%s2360 + $0xa0] sm:$0xf]
    %v2382 = vld [vmem:[%s2360 + $0xa8] sm:$0xf]
    %v2383 = vld [vmem:[%s2360 + $0xb0] sm:$0xf]
    %v2384 = vld [vmem:[%s2360 + $0xb8] sm:$0xf]
    %v2385 = vld [vmem:[%s2360 + $0xc0] sm:$0xf]
    %v2386 = vld [vmem:[%s2360 + $0xc8] sm:$0xf]
    %v2387 = vld [vmem:[%s2360 + $0xd0] sm:$0xf]
    %v2388 = vld [vmem:[%s2360 + $0xd8] sm:$0xf]
    %v2389 = vld [vmem:[%s2360 + $0xe0] sm:$0xf]
    %v2390 = vld [vmem:[%s2360 + $0xe8] sm:$0xf]
    %v2391 = vld [vmem:[%s2360 + $0xf0] sm:$0xf]
    %v2392 = vld [vmem:[%s2360 + $0xf8] sm:$0xf]
    %v2425 = vunpack.c.l.b16 %v2361
    %v2426 = vunpack.c.l.b16 %v2362
    %v2427 = vunpack.c.l.b16 %v2363
    %v2428 = vunpack.c.l.b16 %v2364
    %v2429 = vunpack.c.l.b16 %v2365
    %v2430 = vunpack.c.l.b16 %v2366
    %v2431 = vunpack.c.l.b16 %v2367
    %v2432 = vunpack.c.l.b16 %v2368
    %v2433 = vunpack.c.l.b16 %v2369
    %v2434 = vunpack.c.l.b16 %v2370
    %v2435 = vunpack.c.l.b16 %v2371
    %v2436 = vunpack.c.l.b16 %v2372
    %v2437 = vunpack.c.l.b16 %v2373
    %v2438 = vunpack.c.l.b16 %v2374
    %v2439 = vunpack.c.l.b16 %v2375
    %v2440 = vunpack.c.l.b16 %v2376
    %v2441 = vunpack.c.l.b16 %v2377
    %v2442 = vunpack.c.l.b16 %v2378
    %v2443 = vunpack.c.l.b16 %v2379
    %v2444 = vunpack.c.l.b16 %v2380
    %v2445 = vunpack.c.l.b16 %v2381
    %v2446 = vunpack.c.l.b16 %v2382
    %v2447 = vunpack.c.l.b16 %v2383
    %v2448 = vunpack.c.l.b16 %v2384
    %v2449 = vunpack.c.l.b16 %v2385
    %v2450 = vunpack.c.l.b16 %v2386
    %v2451 = vunpack.c.l.b16 %v2387
    %v2452 = vunpack.c.l.b16 %v2388
    %v2453 = vunpack.c.l.b16 %v2389
    %v2454 = vunpack.c.l.b16 %v2390
    %v2455 = vunpack.c.l.b16 %v2391
    %v2456 = vunpack.c.l.b16 %v2392
    %v2457 = vpack.c.b16 %v2426, %v2425
    %v2458 = vpack.c.b16 %v2428, %v2427
    %v2459 = vpack.c.b16 %v2430, %v2429
    %v2460 = vpack.c.b16 %v2432, %v2431
    %v2461 = vpack.c.b16 %v2434, %v2433
    %v2462 = vpack.c.b16 %v2436, %v2435
    %v2463 = vpack.c.b16 %v2438, %v2437
    %v2464 = vpack.c.b16 %v2440, %v2439
    %v2465 = vpack.c.b16 %v2442, %v2441
    %v2466 = vpack.c.b16 %v2444, %v2443
    %v2467 = vpack.c.b16 %v2446, %v2445
    %v2468 = vpack.c.b16 %v2448, %v2447
    %v2469 = vpack.c.b16 %v2450, %v2449
    %v2470 = vpack.c.b16 %v2452, %v2451
    %v2471 = vpack.c.b16 %v2454, %v2453
    %v2472 = vpack.c.b16 %v2456, %v2455
    %2489 = vmatpush.bf16.msra.mxu0 %v2464
    %2490 = vmatpush.bf16.msra.mxu0 %v2463
    %2491 = vmatpush.bf16.msra.mxu0 %v2462
    %2492 = vmatpush.bf16.msra.mxu0 %v2461
    %2493 = vmatpush.bf16.msra.mxu0 %v2460
    %2494 = vmatpush.bf16.msra.mxu0 %v2459
    %2495 = vmatpush.bf16.msra.mxu0 %v2458
    %2496 = vmatpush.bf16.msra.mxu0 %v2457
    %2497 = vmatmul.bf16.gmra.mxu0 %v2165
    %v2498 = vpop.f32.mrf.mxu0
    %v2499 = vadd.f32 0.0, %v2498
    %v2500 = vpop.f32.mrf.mxu0
    %v2501 = vadd.f32 0.0, %v2500
    %2502 = vmatmul.bf16.gmra.mxu0 %v2167
    %v2503 = vpop.f32.mrf.mxu0
    %v2504 = vadd.f32 0.0, %v2503
    %v2505 = vpop.f32.mrf.mxu0
    %v2506 = vadd.f32 0.0, %v2505
    %2507 = vmatmul.bf16.gmra.mxu0 %v2169
    %v2508 = vpop.f32.mrf.mxu0
    %v2509 = vadd.f32 0.0, %v2508
    %v2510 = vpop.f32.mrf.mxu0
    %v2511 = vadd.f32 0.0, %v2510
    %2512 = vmatmul.bf16.gmra.mxu0 %v2171
    %v2513 = vpop.f32.mrf.mxu0
    %v2514 = vadd.f32 0.0, %v2513
    %v2515 = vpop.f32.mrf.mxu0
    %v2516 = vadd.f32 0.0, %v2515
    %2517 = vdwg.mxu0
    %2518 = vmatpush.bf16.msra.mxu0 %v2472
    %2519 = vmatpush.bf16.msra.mxu0 %v2471
    %2520 = vmatpush.bf16.msra.mxu0 %v2470
    %2521 = vmatpush.bf16.msra.mxu0 %v2469
    %2522 = vmatpush.bf16.msra.mxu0 %v2468
    %2523 = vmatpush.bf16.msra.mxu0 %v2467
    %2524 = vmatpush.bf16.msra.mxu0 %v2466
    %2525 = vmatpush.bf16.msra.mxu0 %v2465
    %2526 = vmatmul.bf16.gmra.mxu0 %v2166
    %v2527 = vpop.f32.mrf.mxu0
    %v2528 = vadd.f32 %v2499, %v2527
    %v2529 = vpop.f32.mrf.mxu0
    %v2530 = vadd.f32 %v2501, %v2529
    %2531 = vmatmul.bf16.gmra.mxu0 %v2168
    %v2532 = vpop.f32.mrf.mxu0
    %v2533 = vadd.f32 %v2504, %v2532
    %v2534 = vpop.f32.mrf.mxu0
    %v2535 = vadd.f32 %v2506, %v2534
    %2536 = vmatmul.bf16.gmra.mxu0 %v2170
    %v2537 = vpop.f32.mrf.mxu0
    %v2538 = vadd.f32 %v2509, %v2537
    %v2539 = vpop.f32.mrf.mxu0
    %v2540 = vadd.f32 %v2511, %v2539
    %2541 = vmatmul.bf16.gmra.mxu0 %v2172
    %v2542 = vpop.f32.mrf.mxu0
    %v2543 = vadd.f32 %v2514, %v2542
    %v2544 = vpop.f32.mrf.mxu0
    %v2545 = vadd.f32 %v2516, %v2544
    %2546 = vdwg.mxu0
    %v2547 = vmax.f32 %v2341, %v2528
    %v2548 = vmax.f32 %v2343, %v2530
    %v2549 = vmax.f32 %v2346, %v2533
    %v2550 = vmax.f32 %v2348, %v2535
    %v2551 = vmax.f32 %v2351, %v2538
    %v2552 = vmax.f32 %v2353, %v2540
    %v2553 = vmax.f32 %v2356, %v2543
    %v2554 = vmax.f32 %v2358, %v2545
    %s2555 = scalar_lea.vmem [#allocation4], 1152
    %v2556 = vld [vmem:[%s2555] sm:$0xf]
    %v2557 = vld [vmem:[%s2555 + $0x8] sm:$0xf]
    %v2558 = vld [vmem:[%s2555 + $0x10] sm:$0xf]
    %v2559 = vld [vmem:[%s2555 + $0x18] sm:$0xf]
    %v2560 = vld [vmem:[%s2555 + $0x20] sm:$0xf]
    %v2561 = vld [vmem:[%s2555 + $0x28] sm:$0xf]
    %v2562 = vld [vmem:[%s2555 + $0x30] sm:$0xf]
    %v2563 = vld [vmem:[%s2555 + $0x38] sm:$0xf]
    %v2564 = vld [vmem:[%s2555 + $0x40] sm:$0xf]
    %v2565 = vld [vmem:[%s2555 + $0x48] sm:$0xf]
    %v2566 = vld [vmem:[%s2555 + $0x50] sm:$0xf]
    %v2567 = vld [vmem:[%s2555 + $0x58] sm:$0xf]
    %v2568 = vld [vmem:[%s2555 + $0x60] sm:$0xf]
    %v2569 = vld [vmem:[%s2555 + $0x68] sm:$0xf]
    %v2570 = vld [vmem:[%s2555 + $0x70] sm:$0xf]
    %v2571 = vld [vmem:[%s2555 + $0x78] sm:$0xf]
    %v2572 = vld [vmem:[%s2555 + $0x80] sm:$0xf]
    %v2573 = vld [vmem:[%s2555 + $0x88] sm:$0xf]
    %v2574 = vld [vmem:[%s2555 + $0x90] sm:$0xf]
    %v2575 = vld [vmem:[%s2555 + $0x98] sm:$0xf]
    %v2576 = vld [vmem:[%s2555 + $0xa0] sm:$0xf]
    %v2577 = vld [vmem:[%s2555 + $0xa8] sm:$0xf]
    %v2578 = vld [vmem:[%s2555 + $0xb0] sm:$0xf]
    %v2579 = vld [vmem:[%s2555 + $0xb8] sm:$0xf]
    %v2580 = vld [vmem:[%s2555 + $0xc0] sm:$0xf]
    %v2581 = vld [vmem:[%s2555 + $0xc8] sm:$0xf]
    %v2582 = vld [vmem:[%s2555 + $0xd0] sm:$0xf]
    %v2583 = vld [vmem:[%s2555 + $0xd8] sm:$0xf]
    %v2584 = vld [vmem:[%s2555 + $0xe0] sm:$0xf]
    %v2585 = vld [vmem:[%s2555 + $0xe8] sm:$0xf]
    %v2586 = vld [vmem:[%s2555 + $0xf0] sm:$0xf]
    %v2587 = vld [vmem:[%s2555 + $0xf8] sm:$0xf]
    %v2620 = vunpack.c.l.b16 %v2556
    %v2621 = vunpack.c.l.b16 %v2557
    %v2622 = vunpack.c.l.b16 %v2558
    %v2623 = vunpack.c.l.b16 %v2559
    %v2624 = vunpack.c.l.b16 %v2560
    %v2625 = vunpack.c.l.b16 %v2561
    %v2626 = vunpack.c.l.b16 %v2562
    %v2627 = vunpack.c.l.b16 %v2563
    %v2628 = vunpack.c.l.b16 %v2564
    %v2629 = vunpack.c.l.b16 %v2565
    %v2630 = vunpack.c.l.b16 %v2566
    %v2631 = vunpack.c.l.b16 %v2567
    %v2632 = vunpack.c.l.b16 %v2568
    %v2633 = vunpack.c.l.b16 %v2569
    %v2634 = vunpack.c.l.b16 %v2570
    %v2635 = vunpack.c.l.b16 %v2571
    %v2636 = vunpack.c.l.b16 %v2572
    %v2637 = vunpack.c.l.b16 %v2573
    %v2638 = vunpack.c.l.b16 %v2574
    %v2639 = vunpack.c.l.b16 %v2575
    %v2640 = vunpack.c.l.b16 %v2576
    %v2641 = vunpack.c.l.b16 %v2577
    %v2642 = vunpack.c.l.b16 %v2578
    %v2643 = vunpack.c.l.b16 %v2579
    %v2644 = vunpack.c.l.b16 %v2580
    %v2645 = vunpack.c.l.b16 %v2581
    %v2646 = vunpack.c.l.b16 %v2582
    %v2647 = vunpack.c.l.b16 %v2583
    %v2648 = vunpack.c.l.b16 %v2584
    %v2649 = vunpack.c.l.b16 %v2585
    %v2650 = vunpack.c.l.b16 %v2586
    %v2651 = vunpack.c.l.b16 %v2587
    %v2652 = vpack.c.b16 %v2621, %v2620
    %v2653 = vpack.c.b16 %v2623, %v2622
    %v2654 = vpack.c.b16 %v2625, %v2624
    %v2655 = vpack.c.b16 %v2627, %v2626
    %v2656 = vpack.c.b16 %v2629, %v2628
    %v2657 = vpack.c.b16 %v2631, %v2630
    %v2658 = vpack.c.b16 %v2633, %v2632
    %v2659 = vpack.c.b16 %v2635, %v2634
    %v2660 = vpack.c.b16 %v2637, %v2636
    %v2661 = vpack.c.b16 %v2639, %v2638
    %v2662 = vpack.c.b16 %v2641, %v2640
    %v2663 = vpack.c.b16 %v2643, %v2642
    %v2664 = vpack.c.b16 %v2645, %v2644
    %v2665 = vpack.c.b16 %v2647, %v2646
    %v2666 = vpack.c.b16 %v2649, %v2648
    %v2667 = vpack.c.b16 %v2651, %v2650
    %2684 = vmatpush.bf16.msra.mxu0 %v2659
    %2685 = vmatpush.bf16.msra.mxu0 %v2658
    %2686 = vmatpush.bf16.msra.mxu0 %v2657
    %2687 = vmatpush.bf16.msra.mxu0 %v2656
    %2688 = vmatpush.bf16.msra.mxu0 %v2655
    %2689 = vmatpush.bf16.msra.mxu0 %v2654
    %2690 = vmatpush.bf16.msra.mxu0 %v2653
    %2691 = vmatpush.bf16.msra.mxu0 %v2652
    %2692 = vmatmul.bf16.gmra.mxu0 %v2165
    %v2693 = vpop.f32.mrf.mxu0
    %v2694 = vadd.f32 0.0, %v2693
    %v2695 = vpop.f32.mrf.mxu0
    %v2696 = vadd.f32 0.0, %v2695
    %2697 = vmatmul.bf16.gmra.mxu0 %v2167
    %v2698 = vpop.f32.mrf.mxu0
    %v2699 = vadd.f32 0.0, %v2698
    %v2700 = vpop.f32.mrf.mxu0
    %v2701 = vadd.f32 0.0, %v2700
    %2702 = vmatmul.bf16.gmra.mxu0 %v2169
    %v2703 = vpop.f32.mrf.mxu0
    %v2704 = vadd.f32 0.0, %v2703
    %v2705 = vpop.f32.mrf.mxu0
    %v2706 = vadd.f32 0.0, %v2705
    %2707 = vmatmul.bf16.gmra.mxu0 %v2171
    %v2708 = vpop.f32.mrf.mxu0
    %v2709 = vadd.f32 0.0, %v2708
    %v2710 = vpop.f32.mrf.mxu0
    %v2711 = vadd.f32 0.0, %v2710
    %2712 = vdwg.mxu0
    %2713 = vmatpush.bf16.msra.mxu0 %v2667
    %2714 = vmatpush.bf16.msra.mxu0 %v2666
    %2715 = vmatpush.bf16.msra.mxu0 %v2665
    %2716 = vmatpush.bf16.msra.mxu0 %v2664
    %2717 = vmatpush.bf16.msra.mxu0 %v2663
    %2718 = vmatpush.bf16.msra.mxu0 %v2662
    %2719 = vmatpush.bf16.msra.mxu0 %v2661
    %2720 = vmatpush.bf16.msra.mxu0 %v2660
    %2721 = vmatmul.bf16.gmra.mxu0 %v2166
    %v2722 = vpop.f32.mrf.mxu0
    %v2723 = vadd.f32 %v2694, %v2722
    %v2724 = vpop.f32.mrf.mxu0
    %v2725 = vadd.f32 %v2696, %v2724
    %2726 = vmatmul.bf16.gmra.mxu0 %v2168
    %v2727 = vpop.f32.mrf.mxu0
    %v2728 = vadd.f32 %v2699, %v2727
    %v2729 = vpop.f32.mrf.mxu0
    %v2730 = vadd.f32 %v2701, %v2729
    %2731 = vmatmul.bf16.gmra.mxu0 %v2170
    %v2732 = vpop.f32.mrf.mxu0
    %v2733 = vadd.f32 %v2704, %v2732
    %v2734 = vpop.f32.mrf.mxu0
    %v2735 = vadd.f32 %v2706, %v2734
    %2736 = vmatmul.bf16.gmra.mxu0 %v2172
    %v2737 = vpop.f32.mrf.mxu0
    %v2738 = vadd.f32 %v2709, %v2737
    %v2739 = vpop.f32.mrf.mxu0
    %v2740 = vadd.f32 %v2711, %v2739
    %2741 = vdwg.mxu0
    %v2742 = vmax.f32 %v2547, %v2723
    %v2743 = vmax.f32 %v2548, %v2725
    %v2744 = vmax.f32 %v2549, %v2728
    %v2745 = vmax.f32 %v2550, %v2730
    %v2746 = vmax.f32 %v2551, %v2733
    %v2747 = vmax.f32 %v2552, %v2735
    %v2748 = vmax.f32 %v2553, %v2738
    %v2749 = vmax.f32 %v2554, %v2740
    %v2750 = vpack.c.bf16 %v2743, %v2742
    %v2751 = vpack.c.bf16 %v2745, %v2744
    %v2752 = vpack.c.bf16 %v2747, %v2746
    %v2753 = vpack.c.bf16 %v2749, %v2748
    %s2754 = scalar_lea.vmem [#allocation2], 768
    %v2755 = vld [vmem:[%s2754] sm:$0xf]
    %v2756 = vld [vmem:[%s2754 + $0x8] sm:$0xf]
    %v2757 = vld [vmem:[%s2754 + $0x10] sm:$0xf]
    %v2758 = vld [vmem:[%s2754 + $0x18] sm:$0xf]
    %v2763 = vunpack.c.l.b16 %v2755
    %v2764 = vunpack.c.l.b16 %v2756
    %v2765 = vunpack.c.l.b16 %v2757
    %v2766 = vunpack.c.l.b16 %v2758
    %v2767 = vpack.c.b16 %v2764, %v2763
    %v2768 = vpack.c.b16 %v2766, %v2765
    %v2770 = vsel %vm1409, %v2767, 0
    %v2773 = vsel %vm1409, %v2768, 0
    %2775 = vmatpush.bf16.msra.mxu0 0
    %2776 = vmatpush.bf16.msra.mxu0 0
    %2777 = vmatpush.bf16.msra.mxu0 0
    %2778 = vmatpush.bf16.msra.mxu0 0
    %2779 = vmatpush.bf16.msra.mxu0 %v2753
    %2780 = vmatpush.bf16.msra.mxu0 %v2752
    %2781 = vmatpush.bf16.msra.mxu0 %v2751
    %2782 = vmatpush.bf16.msra.mxu0 %v2750
    %2783 = vmatmul.bf16.gmra.mxu0 %v2770
    %v2784 = vpop.f32.mrf.mxu0
    %v2785 = vadd.f32 0.0, %v2784
    %v2786 = vpop.f32.mrf.mxu0
    %v2787 = vadd.f32 0.0, %v2786
    %2788 = vmatmul.bf16.gmra.mxu0 %v2773
    %v2789 = vpop.f32.mrf.mxu0
    %v2790 = vadd.f32 0.0, %v2789
    %v2791 = vpop.f32.mrf.mxu0
    %v2792 = vadd.f32 0.0, %v2791
    %2793 = vdwg.mxu0
    %s2794 = scalar_lea.vmem [#allocation2], 896
    %v2795 = vld [vmem:[%s2794] sm:$0xf]
    %v2796 = vld [vmem:[%s2794 + $0x8] sm:$0xf]
    %v2797 = vld [vmem:[%s2794 + $0x10] sm:$0xf]
    %v2798 = vld [vmem:[%s2794 + $0x18] sm:$0xf]
    %v2803 = vunpack.c.l.b16 %v2795
    %v2804 = vunpack.c.l.b16 %v2796
    %v2805 = vunpack.c.l.b16 %v2797
    %v2806 = vunpack.c.l.b16 %v2798
    %v2807 = vpack.c.b16 %v2804, %v2803
    %v2808 = vpack.c.b16 %v2806, %v2805
    %v2810 = vsel %vm1409, %v2807, 0
    %v2813 = vsel %vm1409, %v2808, 0
    %2815 = vmatpush.bf16.msra.mxu0 0
    %2816 = vmatpush.bf16.msra.mxu0 0
    %2817 = vmatpush.bf16.msra.mxu0 0
    %2818 = vmatpush.bf16.msra.mxu0 0
    %2819 = vmatpush.bf16.msra.mxu0 %v2753
    %2820 = vmatpush.bf16.msra.mxu0 %v2752
    %2821 = vmatpush.bf16.msra.mxu0 %v2751
    %2822 = vmatpush.bf16.msra.mxu0 %v2750
    %2823 = vmatmul.bf16.gmra.mxu0 %v2810
    %v2824 = vpop.f32.mrf.mxu0
    %v2825 = vadd.f32 0.0, %v2824
    %v2826 = vpop.f32.mrf.mxu0
    %v2827 = vadd.f32 0.0, %v2826
    %2828 = vmatmul.bf16.gmra.mxu0 %v2813
    %v2829 = vpop.f32.mrf.mxu0
    %v2830 = vadd.f32 0.0, %v2829
    %v2831 = vpop.f32.mrf.mxu0
    %v2832 = vadd.f32 0.0, %v2831
    %2833 = vdwg.mxu0
    %s2834 = scalar_lea.vmem [#allocation2], 1024
    %v2835 = vld [vmem:[%s2834] sm:$0xf]
    %v2836 = vld [vmem:[%s2834 + $0x8] sm:$0xf]
    %v2837 = vld [vmem:[%s2834 + $0x10] sm:$0xf]
    %v2838 = vld [vmem:[%s2834 + $0x18] sm:$0xf]
    %v2843 = vunpack.c.l.b16 %v2835
    %v2844 = vunpack.c.l.b16 %v2836
    %v2845 = vunpack.c.l.b16 %v2837
    %v2846 = vunpack.c.l.b16 %v2838
    %v2847 = vpack.c.b16 %v2844, %v2843
    %v2848 = vpack.c.b16 %v2846, %v2845
    %v2850 = vsel %vm1409, %v2847, 0
    %v2853 = vsel %vm1409, %v2848, 0
    %2855 = vmatpush.bf16.msra.mxu0 0
    %2856 = vmatpush.bf16.msra.mxu0 0
    %2857 = vmatpush.bf16.msra.mxu0 0
    %2858 = vmatpush.bf16.msra.mxu0 0
    %2859 = vmatpush.bf16.msra.mxu0 %v2753
    %2860 = vmatpush.bf16.msra.mxu0 %v2752
    %2861 = vmatpush.bf16.msra.mxu0 %v2751
    %2862 = vmatpush.bf16.msra.mxu0 %v2750
    %2863 = vmatmul.bf16.gmra.mxu0 %v2850
    %v2864 = vpop.f32.mrf.mxu0
    %v2865 = vadd.f32 0.0, %v2864
    %v2866 = vpop.f32.mrf.mxu0
    %v2867 = vadd.f32 0.0, %v2866
    %2868 = vmatmul.bf16.gmra.mxu0 %v2853
    %v2869 = vpop.f32.mrf.mxu0
    %v2870 = vadd.f32 0.0, %v2869
    %v2871 = vpop.f32.mrf.mxu0
    %v2872 = vadd.f32 0.0, %v2871
    %2873 = vdwg.mxu0
    %v2874 = vpack.c.bf16 %v2787, %v2785
    %v2875 = vpack.c.bf16 %v2827, %v2825
    %v2876 = vpack.c.bf16 %v2867, %v2865
    %v2877 = vpack.c.bf16 %v2792, %v2790
    %v2878 = vpack.c.bf16 %v2832, %v2830
    %v2879 = vpack.c.bf16 %v2872, %v2870
    %s2880 = scalar_lea.vmem [#allocation4], 1536
    %v2881 = vld [vmem:[%s2880] sm:$0xff]
    %v2882 = vld [vmem:[%s2880 + $0x8] sm:$0xff]
    %v2883 = vld [vmem:[%s2880 + $0x10] sm:$0xff]
    %v2884 = vld [vmem:[%s2880 + $0x18] sm:$0xff]
    %v2885 = vld [vmem:[%s2880 + $0x20] sm:$0xff]
    %v2886 = vld [vmem:[%s2880 + $0x28] sm:$0xff]
    %v2887 = vld [vmem:[%s2880 + $0x30] sm:$0xff]
    %v2888 = vld [vmem:[%s2880 + $0x38] sm:$0xff]
    %v2889 = vld [vmem:[%s2880 + $0x40] sm:$0xff]
    %v2890 = vld [vmem:[%s2880 + $0x48] sm:$0xff]
    %v2891 = vld [vmem:[%s2880 + $0x50] sm:$0xff]
    %v2892 = vld [vmem:[%s2880 + $0x58] sm:$0xff]
    %v2893 = vld [vmem:[%s2880 + $0x60] sm:$0xff]
    %v2894 = vld [vmem:[%s2880 + $0x68] sm:$0xff]
    %v2895 = vld [vmem:[%s2880 + $0x70] sm:$0xff]
    %v2896 = vld [vmem:[%s2880 + $0x78] sm:$0xff]
    %v2897 = vld [vmem:[%s2880 + $0x80] sm:$0xff]
    %v2898 = vld [vmem:[%s2880 + $0x88] sm:$0xff]
    %v2899 = vld [vmem:[%s2880 + $0x90] sm:$0xff]
    %v2900 = vld [vmem:[%s2880 + $0x98] sm:$0xff]
    %v2901 = vld [vmem:[%s2880 + $0xa0] sm:$0xff]
    %v2902 = vld [vmem:[%s2880 + $0xa8] sm:$0xff]
    %v2903 = vld [vmem:[%s2880 + $0xb0] sm:$0xff]
    %v2904 = vld [vmem:[%s2880 + $0xb8] sm:$0xff]
    %v2905 = vld [vmem:[%s2880 + $0xc0] sm:$0xff]
    %v2906 = vld [vmem:[%s2880 + $0xc8] sm:$0xff]
    %v2907 = vld [vmem:[%s2880 + $0xd0] sm:$0xff]
    %v2908 = vld [vmem:[%s2880 + $0xd8] sm:$0xff]
    %v2909 = vld [vmem:[%s2880 + $0xe0] sm:$0xff]
    %v2910 = vld [vmem:[%s2880 + $0xe8] sm:$0xff]
    %v2911 = vld [vmem:[%s2880 + $0xf0] sm:$0xff]
    %v2912 = vld [vmem:[%s2880 + $0xf8] sm:$0xff]
    %v2913 = vld [vmem:[%s2880 + $0x100] sm:$0xff]
    %v2914 = vld [vmem:[%s2880 + $0x108] sm:$0xff]
    %v2915 = vld [vmem:[%s2880 + $0x110] sm:$0xff]
    %v2916 = vld [vmem:[%s2880 + $0x118] sm:$0xff]
    %v2917 = vld [vmem:[%s2880 + $0x120] sm:$0xff]
    %v2918 = vld [vmem:[%s2880 + $0x128] sm:$0xff]
    %v2919 = vld [vmem:[%s2880 + $0x130] sm:$0xff]
    %v2920 = vld [vmem:[%s2880 + $0x138] sm:$0xff]
    %v2921 = vld [vmem:[%s2880 + $0x140] sm:$0xff]
    %v2922 = vld [vmem:[%s2880 + $0x148] sm:$0xff]
    %v2923 = vld [vmem:[%s2880 + $0x150] sm:$0xff]
    %v2924 = vld [vmem:[%s2880 + $0x158] sm:$0xff]
    %v2925 = vld [vmem:[%s2880 + $0x160] sm:$0xff]
    %v2926 = vld [vmem:[%s2880 + $0x168] sm:$0xff]
    %v2927 = vld [vmem:[%s2880 + $0x170] sm:$0xff]
    %v2928 = vld [vmem:[%s2880 + $0x178] sm:$0xff]
    %s2929 = scalar_lea.vmem [#allocation6], 2
    %v2930 = vld [vmem:[%s2929] sm:$0x3]
    %v2932 = vperm.slane %v2930, 0
    %v2933 = vperm.slane %v2930, 1
    %v2984 = vunpack.c.l.b16 %v2881
    %v2985 = vunpack.c.h.b16 %v2881
    %v2986 = vunpack.c.l.b16 %v2882
    %v2987 = vunpack.c.h.b16 %v2882
    %v2988 = vunpack.c.l.b16 %v2883
    %v2989 = vunpack.c.h.b16 %v2883
    %v2990 = vunpack.c.l.b16 %v2884
    %v2991 = vunpack.c.h.b16 %v2884
    %v2992 = vunpack.c.l.b16 %v2885
    %v2993 = vunpack.c.h.b16 %v2885
    %v2994 = vunpack.c.l.b16 %v2886
    %v2995 = vunpack.c.h.b16 %v2886
    %v2996 = vunpack.c.l.b16 %v2887
    %v2997 = vunpack.c.h.b16 %v2887
    %v2998 = vunpack.c.l.b16 %v2888
    %v2999 = vunpack.c.h.b16 %v2888
    %v3000 = vunpack.c.l.b16 %v2889
    %v3001 = vunpack.c.h.b16 %v2889
    %v3002 = vunpack.c.l.b16 %v2890
    %v3003 = vunpack.c.h.b16 %v2890
    %v3004 = vunpack.c.l.b16 %v2891
    %v3005 = vunpack.c.h.b16 %v2891
    %v3006 = vunpack.c.l.b16 %v2892
    %v3007 = vunpack.c.h.b16 %v2892
    %v3008 = vunpack.c.l.b16 %v2893
    %v3009 = vunpack.c.h.b16 %v2893
    %v3010 = vunpack.c.l.b16 %v2894
    %v3011 = vunpack.c.h.b16 %v2894
    %v3012 = vunpack.c.l.b16 %v2895
    %v3013 = vunpack.c.h.b16 %v2895
    %v3014 = vunpack.c.l.b16 %v2896
    %v3015 = vunpack.c.h.b16 %v2896
    %v3016 = vunpack.c.l.b16 %v2897
    %v3017 = vunpack.c.h.b16 %v2897
    %v3018 = vunpack.c.l.b16 %v2898
    %v3019 = vunpack.c.h.b16 %v2898
    %v3020 = vunpack.c.l.b16 %v2899
    %v3021 = vunpack.c.h.b16 %v2899
    %v3022 = vunpack.c.l.b16 %v2900
    %v3023 = vunpack.c.h.b16 %v2900
    %v3024 = vunpack.c.l.b16 %v2901
    %v3025 = vunpack.c.h.b16 %v2901
    %v3026 = vunpack.c.l.b16 %v2902
    %v3027 = vunpack.c.h.b16 %v2902
    %v3028 = vunpack.c.l.b16 %v2903
    %v3029 = vunpack.c.h.b16 %v2903
    %v3030 = vunpack.c.l.b16 %v2904
    %v3031 = vunpack.c.h.b16 %v2904
    %v3032 = vunpack.c.l.b16 %v2905
    %v3033 = vunpack.c.h.b16 %v2905
    %v3034 = vunpack.c.l.b16 %v2906
    %v3035 = vunpack.c.h.b16 %v2906
    %v3036 = vunpack.c.l.b16 %v2907
    %v3037 = vunpack.c.h.b16 %v2907
    %v3038 = vunpack.c.l.b16 %v2908
    %v3039 = vunpack.c.h.b16 %v2908
    %v3040 = vunpack.c.l.b16 %v2909
    %v3041 = vunpack.c.h.b16 %v2909
    %v3042 = vunpack.c.l.b16 %v2910
    %v3043 = vunpack.c.h.b16 %v2910
    %v3044 = vunpack.c.l.b16 %v2911
    %v3045 = vunpack.c.h.b16 %v2911
    %v3046 = vunpack.c.l.b16 %v2912
    %v3047 = vunpack.c.h.b16 %v2912
    %v3048 = vunpack.c.l.b16 %v2913
    %v3049 = vunpack.c.h.b16 %v2913
    %v3050 = vunpack.c.l.b16 %v2914
    %v3051 = vunpack.c.h.b16 %v2914
    %v3052 = vunpack.c.l.b16 %v2915
    %v3053 = vunpack.c.h.b16 %v2915
    %v3054 = vunpack.c.l.b16 %v2916
    %v3055 = vunpack.c.h.b16 %v2916
    %v3056 = vunpack.c.l.b16 %v2917
    %v3057 = vunpack.c.h.b16 %v2917
    %v3058 = vunpack.c.l.b16 %v2918
    %v3059 = vunpack.c.h.b16 %v2918
    %v3060 = vunpack.c.l.b16 %v2919
    %v3061 = vunpack.c.h.b16 %v2919
    %v3062 = vunpack.c.l.b16 %v2920
    %v3063 = vunpack.c.h.b16 %v2920
    %v3064 = vunpack.c.l.b16 %v2921
    %v3065 = vunpack.c.h.b16 %v2921
    %v3066 = vunpack.c.l.b16 %v2922
    %v3067 = vunpack.c.h.b16 %v2922
    %v3068 = vunpack.c.l.b16 %v2923
    %v3069 = vunpack.c.h.b16 %v2923
    %v3070 = vunpack.c.l.b16 %v2924
    %v3071 = vunpack.c.h.b16 %v2924
    %v3072 = vunpack.c.l.b16 %v2925
    %v3073 = vunpack.c.h.b16 %v2925
    %v3074 = vunpack.c.l.b16 %v2926
    %v3075 = vunpack.c.h.b16 %v2926
    %v3076 = vunpack.c.l.b16 %v2927
    %v3077 = vunpack.c.h.b16 %v2927
    %v3078 = vunpack.c.l.b16 %v2928
    %v3079 = vunpack.c.h.b16 %v2928
    %v3080 = vpack.c.b16 %v2986, %v2984
    %v3081 = vpack.c.b16 %v2987, %v2985
    %v3082 = vpack.c.b16 %v2990, %v2988
    %v3083 = vpack.c.b16 %v2991, %v2989
    %v3084 = vpack.c.b16 %v2994, %v2992
    %v3085 = vpack.c.b16 %v2995, %v2993
    %v3086 = vpack.c.b16 %v2998, %v2996
    %v3087 = vpack.c.b16 %v2999, %v2997
    %v3088 = vpack.c.b16 %v3002, %v3000
    %v3089 = vpack.c.b16 %v3003, %v3001
    %v3090 = vpack.c.b16 %v3006, %v3004
    %v3091 = vpack.c.b16 %v3007, %v3005
    %v3092 = vpack.c.b16 %v3010, %v3008
    %v3093 = vpack.c.b16 %v3011, %v3009
    %v3094 = vpack.c.b16 %v3014, %v3012
    %v3095 = vpack.c.b16 %v3015, %v3013
    %v3096 = vpack.c.b16 %v3018, %v3016
    %v3097 = vpack.c.b16 %v3019, %v3017
    %v3098 = vpack.c.b16 %v3022, %v3020
    %v3099 = vpack.c.b16 %v3023, %v3021
    %v3100 = vpack.c.b16 %v3026, %v3024
    %v3101 = vpack.c.b16 %v3027, %v3025
    %v3102 = vpack.c.b16 %v3030, %v3028
    %v3103 = vpack.c.b16 %v3031, %v3029
    %v3104 = vpack.c.b16 %v3034, %v3032
    %v3105 = vpack.c.b16 %v3035, %v3033
    %v3106 = vpack.c.b16 %v3038, %v3036
    %v3107 = vpack.c.b16 %v3039, %v3037
    %v3108 = vpack.c.b16 %v3042, %v3040
    %v3109 = vpack.c.b16 %v3043, %v3041
    %v3110 = vpack.c.b16 %v3046, %v3044
    %v3111 = vpack.c.b16 %v3047, %v3045
    %v3112 = vpack.c.b16 %v3050, %v3048
    %v3113 = vpack.c.b16 %v3051, %v3049
    %v3114 = vpack.c.b16 %v3054, %v3052
    %v3115 = vpack.c.b16 %v3055, %v3053
    %v3116 = vpack.c.b16 %v3058, %v3056
    %v3117 = vpack.c.b16 %v3059, %v3057
    %v3118 = vpack.c.b16 %v3062, %v3060
    %v3119 = vpack.c.b16 %v3063, %v3061
    %v3120 = vpack.c.b16 %v3066, %v3064
    %v3121 = vpack.c.b16 %v3067, %v3065
    %v3122 = vpack.c.b16 %v3070, %v3068
    %v3123 = vpack.c.b16 %v3071, %v3069
    %v3124 = vpack.c.b16 %v3074, %v3072
    %v3125 = vpack.c.b16 %v3075, %v3073
    %v3126 = vpack.c.b16 %v3078, %v3076
    %v3127 = vpack.c.b16 %v3079, %v3077
    %3176 = vmatpush.bf16.msra.mxu0 %v3094
    %3177 = vmatpush.bf16.msra.mxu0 %v3092
    %3178 = vmatpush.bf16.msra.mxu0 %v3090
    %3179 = vmatpush.bf16.msra.mxu0 %v3088
    %3180 = vmatpush.bf16.msra.mxu0 %v3086
    %3181 = vmatpush.bf16.msra.mxu0 %v3084
    %3182 = vmatpush.bf16.msra.mxu0 %v3082
    %3183 = vmatpush.bf16.msra.mxu0 %v3080
    %3184 = vmatmul.bf16.gmra.mxu0 %v2874
    %v3185 = vpop.f32.mrf.mxu0
    %v3186 = vadd.f32 %v2932, %v3185
    %v3187 = vpop.f32.mrf.mxu0
    %v3188 = vadd.f32 %v2932, %v3187
    %3189 = vmatmul.bf16.gmra.mxu0 %v2877
    %v3190 = vpop.f32.mrf.mxu0
    %v3191 = vadd.f32 %v2932, %v3190
    %v3192 = vpop.f32.mrf.mxu0
    %v3193 = vadd.f32 %v2932, %v3192
    %3194 = vdwg.mxu0
    %3195 = vmatpush.bf16.msra.mxu0 %v3110
    %3196 = vmatpush.bf16.msra.mxu0 %v3108
    %3197 = vmatpush.bf16.msra.mxu0 %v3106
    %3198 = vmatpush.bf16.msra.mxu0 %v3104
    %3199 = vmatpush.bf16.msra.mxu0 %v3102
    %3200 = vmatpush.bf16.msra.mxu0 %v3100
    %3201 = vmatpush.bf16.msra.mxu0 %v3098
    %3202 = vmatpush.bf16.msra.mxu0 %v3096
    %3203 = vmatmul.bf16.gmra.mxu0 %v2875
    %v3204 = vpop.f32.mrf.mxu0
    %v3205 = vadd.f32 %v3186, %v3204
    %v3206 = vpop.f32.mrf.mxu0
    %v3207 = vadd.f32 %v3188, %v3206
    %3208 = vmatmul.bf16.gmra.mxu0 %v2878
    %v3209 = vpop.f32.mrf.mxu0
    %v3210 = vadd.f32 %v3191, %v3209
    %v3211 = vpop.f32.mrf.mxu0
    %v3212 = vadd.f32 %v3193, %v3211
    %3213 = vdwg.mxu0
    %3214 = vmatpush.bf16.msra.mxu0 %v3126
    %3215 = vmatpush.bf16.msra.mxu0 %v3124
    %3216 = vmatpush.bf16.msra.mxu0 %v3122
    %3217 = vmatpush.bf16.msra.mxu0 %v3120
    %3218 = vmatpush.bf16.msra.mxu0 %v3118
    %3219 = vmatpush.bf16.msra.mxu0 %v3116
    %3220 = vmatpush.bf16.msra.mxu0 %v3114
    %3221 = vmatpush.bf16.msra.mxu0 %v3112
    %3222 = vmatmul.bf16.gmra.mxu0 %v2876
    %v3223 = vpop.f32.mrf.mxu0
    %v3224 = vadd.f32 %v3205, %v3223
    %v3225 = vpop.f32.mrf.mxu0
    %v3226 = vadd.f32 %v3207, %v3225
    %3227 = vmatmul.bf16.gmra.mxu0 %v2879
    %v3228 = vpop.f32.mrf.mxu0
    %v3229 = vadd.f32 %v3210, %v3228
    %v3230 = vpop.f32.mrf.mxu0
    %v3231 = vadd.f32 %v3212, %v3230
    %3232 = vdwg.mxu0
    %3233 = vmatpush.bf16.msra.mxu0 %v3095
    %3234 = vmatpush.bf16.msra.mxu0 %v3093
    %3235 = vmatpush.bf16.msra.mxu0 %v3091
    %3236 = vmatpush.bf16.msra.mxu0 %v3089
    %3237 = vmatpush.bf16.msra.mxu0 %v3087
    %3238 = vmatpush.bf16.msra.mxu0 %v3085
    %3239 = vmatpush.bf16.msra.mxu0 %v3083
    %3240 = vmatpush.bf16.msra.mxu0 %v3081
    %3241 = vmatmul.bf16.gmra.mxu0 %v2874
    %v3242 = vpop.f32.mrf.mxu0
    %v3243 = vadd.f32 %v2933, %v3242
    %v3244 = vpop.f32.mrf.mxu0
    %v3245 = vadd.f32 %v2933, %v3244
    %3246 = vmatmul.bf16.gmra.mxu0 %v2877
    %v3247 = vpop.f32.mrf.mxu0
    %v3248 = vadd.f32 %v2933, %v3247
    %v3249 = vpop.f32.mrf.mxu0
    %v3250 = vadd.f32 %v2933, %v3249
    %3251 = vdwg.mxu0
    %3252 = vmatpush.bf16.msra.mxu0 %v3111
    %3253 = vmatpush.bf16.msra.mxu0 %v3109
    %3254 = vmatpush.bf16.msra.mxu0 %v3107
    %3255 = vmatpush.bf16.msra.mxu0 %v3105
    %3256 = vmatpush.bf16.msra.mxu0 %v3103
    %3257 = vmatpush.bf16.msra.mxu0 %v3101
    %3258 = vmatpush.bf16.msra.mxu0 %v3099
    %3259 = vmatpush.bf16.msra.mxu0 %v3097
    %3260 = vmatmul.bf16.gmra.mxu0 %v2875
    %v3261 = vpop.f32.mrf.mxu0
    %v3262 = vadd.f32 %v3243, %v3261
    %v3263 = vpop.f32.mrf.mxu0
    %v3264 = vadd.f32 %v3245, %v3263
    %3265 = vmatmul.bf16.gmra.mxu0 %v2878
    %v3266 = vpop.f32.mrf.mxu0
    %v3267 = vadd.f32 %v3248, %v3266
    %v3268 = vpop.f32.mrf.mxu0
    %v3269 = vadd.f32 %v3250, %v3268
    %3270 = vdwg.mxu0
    %3271 = vmatpush.bf16.msra.mxu0 %v3127
    %3272 = vmatpush.bf16.msra.mxu0 %v3125
    %3273 = vmatpush.bf16.msra.mxu0 %v3123
    %3274 = vmatpush.bf16.msra.mxu0 %v3121
    %3275 = vmatpush.bf16.msra.mxu0 %v3119
    %3276 = vmatpush.bf16.msra.mxu0 %v3117
    %3277 = vmatpush.bf16.msra.mxu0 %v3115
    %3278 = vmatpush.bf16.msra.mxu0 %v3113
    %3279 = vmatmul.bf16.gmra.mxu0 %v2876
    %v3280 = vpop.f32.mrf.mxu0
    %v3281 = vadd.f32 %v3262, %v3280
    %v3282 = vpop.f32.mrf.mxu0
    %v3283 = vadd.f32 %v3264, %v3282
    %3284 = vmatmul.bf16.gmra.mxu0 %v2879
    %v3285 = vpop.f32.mrf.mxu0
    %v3286 = vadd.f32 %v3267, %v3285
    %v3287 = vpop.f32.mrf.mxu0
    %v3288 = vadd.f32 %v3269, %v3287
    %3289 = vdwg.mxu0
    %v3290 = vmax.f32 %v3224, 0.0
    %v3291 = vmax.f32 %v3226, 0.0
    %v3292 = vmax.f32 %v3229, 0.0
    %v3293 = vmax.f32 %v3231, 0.0
    %v3294 = vlaneseq
    %v3295 = vshrl.u32 %v3294, 7
    %v3296 = vadd.s32 %v3295, 8
    %v3297 = vadd.s32 %v3295, 16
    %v3298 = vadd.s32 %v3295, 24
    %vm3299 = vcmp.lt.s32.totalorder %v3295, 0
    %v3300 = vsub.s32 0, %v3295
    %v3301 = vsel %vm3299, %v3300, %v3295
    %v3302 = vshrl.u32 %v3301, 3
    %v3303 = vand.u32 %v3301, 7
    %v3304 = vsub.s32 0, %v3303
    %v3305 = vsel %vm3299, %v3304, %v3303
    %vm3306 = vcmp.lt.s32.totalorder %v3296, 0
    %v3307 = vsub.s32 0, %v3296
    %v3308 = vsel %vm3306, %v3307, %v3296
    %v3309 = vshrl.u32 %v3308, 3
    %v3310 = vand.u32 %v3308, 7
    %v3311 = vsub.s32 0, %v3310
    %v3312 = vsel %vm3306, %v3311, %v3310
    %vm3313 = vcmp.lt.s32.totalorder %v3297, 0
    %v3314 = vsub.s32 0, %v3297
    %v3315 = vsel %vm3313, %v3314, %v3297
    %v3316 = vshrl.u32 %v3315, 3
    %v3317 = vand.u32 %v3315, 7
    %v3318 = vsub.s32 0, %v3317
    %v3319 = vsel %vm3313, %v3318, %v3317
    %vm3320 = vcmp.lt.s32.totalorder %v3298, 0
    %v3321 = vsub.s32 0, %v3298
    %v3322 = vsel %vm3320, %v3321, %v3298
    %v3323 = vshrl.u32 %v3322, 3
    %v3324 = vand.u32 %v3322, 7
    %v3325 = vsub.s32 0, %v3324
    %v3326 = vsel %vm3320, %v3325, %v3324
    %vm3327 = vcmp.ne.s32.totalorder %v3305, 0
    %vm3328 = vcmp.ne.s32.totalorder %v3312, 0
    %vm3329 = vcmp.ne.s32.totalorder %v3319, 0
    %vm3330 = vcmp.ne.s32.totalorder %v3326, 0
    %vm3331 = vcmp.lt.s32.totalorder %v3305, 0
    %vm3332 = vcmp.lt.s32.totalorder %v3312, 0
    %vm3333 = vcmp.lt.s32.totalorder %v3319, 0
    %vm3334 = vcmp.lt.s32.totalorder %v3326, 0
    %vm3335 = vmand %vm3331, %vm3327
    %vm3336 = vmand %vm3332, %vm3328
    %vm3337 = vmand %vm3333, %vm3329
    %vm3338 = vmand %vm3334, %vm3330
    %v3339 = vadd.s32 %v3305, 8
    %v3340 = vadd.s32 %v3312, 8
    %v3341 = vadd.s32 %v3319, 8
    %v3342 = vadd.s32 %v3326, 8
    %v3343 = vsel %vm3335, %v3339, %v3305
    %v3344 = vsel %vm3336, %v3340, %v3312
    %v3345 = vsel %vm3337, %v3341, %v3319
    %v3346 = vsel %vm3338, %v3342, %v3326
    %vm3347 = vcmp.eq.s32.totalorder %v3343, 0
    %vm3348 = vcmp.eq.s32.totalorder %v3344, 0
    %vm3349 = vcmp.eq.s32.totalorder %v3345, 0
    %vm3350 = vcmp.eq.s32.totalorder %v3346, 0
    %v3351 = vrot.slane %v3290, 7
    %v3352 = vrot.slane %v3291, 7
    %v3353 = vrot.slane %v3292, 7
    %v3354 = vrot.slane %v3293, 7
    %vm3355 = vcmp.lt.s32.totalorder %v3295, 1
    %v3356 = vsel %vm3355, %v3353, %v3354
    %v3357 = vsel %vm3355, %v3352, %v3353
    %v3358 = vsel %vm3355, %v3351, %v3352
    %v3359 = vsel %vm3355, %v3354, %v3351
    %v3360 = vsel %vm3347, 1, 0
    %v3361 = vsel %vm3348, 1, 0
    %v3362 = vsel %vm3349, 1, 0
    %v3363 = vsel %vm3350, 1, 0
    %vm3364 = vcmp.eq.s32.totalorder %v3360, 1
    %vm3365 = vcmp.eq.s32.totalorder %v3361, 1
    %vm3366 = vcmp.eq.s32.totalorder %v3362, 1
    %vm3367 = vcmp.eq.s32.totalorder %v3363, 1
    %v3368 = vsel %vm3364, 0.0, %v3359
    %v3369 = vsel %vm3365, 0.0, %v3358
    %v3370 = vsel %vm3366, 0.0, %v3357
    %v3371 = vsel %vm3367, 0.0, %v3356
    %vm3372 = vcmp.eq.s32.totalorder %v3343, 7
    %vm3373 = vcmp.eq.s32.totalorder %v3344, 7
    %vm3374 = vcmp.eq.s32.totalorder %v3345, 7
    %vm3375 = vcmp.eq.s32.totalorder %v3346, 7
    %v3376 = vrot.slane %v3290, 1
    %v3377 = vrot.slane %v3291, 1
    %v3378 = vrot.slane %v3292, 1
    %v3379 = vrot.slane %v3293, 1
    %vm3380 = vcmp.lt.s32.totalorder %v3295, 7
    %v3381 = vsel %vm3380, %v3378, %v3379
    %v3382 = vsel %vm3380, %v3377, %v3378
    %v3383 = vsel %vm3380, %v3376, %v3377
    %v3384 = vsel %vm3380, %v3379, %v3376
    %v3385 = vsel %vm3372, 1, 0
    %v3386 = vsel %vm3373, 1, 0
    %v3387 = vsel %vm3374, 1, 0
    %v3388 = vsel %vm3375, 1, 0
    %vm3389 = vcmp.eq.s32.totalorder %v3385, 1
    %vm3390 = vcmp.eq.s32.totalorder %v3386, 1
    %vm3391 = vcmp.eq.s32.totalorder %v3387, 1
    %vm3392 = vcmp.eq.s32.totalorder %v3388, 1
    %v3393 = vsel %vm3389, 0.0, %v3383
    %v3394 = vsel %vm3390, 0.0, %v3382
    %v3395 = vsel %vm3391, 0.0, %v3381
    %v3396 = vsel %vm3392, 0.0, %v3384
    %v3397 = vpack.c.bf16 %v3369, %v3368
    %v3398 = vpack.c.bf16 %v3291, %v3290
    %v3399 = vpack.c.bf16 %v3394, %v3393
    %v3400 = vpack.c.bf16 %v3371, %v3370
    %v3401 = vpack.c.bf16 %v3293, %v3292
    %v3402 = vpack.c.bf16 %v3396, %v3395
    %s3403 = scalar_lea.vmem [#allocation4], 1920
    %v3404 = vld [vmem:[%s3403] sm:$0xf]
    %v3405 = vld [vmem:[%s3403 + $0x8] sm:$0xf]
    %v3406 = vld [vmem:[%s3403 + $0x10] sm:$0xf]
    %v3407 = vld [vmem:[%s3403 + $0x18] sm:$0xf]
    %v3408 = vld [vmem:[%s3403 + $0x20] sm:$0xf]
    %v3409 = vld [vmem:[%s3403 + $0x28] sm:$0xf]
    %v3410 = vld [vmem:[%s3403 + $0x30] sm:$0xf]
    %v3411 = vld [vmem:[%s3403 + $0x38] sm:$0xf]
    %v3412 = vld [vmem:[%s3403 + $0x40] sm:$0xf]
    %v3413 = vld [vmem:[%s3403 + $0x48] sm:$0xf]
    %v3414 = vld [vmem:[%s3403 + $0x50] sm:$0xf]
    %v3415 = vld [vmem:[%s3403 + $0x58] sm:$0xf]
    %v3416 = vld [vmem:[%s3403 + $0x60] sm:$0xf]
    %v3417 = vld [vmem:[%s3403 + $0x68] sm:$0xf]
    %v3418 = vld [vmem:[%s3403 + $0x70] sm:$0xf]
    %v3419 = vld [vmem:[%s3403 + $0x78] sm:$0xf]
    %v3420 = vld [vmem:[%s3403 + $0x80] sm:$0xf]
    %v3421 = vld [vmem:[%s3403 + $0x88] sm:$0xf]
    %v3422 = vld [vmem:[%s3403 + $0x90] sm:$0xf]
    %v3423 = vld [vmem:[%s3403 + $0x98] sm:$0xf]
    %v3424 = vld [vmem:[%s3403 + $0xa0] sm:$0xf]
    %v3425 = vld [vmem:[%s3403 + $0xa8] sm:$0xf]
    %v3426 = vld [vmem:[%s3403 + $0xb0] sm:$0xf]
    %v3427 = vld [vmem:[%s3403 + $0xb8] sm:$0xf]
    %v3428 = vld [vmem:[%s3403 + $0xc0] sm:$0xf]
    %v3429 = vld [vmem:[%s3403 + $0xc8] sm:$0xf]
    %v3430 = vld [vmem:[%s3403 + $0xd0] sm:$0xf]
    %v3431 = vld [vmem:[%s3403 + $0xd8] sm:$0xf]
    %v3432 = vld [vmem:[%s3403 + $0xe0] sm:$0xf]
    %v3433 = vld [vmem:[%s3403 + $0xe8] sm:$0xf]
    %v3434 = vld [vmem:[%s3403 + $0xf0] sm:$0xf]
    %v3435 = vld [vmem:[%s3403 + $0xf8] sm:$0xf]
    %v3436 = vld [vmem:[%s3403 + $0x100] sm:$0xf]
    %v3437 = vld [vmem:[%s3403 + $0x108] sm:$0xf]
    %v3438 = vld [vmem:[%s3403 + $0x110] sm:$0xf]
    %v3439 = vld [vmem:[%s3403 + $0x118] sm:$0xf]
    %v3440 = vld [vmem:[%s3403 + $0x120] sm:$0xf]
    %v3441 = vld [vmem:[%s3403 + $0x128] sm:$0xf]
    %v3442 = vld [vmem:[%s3403 + $0x130] sm:$0xf]
    %v3443 = vld [vmem:[%s3403 + $0x138] sm:$0xf]
    %v3444 = vld [vmem:[%s3403 + $0x140] sm:$0xf]
    %v3445 = vld [vmem:[%s3403 + $0x148] sm:$0xf]
    %v3446 = vld [vmem:[%s3403 + $0x150] sm:$0xf]
    %v3447 = vld [vmem:[%s3403 + $0x158] sm:$0xf]
    %v3448 = vld [vmem:[%s3403 + $0x160] sm:$0xf]
    %v3449 = vld [vmem:[%s3403 + $0x168] sm:$0xf]
    %v3450 = vld [vmem:[%s3403 + $0x170] sm:$0xf]
    %v3451 = vld [vmem:[%s3403 + $0x178] sm:$0xf]
    %v3500 = vunpack.c.l.b16 %v3404
    %v3501 = vunpack.c.l.b16 %v3405
    %v3502 = vunpack.c.l.b16 %v3406
    %v3503 = vunpack.c.l.b16 %v3407
    %v3504 = vunpack.c.l.b16 %v3408
    %v3505 = vunpack.c.l.b16 %v3409
    %v3506 = vunpack.c.l.b16 %v3410
    %v3507 = vunpack.c.l.b16 %v3411
    %v3508 = vunpack.c.l.b16 %v3412
    %v3509 = vunpack.c.l.b16 %v3413
    %v3510 = vunpack.c.l.b16 %v3414
    %v3511 = vunpack.c.l.b16 %v3415
    %v3512 = vunpack.c.l.b16 %v3416
    %v3513 = vunpack.c.l.b16 %v3417
    %v3514 = vunpack.c.l.b16 %v3418
    %v3515 = vunpack.c.l.b16 %v3419
    %v3516 = vunpack.c.l.b16 %v3420
    %v3517 = vunpack.c.l.b16 %v3421
    %v3518 = vunpack.c.l.b16 %v3422
    %v3519 = vunpack.c.l.b16 %v3423
    %v3520 = vunpack.c.l.b16 %v3424
    %v3521 = vunpack.c.l.b16 %v3425
    %v3522 = vunpack.c.l.b16 %v3426
    %v3523 = vunpack.c.l.b16 %v3427
    %v3524 = vunpack.c.l.b16 %v3428
    %v3525 = vunpack.c.l.b16 %v3429
    %v3526 = vunpack.c.l.b16 %v3430
    %v3527 = vunpack.c.l.b16 %v3431
    %v3528 = vunpack.c.l.b16 %v3432
    %v3529 = vunpack.c.l.b16 %v3433
    %v3530 = vunpack.c.l.b16 %v3434
    %v3531 = vunpack.c.l.b16 %v3435
    %v3532 = vunpack.c.l.b16 %v3436
    %v3533 = vunpack.c.l.b16 %v3437
    %v3534 = vunpack.c.l.b16 %v3438
    %v3535 = vunpack.c.l.b16 %v3439
    %v3536 = vunpack.c.l.b16 %v3440
    %v3537 = vunpack.c.l.b16 %v3441
    %v3538 = vunpack.c.l.b16 %v3442
    %v3539 = vunpack.c.l.b16 %v3443
    %v3540 = vunpack.c.l.b16 %v3444
    %v3541 = vunpack.c.l.b16 %v3445
    %v3542 = vunpack.c.l.b16 %v3446
    %v3543 = vunpack.c.l.b16 %v3447
    %v3544 = vunpack.c.l.b16 %v3448
    %v3545 = vunpack.c.l.b16 %v3449
    %v3546 = vunpack.c.l.b16 %v3450
    %v3547 = vunpack.c.l.b16 %v3451
    %v3548 = vpack.c.b16 %v3501, %v3500
    %v3549 = vpack.c.b16 %v3503, %v3502
    %v3550 = vpack.c.b16 %v3505, %v3504
    %v3551 = vpack.c.b16 %v3507, %v3506
    %v3552 = vpack.c.b16 %v3509, %v3508
    %v3553 = vpack.c.b16 %v3511, %v3510
    %v3554 = vpack.c.b16 %v3513, %v3512
    %v3555 = vpack.c.b16 %v3515, %v3514
    %v3556 = vpack.c.b16 %v3517, %v3516
    %v3557 = vpack.c.b16 %v3519, %v3518
    %v3558 = vpack.c.b16 %v3521, %v3520
    %v3559 = vpack.c.b16 %v3523, %v3522
    %v3560 = vpack.c.b16 %v3525, %v3524
    %v3561 = vpack.c.b16 %v3527, %v3526
    %v3562 = vpack.c.b16 %v3529, %v3528
    %v3563 = vpack.c.b16 %v3531, %v3530
    %v3564 = vpack.c.b16 %v3533, %v3532
    %v3565 = vpack.c.b16 %v3535, %v3534
    %v3566 = vpack.c.b16 %v3537, %v3536
    %v3567 = vpack.c.b16 %v3539, %v3538
    %v3568 = vpack.c.b16 %v3541, %v3540
    %v3569 = vpack.c.b16 %v3543, %v3542
    %v3570 = vpack.c.b16 %v3545, %v3544
    %v3571 = vpack.c.b16 %v3547, %v3546
    %3596 = vmatpush.bf16.msra.mxu0 %v3555
    %3597 = vmatpush.bf16.msra.mxu0 %v3554
    %3598 = vmatpush.bf16.msra.mxu0 %v3553
    %3599 = vmatpush.bf16.msra.mxu0 %v3552
    %3600 = vmatpush.bf16.msra.mxu0 %v3551
    %3601 = vmatpush.bf16.msra.mxu0 %v3550
    %3602 = vmatpush.bf16.msra.mxu0 %v3549
    %3603 = vmatpush.bf16.msra.mxu0 %v3548
    %3604 = vmatmul.bf16.gmra.mxu0 %v3397
    %v3605 = vpop.f32.mrf.mxu0
    %v3606 = vadd.f32 %v3281, %v3605
    %v3607 = vpop.f32.mrf.mxu0
    %v3608 = vadd.f32 %v3283, %v3607
    %3609 = vmatmul.bf16.gmra.mxu0 %v3400
    %v3610 = vpop.f32.mrf.mxu0
    %v3611 = vadd.f32 %v3286, %v3610
    %v3612 = vpop.f32.mrf.mxu0
    %v3613 = vadd.f32 %v3288, %v3612
    %3614 = vdwg.mxu0
    %3615 = vmatpush.bf16.msra.mxu0 %v3563
    %3616 = vmatpush.bf16.msra.mxu0 %v3562
    %3617 = vmatpush.bf16.msra.mxu0 %v3561
    %3618 = vmatpush.bf16.msra.mxu0 %v3560
    %3619 = vmatpush.bf16.msra.mxu0 %v3559
    %3620 = vmatpush.bf16.msra.mxu0 %v3558
    %3621 = vmatpush.bf16.msra.mxu0 %v3557
    %3622 = vmatpush.bf16.msra.mxu0 %v3556
    %3623 = vmatmul.bf16.gmra.mxu0 %v3398
    %v3624 = vpop.f32.mrf.mxu0
    %v3625 = vadd.f32 %v3606, %v3624
    %v3626 = vpop.f32.mrf.mxu0
    %v3627 = vadd.f32 %v3608, %v3626
    %3628 = vmatmul.bf16.gmra.mxu0 %v3401
    %v3629 = vpop.f32.mrf.mxu0
    %v3630 = vadd.f32 %v3611, %v3629
    %v3631 = vpop.f32.mrf.mxu0
    %v3632 = vadd.f32 %v3613, %v3631
    %3633 = vdwg.mxu0
    %3634 = vmatpush.bf16.msra.mxu0 %v3571
    %3635 = vmatpush.bf16.msra.mxu0 %v3570
    %3636 = vmatpush.bf16.msra.mxu0 %v3569
    %3637 = vmatpush.bf16.msra.mxu0 %v3568
    %3638 = vmatpush.bf16.msra.mxu0 %v3567
    %3639 = vmatpush.bf16.msra.mxu0 %v3566
    %3640 = vmatpush.bf16.msra.mxu0 %v3565
    %3641 = vmatpush.bf16.msra.mxu0 %v3564
    %3642 = vmatmul.bf16.gmra.mxu0 %v3399
    %v3643 = vpop.f32.mrf.mxu0
    %v3644 = vadd.f32 %v3625, %v3643
    %v3645 = vpop.f32.mrf.mxu0
    %v3646 = vadd.f32 %v3627, %v3645
    %3647 = vmatmul.bf16.gmra.mxu0 %v3402
    %v3648 = vpop.f32.mrf.mxu0
    %v3649 = vadd.f32 %v3630, %v3648
    %v3650 = vpop.f32.mrf.mxu0
    %v3651 = vadd.f32 %v3632, %v3650
    %3652 = vdwg.mxu0
    %v3653 = vmax.f32 %v3644, 0.0
    %v3654 = vmax.f32 %v3646, 0.0
    %v3655 = vmax.f32 %v3649, 0.0
    %v3656 = vmax.f32 %v3651, 0.0
    %v3657 = vpack.c.bf16 %v3654, %v3653
    %v3658 = vpack.c.bf16 %v3656, %v3655
    %s3659 = scalar_lea.vmem [#allocation2], 1152
    %v3660 = vld [vmem:[%s3659] sm:$0xf]
    %v3661 = vld [vmem:[%s3659 + $0x8] sm:$0xf]
    %v3664 = vunpack.c.l.b16 %v3660
    %v3665 = vunpack.c.l.b16 %v3661
    %v3666 = vpack.c.b16 %v3665, %v3664
    %vm3667 = vcmask 261120
    %v3669 = vsel %vm3667, %v3666, 0
    %3671 = vmatpush.bf16.msra.mxu0 0
    %3672 = vmatpush.bf16.msra.mxu0 0
    %3673 = vmatpush.bf16.msra.mxu0 0
    %3674 = vmatpush.bf16.msra.mxu0 0
    %3675 = vmatpush.bf16.msra.mxu0 0
    %3676 = vmatpush.bf16.msra.mxu0 0
    %3677 = vmatpush.bf16.msra.mxu0 %v3658
    %3678 = vmatpush.bf16.msra.mxu0 %v3657
    %3679 = vmatmul.bf16.gmra.mxu0 %v3669
    %v3680 = vpop.f32.mrf.mxu0
    %v3681 = vadd.f32 0.0, %v3680
    %v3682 = vpop.f32.mrf.mxu0
    %v3683 = vadd.f32 0.0, %v3682
    %3684 = vdwg.mxu0
    %s3685 = scalar_lea.vmem [#allocation2], 1280
    %v3686 = vld [vmem:[%s3685] sm:$0xf]
    %v3687 = vld [vmem:[%s3685 + $0x8] sm:$0xf]
    %v3690 = vunpack.c.l.b16 %v3686
    %v3691 = vunpack.c.l.b16 %v3687
    %v3692 = vpack.c.b16 %v3691, %v3690
    %v3694 = vsel %vm3667, %v3692, 0
    %3696 = vmatpush.bf16.msra.mxu0 0
    %3697 = vmatpush.bf16.msra.mxu0 0
    %3698 = vmatpush.bf16.msra.mxu0 0
    %3699 = vmatpush.bf16.msra.mxu0 0
    %3700 = vmatpush.bf16.msra.mxu0 0
    %3701 = vmatpush.bf16.msra.mxu0 0
    %3702 = vmatpush.bf16.msra.mxu0 %v3658
    %3703 = vmatpush.bf16.msra.mxu0 %v3657
    %3704 = vmatmul.bf16.gmra.mxu0 %v3694
    %v3705 = vpop.f32.mrf.mxu0
    %v3706 = vadd.f32 0.0, %v3705
    %v3707 = vpop.f32.mrf.mxu0
    %v3708 = vadd.f32 0.0, %v3707
    %3709 = vdwg.mxu0
    %s3710 = scalar_lea.vmem [#allocation2], 1408
    %v3711 = vld [vmem:[%s3710] sm:$0xf]
    %v3712 = vld [vmem:[%s3710 + $0x8] sm:$0xf]
    %v3715 = vunpack.c.l.b16 %v3711
    %v3716 = vunpack.c.l.b16 %v3712
    %v3717 = vpack.c.b16 %v3716, %v3715
    %v3719 = vsel %vm3667, %v3717, 0
    %3721 = vmatpush.bf16.msra.mxu0 0
    %3722 = vmatpush.bf16.msra.mxu0 0
    %3723 = vmatpush.bf16.msra.mxu0 0
    %3724 = vmatpush.bf16.msra.mxu0 0
    %3725 = vmatpush.bf16.msra.mxu0 0
    %3726 = vmatpush.bf16.msra.mxu0 0
    %3727 = vmatpush.bf16.msra.mxu0 %v3658
    %3728 = vmatpush.bf16.msra.mxu0 %v3657
    %3729 = vmatmul.bf16.gmra.mxu0 %v3719
    %v3730 = vpop.f32.mrf.mxu0
    %v3731 = vadd.f32 0.0, %v3730
    %v3732 = vpop.f32.mrf.mxu0
    %v3733 = vadd.f32 0.0, %v3732
    %3734 = vdwg.mxu0
    %v3735 = vpack.c.bf16 %v3683, %v3681
    %v3736 = vpack.c.bf16 %v3708, %v3706
    %v3737 = vpack.c.bf16 %v3733, %v3731
    %s3738 = scalar_lea.vmem [#allocation4], 2304
    %v3739 = vld [vmem:[%s3738] sm:$0xf]
    %v3740 = vld [vmem:[%s3738 + $0x8] sm:$0xf]
    %v3741 = vld [vmem:[%s3738 + $0x10] sm:$0xf]
    %v3742 = vld [vmem:[%s3738 + $0x18] sm:$0xf]
    %v3743 = vld [vmem:[%s3738 + $0x20] sm:$0xf]
    %v3744 = vld [vmem:[%s3738 + $0x28] sm:$0xf]
    %v3745 = vld [vmem:[%s3738 + $0x30] sm:$0xf]
    %v3746 = vld [vmem:[%s3738 + $0x38] sm:$0xf]
    %v3747 = vld [vmem:[%s3738 + $0x40] sm:$0xf]
    %v3748 = vld [vmem:[%s3738 + $0x48] sm:$0xf]
    %v3749 = vld [vmem:[%s3738 + $0x50] sm:$0xf]
    %v3750 = vld [vmem:[%s3738 + $0x58] sm:$0xf]
    %v3751 = vld [vmem:[%s3738 + $0x60] sm:$0xf]
    %v3752 = vld [vmem:[%s3738 + $0x68] sm:$0xf]
    %v3753 = vld [vmem:[%s3738 + $0x70] sm:$0xf]
    %v3754 = vld [vmem:[%s3738 + $0x78] sm:$0xf]
    %v3755 = vld [vmem:[%s3738 + $0x80] sm:$0xf]
    %v3756 = vld [vmem:[%s3738 + $0x88] sm:$0xf]
    %v3757 = vld [vmem:[%s3738 + $0x90] sm:$0xf]
    %v3758 = vld [vmem:[%s3738 + $0x98] sm:$0xf]
    %v3759 = vld [vmem:[%s3738 + $0xa0] sm:$0xf]
    %v3760 = vld [vmem:[%s3738 + $0xa8] sm:$0xf]
    %v3761 = vld [vmem:[%s3738 + $0xb0] sm:$0xf]
    %v3762 = vld [vmem:[%s3738 + $0xb8] sm:$0xf]
    %v3763 = vld [vmem:[%s3738 + $0xc0] sm:$0xf]
    %v3764 = vld [vmem:[%s3738 + $0xc8] sm:$0xf]
    %v3765 = vld [vmem:[%s3738 + $0xd0] sm:$0xf]
    %v3766 = vld [vmem:[%s3738 + $0xd8] sm:$0xf]
    %v3767 = vld [vmem:[%s3738 + $0xe0] sm:$0xf]
    %v3768 = vld [vmem:[%s3738 + $0xe8] sm:$0xf]
    %v3769 = vld [vmem:[%s3738 + $0xf0] sm:$0xf]
    %v3770 = vld [vmem:[%s3738 + $0xf8] sm:$0xf]
    %v3771 = vld [vmem:[%s3738 + $0x100] sm:$0xf]
    %v3772 = vld [vmem:[%s3738 + $0x108] sm:$0xf]
    %v3773 = vld [vmem:[%s3738 + $0x110] sm:$0xf]
    %v3774 = vld [vmem:[%s3738 + $0x118] sm:$0xf]
    %v3775 = vld [vmem:[%s3738 + $0x120] sm:$0xf]
    %v3776 = vld [vmem:[%s3738 + $0x128] sm:$0xf]
    %v3777 = vld [vmem:[%s3738 + $0x130] sm:$0xf]
    %v3778 = vld [vmem:[%s3738 + $0x138] sm:$0xf]
    %v3779 = vld [vmem:[%s3738 + $0x140] sm:$0xf]
    %v3780 = vld [vmem:[%s3738 + $0x148] sm:$0xf]
    %v3781 = vld [vmem:[%s3738 + $0x150] sm:$0xf]
    %v3782 = vld [vmem:[%s3738 + $0x158] sm:$0xf]
    %v3783 = vld [vmem:[%s3738 + $0x160] sm:$0xf]
    %v3784 = vld [vmem:[%s3738 + $0x168] sm:$0xf]
    %v3785 = vld [vmem:[%s3738 + $0x170] sm:$0xf]
    %v3786 = vld [vmem:[%s3738 + $0x178] sm:$0xf]
    %s3787 = scalar_lea.vmem [#allocation6], 4
    %v3788 = vld [vmem:[%s3787] sm:$0x1]
    %v3790 = vperm.slane %v3788, 0
    %v3840 = vunpack.c.l.b16 %v3739
    %v3841 = vunpack.c.l.b16 %v3740
    %v3842 = vunpack.c.l.b16 %v3741
    %v3843 = vunpack.c.l.b16 %v3742
    %v3844 = vunpack.c.l.b16 %v3743
    %v3845 = vunpack.c.l.b16 %v3744
    %v3846 = vunpack.c.l.b16 %v3745
    %v3847 = vunpack.c.l.b16 %v3746
    %v3848 = vunpack.c.l.b16 %v3747
    %v3849 = vunpack.c.l.b16 %v3748
    %v3850 = vunpack.c.l.b16 %v3749
    %v3851 = vunpack.c.l.b16 %v3750
    %v3852 = vunpack.c.l.b16 %v3751
    %v3853 = vunpack.c.l.b16 %v3752
    %v3854 = vunpack.c.l.b16 %v3753
    %v3855 = vunpack.c.l.b16 %v3754
    %v3856 = vunpack.c.l.b16 %v3755
    %v3857 = vunpack.c.l.b16 %v3756
    %v3858 = vunpack.c.l.b16 %v3757
    %v3859 = vunpack.c.l.b16 %v3758
    %v3860 = vunpack.c.l.b16 %v3759
    %v3861 = vunpack.c.l.b16 %v3760
    %v3862 = vunpack.c.l.b16 %v3761
    %v3863 = vunpack.c.l.b16 %v3762
    %v3864 = vunpack.c.l.b16 %v3763
    %v3865 = vunpack.c.l.b16 %v3764
    %v3866 = vunpack.c.l.b16 %v3765
    %v3867 = vunpack.c.l.b16 %v3766
    %v3868 = vunpack.c.l.b16 %v3767
    %v3869 = vunpack.c.l.b16 %v3768
    %v3870 = vunpack.c.l.b16 %v3769
    %v3871 = vunpack.c.l.b16 %v3770
    %v3872 = vunpack.c.l.b16 %v3771
    %v3873 = vunpack.c.l.b16 %v3772
    %v3874 = vunpack.c.l.b16 %v3773
    %v3875 = vunpack.c.l.b16 %v3774
    %v3876 = vunpack.c.l.b16 %v3775
    %v3877 = vunpack.c.l.b16 %v3776
    %v3878 = vunpack.c.l.b16 %v3777
    %v3879 = vunpack.c.l.b16 %v3778
    %v3880 = vunpack.c.l.b16 %v3779
    %v3881 = vunpack.c.l.b16 %v3780
    %v3882 = vunpack.c.l.b16 %v3781
    %v3883 = vunpack.c.l.b16 %v3782
    %v3884 = vunpack.c.l.b16 %v3783
    %v3885 = vunpack.c.l.b16 %v3784
    %v3886 = vunpack.c.l.b16 %v3785
    %v3887 = vunpack.c.l.b16 %v3786
    %v3888 = vpack.c.b16 %v3841, %v3840
    %v3889 = vpack.c.b16 %v3843, %v3842
    %v3890 = vpack.c.b16 %v3845, %v3844
    %v3891 = vpack.c.b16 %v3847, %v3846
    %v3892 = vpack.c.b16 %v3849, %v3848
    %v3893 = vpack.c.b16 %v3851, %v3850
    %v3894 = vpack.c.b16 %v3853, %v3852
    %v3895 = vpack.c.b16 %v3855, %v3854
    %v3896 = vpack.c.b16 %v3857, %v3856
    %v3897 = vpack.c.b16 %v3859, %v3858
    %v3898 = vpack.c.b16 %v3861, %v3860
    %v3899 = vpack.c.b16 %v3863, %v3862
    %v3900 = vpack.c.b16 %v3865, %v3864
    %v3901 = vpack.c.b16 %v3867, %v3866
    %v3902 = vpack.c.b16 %v3869, %v3868
    %v3903 = vpack.c.b16 %v3871, %v3870
    %v3904 = vpack.c.b16 %v3873, %v3872
    %v3905 = vpack.c.b16 %v3875, %v3874
    %v3906 = vpack.c.b16 %v3877, %v3876
    %v3907 = vpack.c.b16 %v3879, %v3878
    %v3908 = vpack.c.b16 %v3881, %v3880
    %v3909 = vpack.c.b16 %v3883, %v3882
    %v3910 = vpack.c.b16 %v3885, %v3884
    %v3911 = vpack.c.b16 %v3887, %v3886
    %3936 = vmatpush.bf16.msra.mxu0 %v3895
    %3937 = vmatpush.bf16.msra.mxu0 %v3894
    %3938 = vmatpush.bf16.msra.mxu0 %v3893
    %3939 = vmatpush.bf16.msra.mxu0 %v3892
    %3940 = vmatpush.bf16.msra.mxu0 %v3891
    %3941 = vmatpush.bf16.msra.mxu0 %v3890
    %3942 = vmatpush.bf16.msra.mxu0 %v3889
    %3943 = vmatpush.bf16.msra.mxu0 %v3888
    %3944 = vmatmul.bf16.gmra.mxu0 %v3735
    %v3945 = vpop.f32.mrf.mxu0
    %v3946 = vadd.f32 %v3790, %v3945
    %v3947 = vpop.f32.mrf.mxu0
    %v3948 = vadd.f32 %v3790, %v3947
    %3949 = vdwg.mxu0
    %3950 = vmatpush.bf16.msra.mxu0 %v3903
    %3951 = vmatpush.bf16.msra.mxu0 %v3902
    %3952 = vmatpush.bf16.msra.mxu0 %v3901
    %3953 = vmatpush.bf16.msra.mxu0 %v3900
    %3954 = vmatpush.bf16.msra.mxu0 %v3899
    %3955 = vmatpush.bf16.msra.mxu0 %v3898
    %3956 = vmatpush.bf16.msra.mxu0 %v3897
    %3957 = vmatpush.bf16.msra.mxu0 %v3896
    %3958 = vmatmul.bf16.gmra.mxu0 %v3736
    %v3959 = vpop.f32.mrf.mxu0
    %v3960 = vadd.f32 %v3946, %v3959
    %v3961 = vpop.f32.mrf.mxu0
    %v3962 = vadd.f32 %v3948, %v3961
    %3963 = vdwg.mxu0
    %3964 = vmatpush.bf16.msra.mxu0 %v3911
    %3965 = vmatpush.bf16.msra.mxu0 %v3910
    %3966 = vmatpush.bf16.msra.mxu0 %v3909
    %3967 = vmatpush.bf16.msra.mxu0 %v3908
    %3968 = vmatpush.bf16.msra.mxu0 %v3907
    %3969 = vmatpush.bf16.msra.mxu0 %v3906
    %3970 = vmatpush.bf16.msra.mxu0 %v3905
    %3971 = vmatpush.bf16.msra.mxu0 %v3904
    %3972 = vmatmul.bf16.gmra.mxu0 %v3737
    %v3973 = vpop.f32.mrf.mxu0
    %v3974 = vadd.f32 %v3960, %v3973
    %v3975 = vpop.f32.mrf.mxu0
    %v3976 = vadd.f32 %v3962, %v3975
    %3977 = vdwg.mxu0
    %v3978 = vmax.f32 %v3974, 0.0
    %v3979 = vmax.f32 %v3976, 0.0
    %vm3980 = vcmp.lt.s32.totalorder %v3295, 0
    %v3981 = vsub.s32 0, %v3295
    %v3982 = vsel %vm3980, %v3981, %v3295
    %v3983 = vshrl.u32 %v3982, 2
    %v3984 = vand.u32 %v3982, 3
    %v3985 = vsub.s32 0, %v3984
    %v3986 = vsel %vm3980, %v3985, %v3984
    %vm3987 = vcmp.lt.s32.totalorder %v3296, 0
    %v3988 = vsub.s32 0, %v3296
    %v3989 = vsel %vm3987, %v3988, %v3296
    %v3990 = vshrl.u32 %v3989, 2
    %v3991 = vand.u32 %v3989, 3
    %v3992 = vsub.s32 0, %v3991
    %v3993 = vsel %vm3987, %v3992, %v3991
    %vm3994 = vcmp.ne.s32.totalorder %v3986, 0
    %vm3995 = vcmp.ne.s32.totalorder %v3993, 0
    %vm3996 = vcmp.lt.s32.totalorder %v3986, 0
    %vm3997 = vcmp.lt.s32.totalorder %v3993, 0
    %vm3998 = vmand %vm3996, %vm3994
    %vm3999 = vmand %vm3997, %vm3995
    %v4000 = vadd.s32 %v3986, 4
    %v4001 = vadd.s32 %v3993, 4
    %v4002 = vsel %vm3998, %v4000, %v3986
    %v4003 = vsel %vm3999, %v4001, %v3993
    %vm4004 = vcmp.eq.s32.totalorder %v4002, 0
    %vm4005 = vcmp.eq.s32.totalorder %v4003, 0
    %v4006 = vrot.slane %v3978, 7
    %v4007 = vrot.slane %v3979, 7
    %v4008 = vsel %vm3355, %v4006, %v4007
    %v4009 = vsel %vm3355, %v4007, %v4006
    %v4010 = vsel %vm4004, 1, 0
    %v4011 = vsel %vm4005, 1, 0
    %vm4012 = vcmp.eq.s32.totalorder %v4010, 1
    %vm4013 = vcmp.eq.s32.totalorder %v4011, 1
    %v4014 = vsel %vm4012, 0.0, %v4009
    %v4015 = vsel %vm4013, 0.0, %v4008
    %vm4016 = vcmp.eq.s32.totalorder %v4002, 3
    %vm4017 = vcmp.eq.s32.totalorder %v4003, 3
    %v4018 = vrot.slane %v3978, 1
    %v4019 = vrot.slane %v3979, 1
    %v4020 = vsel %vm3380, %v4018, %v4019
    %v4021 = vsel %vm3380, %v4019, %v4018
    %v4022 = vsel %vm4016, 1, 0
    %v4023 = vsel %vm4017, 1, 0
    %vm4024 = vcmp.eq.s32.totalorder %v4022, 1
    %vm4025 = vcmp.eq.s32.totalorder %v4023, 1
    %v4026 = vsel %vm4024, 0.0, %v4020
    %v4027 = vsel %vm4025, 0.0, %v4021
    %4030 = vrot.lane.b32.xlu0 %v3978, 64
    %v4031 = vpop.permute.xlu0 %4030
    %4032 = vrot.lane.b32.xlu0 %v3979, 64
    %v4033 = vpop.permute.xlu0 %4032
    %v4036 = vsel %vm1409, %v4014, %v4031
    %v4037 = vsel %vm1409, %v4015, %v4033
    %v4038 = vpack.c.bf16 %v4037, %v4036
    %v4039 = vpack.c.bf16 %v4027, %v4026
    %s4040 = scalar_lea.vmem [#allocation4], 2688
    %v4041 = vld [vmem:[%s4040] sm:$0xf]
    %v4042 = vld [vmem:[%s4040 + $0x8] sm:$0xf]
    %v4043 = vld [vmem:[%s4040 + $0x10] sm:$0xf]
    %v4044 = vld [vmem:[%s4040 + $0x18] sm:$0xf]
    %v4045 = vld [vmem:[%s4040 + $0x20] sm:$0xf]
    %v4046 = vld [vmem:[%s4040 + $0x28] sm:$0xf]
    %v4047 = vld [vmem:[%s4040 + $0x30] sm:$0xf]
    %v4048 = vld [vmem:[%s4040 + $0x38] sm:$0xf]
    %v4049 = vld [vmem:[%s4040 + $0x40] sm:$0xf]
    %v4050 = vld [vmem:[%s4040 + $0x48] sm:$0xf]
    %v4051 = vld [vmem:[%s4040 + $0x50] sm:$0xf]
    %v4052 = vld [vmem:[%s4040 + $0x58] sm:$0xf]
    %v4053 = vld [vmem:[%s4040 + $0x60] sm:$0xf]
    %v4054 = vld [vmem:[%s4040 + $0x68] sm:$0xf]
    %v4055 = vld [vmem:[%s4040 + $0x70] sm:$0xf]
    %v4056 = vld [vmem:[%s4040 + $0x78] sm:$0xf]
    %v4057 = vld [vmem:[%s4040 + $0x80] sm:$0xf]
    %v4058 = vld [vmem:[%s4040 + $0x88] sm:$0xf]
    %v4059 = vld [vmem:[%s4040 + $0x90] sm:$0xf]
    %v4060 = vld [vmem:[%s4040 + $0x98] sm:$0xf]
    %v4061 = vld [vmem:[%s4040 + $0xa0] sm:$0xf]
    %v4062 = vld [vmem:[%s4040 + $0xa8] sm:$0xf]
    %v4063 = vld [vmem:[%s4040 + $0xb0] sm:$0xf]
    %v4064 = vld [vmem:[%s4040 + $0xb8] sm:$0xf]
    %v4089 = vunpack.c.l.b16 %v4041
    %v4090 = vunpack.c.l.b16 %v4042
    %v4091 = vunpack.c.l.b16 %v4043
    %v4092 = vunpack.c.l.b16 %v4044
    %v4093 = vunpack.c.l.b16 %v4045
    %v4094 = vunpack.c.l.b16 %v4046
    %v4095 = vunpack.c.l.b16 %v4047
    %v4096 = vunpack.c.l.b16 %v4048
    %v4097 = vunpack.c.l.b16 %v4049
    %v4098 = vunpack.c.l.b16 %v4050
    %v4099 = vunpack.c.l.b16 %v4051
    %v4100 = vunpack.c.l.b16 %v4052
    %v4101 = vunpack.c.l.b16 %v4053
    %v4102 = vunpack.c.l.b16 %v4054
    %v4103 = vunpack.c.l.b16 %v4055
    %v4104 = vunpack.c.l.b16 %v4056
    %v4105 = vunpack.c.l.b16 %v4057
    %v4106 = vunpack.c.l.b16 %v4058
    %v4107 = vunpack.c.l.b16 %v4059
    %v4108 = vunpack.c.l.b16 %v4060
    %v4109 = vunpack.c.l.b16 %v4061
    %v4110 = vunpack.c.l.b16 %v4062
    %v4111 = vunpack.c.l.b16 %v4063
    %v4112 = vunpack.c.l.b16 %v4064
    %v4113 = vpack.c.b16 %v4090, %v4089
    %v4114 = vpack.c.b16 %v4092, %v4091
    %v4115 = vpack.c.b16 %v4094, %v4093
    %v4116 = vpack.c.b16 %v4096, %v4095
    %v4117 = vpack.c.b16 %v4098, %v4097
    %v4118 = vpack.c.b16 %v4100, %v4099
    %v4119 = vpack.c.b16 %v4102, %v4101
    %v4120 = vpack.c.b16 %v4104, %v4103
    %v4121 = vpack.c.b16 %v4106, %v4105
    %v4122 = vpack.c.b16 %v4108, %v4107
    %v4123 = vpack.c.b16 %v4110, %v4109
    %v4124 = vpack.c.b16 %v4112, %v4111
    %4139 = vrot.lane.b32.xlu0 %v3974, 64
    %v4140 = vpop.permute.xlu0 %4139
    %4141 = vrot.lane.b32.xlu0 %v3976, 64
    %v4142 = vpop.permute.xlu0 %4141
    %v4146 = vsel %vm1409, %v4039, 0
    %4148 = vmatpush.bf16.msra.mxu0 %v4120
    %4149 = vmatpush.bf16.msra.mxu0 %v4119
    %4150 = vmatpush.bf16.msra.mxu0 %v4118
    %4151 = vmatpush.bf16.msra.mxu0 %v4117
    %4152 = vmatpush.bf16.msra.mxu0 %v4116
    %4153 = vmatpush.bf16.msra.mxu0 %v4115
    %4154 = vmatpush.bf16.msra.mxu0 %v4114
    %4155 = vmatpush.bf16.msra.mxu0 %v4113
    %4156 = vmatmul.bf16.gmra.mxu0 %v4038
    %v4157 = vpop.f32.mrf.mxu0
    %v4158 = vadd.f32 %v4140, %v4157
    %v4159 = vpop.f32.mrf.mxu0
    %v4160 = vadd.f32 %v4142, %v4159
    %4161 = vdwg.mxu0
    %4162 = vmatpush.bf16.msra.mxu0 0
    %4163 = vmatpush.bf16.msra.mxu0 0
    %4164 = vmatpush.bf16.msra.mxu0 0
    %4165 = vmatpush.bf16.msra.mxu0 0
    %4166 = vmatpush.bf16.msra.mxu0 %v4124
    %4167 = vmatpush.bf16.msra.mxu0 %v4123
    %4168 = vmatpush.bf16.msra.mxu0 %v4122
    %4169 = vmatpush.bf16.msra.mxu0 %v4121
    %4170 = vmatmul.bf16.gmra.mxu0 %v4146
    %v4171 = vpop.f32.mrf.mxu0
    %v4172 = vadd.f32 %v4158, %v4171
    %v4173 = vpop.f32.mrf.mxu0
    %v4174 = vadd.f32 %v4160, %v4173
    %4175 = vdwg.mxu0
    %v4176 = vmax.f32 %v4172, 0.0
    %v4177 = vmax.f32 %v4174, 0.0
    %v4178 = vrot.slane %v4176, 7
    %v4179 = vrot.slane %v4177, 7
    %v4180 = vsel %vm3355, %v4178, %v4179
    %v4181 = vsel %vm3355, %v4179, %v4178
    %v4182 = vsel %vm4012, 0.0, %v4181
    %v4183 = vsel %vm4013, 0.0, %v4180
    %v4184 = vrot.slane %v4176, 1
    %v4185 = vrot.slane %v4177, 1
    %v4186 = vsel %vm3380, %v4184, %v4185
    %v4187 = vsel %vm3380, %v4185, %v4184
    %v4188 = vsel %vm4024, 0.0, %v4186
    %v4189 = vsel %vm4025, 0.0, %v4187
    %4192 = vrot.lane.b32.xlu0 %v4176, 64
    %v4193 = vpop.permute.xlu0 %4192
    %4194 = vrot.lane.b32.xlu0 %v4177, 64
    %v4195 = vpop.permute.xlu0 %4194
    %v4198 = vsel %vm1409, %v4182, %v4193
    %v4199 = vsel %vm1409, %v4183, %v4195
    %v4200 = vpack.c.bf16 %v4199, %v4198
    %v4201 = vpack.c.bf16 %v4189, %v4188
    %v4202 = vld [vmem:[%s1] sm:$0xff]
    %v4203 = vld [vmem:[%s1 + $0x8] sm:$0xff]
    %v4204 = vrot.slane %v4202, 7
    %v4205 = vrot.slane %v4203, 7
    %v4206 = vsel %vm3355, %v4204, %v4205
    %v4207 = vsel %vm3355, %v4205, %v4204
    %v4208 = vsel %vm4012, 0.0, %v4207
    %v4209 = vsel %vm4013, 0.0, %v4206
    %v4210 = vrot.slane %v4202, 1
    %v4211 = vrot.slane %v4203, 1
    %v4212 = vsel %vm3380, %v4210, %v4211
    %v4213 = vsel %vm3380, %v4211, %v4210
    %v4214 = vsel %vm4024, 0.0, %v4212
    %v4215 = vsel %vm4025, 0.0, %v4213
    %4218 = vrot.lane.b32.xlu0 %v4202, 64
    %v4219 = vpop.permute.xlu0 %4218
    %4220 = vrot.lane.b32.xlu0 %v4203, 64
    %v4221 = vpop.permute.xlu0 %4220
    %v4224 = vsel %vm1409, %v4208, %v4219
    %v4225 = vsel %vm1409, %v4209, %v4221
    %v4226 = vpack.c.bf16 %v4225, %v4224
    %v4227 = vpack.c.bf16 %v4215, %v4214
    %s4228 = scalar_lea.vmem [#allocation4], 3072
    %v4229 = vld [vmem:[%s4228] sm:$0xf]
    %v4230 = vld [vmem:[%s4228 + $0x8] sm:$0xf]
    %v4231 = vld [vmem:[%s4228 + $0x10] sm:$0xf]
    %v4232 = vld [vmem:[%s4228 + $0x18] sm:$0xf]
    %v4233 = vld [vmem:[%s4228 + $0x20] sm:$0xf]
    %v4234 = vld [vmem:[%s4228 + $0x28] sm:$0xf]
    %v4235 = vld [vmem:[%s4228 + $0x30] sm:$0xf]
    %v4236 = vld [vmem:[%s4228 + $0x38] sm:$0xf]
    %v4237 = vld [vmem:[%s4228 + $0x40] sm:$0xf]
    %v4238 = vld [vmem:[%s4228 + $0x48] sm:$0xf]
    %v4239 = vld [vmem:[%s4228 + $0x50] sm:$0xf]
    %v4240 = vld [vmem:[%s4228 + $0x58] sm:$0xf]
    %v4241 = vld [vmem:[%s4228 + $0x60] sm:$0xf]
    %v4242 = vld [vmem:[%s4228 + $0x68] sm:$0xf]
    %v4243 = vld [vmem:[%s4228 + $0x70] sm:$0xf]
    %v4244 = vld [vmem:[%s4228 + $0x78] sm:$0xf]
    %v4245 = vld [vmem:[%s4228 + $0x80] sm:$0xf]
    %v4246 = vld [vmem:[%s4228 + $0x88] sm:$0xf]
    %v4247 = vld [vmem:[%s4228 + $0x90] sm:$0xf]
    %v4248 = vld [vmem:[%s4228 + $0x98] sm:$0xf]
    %v4249 = vld [vmem:[%s4228 + $0xa0] sm:$0xf]
    %v4250 = vld [vmem:[%s4228 + $0xa8] sm:$0xf]
    %v4251 = vld [vmem:[%s4228 + $0xb0] sm:$0xf]
    %v4252 = vld [vmem:[%s4228 + $0xb8] sm:$0xf]
    %s4253 = scalar_lea.vmem [#allocation4], 3456
    %v4254 = vld [vmem:[%s4253] sm:$0xf]
    %v4255 = vld [vmem:[%s4253 + $0x8] sm:$0xf]
    %v4256 = vld [vmem:[%s4253 + $0x10] sm:$0xf]
    %v4257 = vld [vmem:[%s4253 + $0x18] sm:$0xf]
    %v4258 = vld [vmem:[%s4253 + $0x20] sm:$0xf]
    %v4259 = vld [vmem:[%s4253 + $0x28] sm:$0xf]
    %v4260 = vld [vmem:[%s4253 + $0x30] sm:$0xf]
    %v4261 = vld [vmem:[%s4253 + $0x38] sm:$0xf]
    %v4262 = vld [vmem:[%s4253 + $0x40] sm:$0xf]
    %v4263 = vld [vmem:[%s4253 + $0x48] sm:$0xf]
    %v4264 = vld [vmem:[%s4253 + $0x50] sm:$0xf]
    %v4265 = vld [vmem:[%s4253 + $0x58] sm:$0xf]
    %v4266 = vld [vmem:[%s4253 + $0x60] sm:$0xf]
    %v4267 = vld [vmem:[%s4253 + $0x68] sm:$0xf]
    %v4268 = vld [vmem:[%s4253 + $0x70] sm:$0xf]
    %v4269 = vld [vmem:[%s4253 + $0x78] sm:$0xf]
    %v4270 = vld [vmem:[%s4253 + $0x80] sm:$0xf]
    %v4271 = vld [vmem:[%s4253 + $0x88] sm:$0xf]
    %v4272 = vld [vmem:[%s4253 + $0x90] sm:$0xf]
    %v4273 = vld [vmem:[%s4253 + $0x98] sm:$0xf]
    %v4274 = vld [vmem:[%s4253 + $0xa0] sm:$0xf]
    %v4275 = vld [vmem:[%s4253 + $0xa8] sm:$0xf]
    %v4276 = vld [vmem:[%s4253 + $0xb0] sm:$0xf]
    %v4277 = vld [vmem:[%s4253 + $0xb8] sm:$0xf]
    %v4302 = vunpack.c.l.b16 %v4254
    %v4303 = vunpack.c.l.b16 %v4255
    %v4304 = vunpack.c.l.b16 %v4256
    %v4305 = vunpack.c.l.b16 %v4257
    %v4306 = vunpack.c.l.b16 %v4258
    %v4307 = vunpack.c.l.b16 %v4259
    %v4308 = vunpack.c.l.b16 %v4260
    %v4309 = vunpack.c.l.b16 %v4261
    %v4310 = vunpack.c.l.b16 %v4262
    %v4311 = vunpack.c.l.b16 %v4263
    %v4312 = vunpack.c.l.b16 %v4264
    %v4313 = vunpack.c.l.b16 %v4265
    %v4314 = vunpack.c.l.b16 %v4266
    %v4315 = vunpack.c.l.b16 %v4267
    %v4316 = vunpack.c.l.b16 %v4268
    %v4317 = vunpack.c.l.b16 %v4269
    %v4318 = vunpack.c.l.b16 %v4270
    %v4319 = vunpack.c.l.b16 %v4271
    %v4320 = vunpack.c.l.b16 %v4272
    %v4321 = vunpack.c.l.b16 %v4273
    %v4322 = vunpack.c.l.b16 %v4274
    %v4323 = vunpack.c.l.b16 %v4275
    %v4324 = vunpack.c.l.b16 %v4276
    %v4325 = vunpack.c.l.b16 %v4277
    %v4326 = vpack.c.b16 %v4303, %v4302
    %v4327 = vpack.c.b16 %v4305, %v4304
    %v4328 = vpack.c.b16 %v4307, %v4306
    %v4329 = vpack.c.b16 %v4309, %v4308
    %v4330 = vpack.c.b16 %v4311, %v4310
    %v4331 = vpack.c.b16 %v4313, %v4312
    %v4332 = vpack.c.b16 %v4315, %v4314
    %v4333 = vpack.c.b16 %v4317, %v4316
    %v4334 = vpack.c.b16 %v4319, %v4318
    %v4335 = vpack.c.b16 %v4321, %v4320
    %v4336 = vpack.c.b16 %v4323, %v4322
    %v4337 = vpack.c.b16 %v4325, %v4324
    %v4351 = vsel %vm1409, %v4227, 0
    %4353 = vmatpush.bf16.msra.mxu0 %v4333
    %4354 = vmatpush.bf16.msra.mxu0 %v4332
    %4355 = vmatpush.bf16.msra.mxu0 %v4331
    %4356 = vmatpush.bf16.msra.mxu0 %v4330
    %4357 = vmatpush.bf16.msra.mxu0 %v4329
    %4358 = vmatpush.bf16.msra.mxu0 %v4328
    %4359 = vmatpush.bf16.msra.mxu0 %v4327
    %4360 = vmatpush.bf16.msra.mxu0 %v4326
    %4361 = vmatmul.bf16.gmra.mxu0 %v4226
    %v4362 = vpop.f32.mrf.mxu0
    %v4363 = vadd.f32 0.0, %v4362
    %v4364 = vpop.f32.mrf.mxu0
    %v4365 = vadd.f32 0.0, %v4364
    %4366 = vdwg.mxu0
    %4367 = vmatpush.bf16.msra.mxu0 0
    %4368 = vmatpush.bf16.msra.mxu0 0
    %4369 = vmatpush.bf16.msra.mxu0 0
    %4370 = vmatpush.bf16.msra.mxu0 0
    %4371 = vmatpush.bf16.msra.mxu0 %v4337
    %4372 = vmatpush.bf16.msra.mxu0 %v4336
    %4373 = vmatpush.bf16.msra.mxu0 %v4335
    %4374 = vmatpush.bf16.msra.mxu0 %v4334
    %4375 = vmatmul.bf16.gmra.mxu0 %v4351
    %v4376 = vpop.f32.mrf.mxu0
    %v4377 = vadd.f32 %v4363, %v4376
    %v4378 = vpop.f32.mrf.mxu0
    %v4379 = vadd.f32 %v4365, %v4378
    %4380 = vdwg.mxu0
    %v4405 = vunpack.c.l.b16 %v4229
    %v4406 = vunpack.c.l.b16 %v4230
    %v4407 = vunpack.c.l.b16 %v4231
    %v4408 = vunpack.c.l.b16 %v4232
    %v4409 = vunpack.c.l.b16 %v4233
    %v4410 = vunpack.c.l.b16 %v4234
    %v4411 = vunpack.c.l.b16 %v4235
    %v4412 = vunpack.c.l.b16 %v4236
    %v4413 = vunpack.c.l.b16 %v4237
    %v4414 = vunpack.c.l.b16 %v4238
    %v4415 = vunpack.c.l.b16 %v4239
    %v4416 = vunpack.c.l.b16 %v4240
    %v4417 = vunpack.c.l.b16 %v4241
    %v4418 = vunpack.c.l.b16 %v4242
    %v4419 = vunpack.c.l.b16 %v4243
    %v4420 = vunpack.c.l.b16 %v4244
    %v4421 = vunpack.c.l.b16 %v4245
    %v4422 = vunpack.c.l.b16 %v4246
    %v4423 = vunpack.c.l.b16 %v4247
    %v4424 = vunpack.c.l.b16 %v4248
    %v4425 = vunpack.c.l.b16 %v4249
    %v4426 = vunpack.c.l.b16 %v4250
    %v4427 = vunpack.c.l.b16 %v4251
    %v4428 = vunpack.c.l.b16 %v4252
    %v4429 = vpack.c.b16 %v4406, %v4405
    %v4430 = vpack.c.b16 %v4408, %v4407
    %v4431 = vpack.c.b16 %v4410, %v4409
    %v4432 = vpack.c.b16 %v4412, %v4411
    %v4433 = vpack.c.b16 %v4414, %v4413
    %v4434 = vpack.c.b16 %v4416, %v4415
    %v4435 = vpack.c.b16 %v4418, %v4417
    %v4436 = vpack.c.b16 %v4420, %v4419
    %v4437 = vpack.c.b16 %v4422, %v4421
    %v4438 = vpack.c.b16 %v4424, %v4423
    %v4439 = vpack.c.b16 %v4426, %v4425
    %v4440 = vpack.c.b16 %v4428, %v4427
    %v4454 = vsel %vm1409, %v4201, 0
    %4456 = vmatpush.bf16.msra.mxu0 %v4436
    %4457 = vmatpush.bf16.msra.mxu0 %v4435
    %4458 = vmatpush.bf16.msra.mxu0 %v4434
    %4459 = vmatpush.bf16.msra.mxu0 %v4433
    %4460 = vmatpush.bf16.msra.mxu0 %v4432
    %4461 = vmatpush.bf16.msra.mxu0 %v4431
    %4462 = vmatpush.bf16.msra.mxu0 %v4430
    %4463 = vmatpush.bf16.msra.mxu0 %v4429
    %4464 = vmatmul.bf16.gmra.mxu0 %v4200
    %v4465 = vpop.f32.mrf.mxu0
    %v4466 = vadd.f32 %v4377, %v4465
    %v4467 = vpop.f32.mrf.mxu0
    %v4468 = vadd.f32 %v4379, %v4467
    %4469 = vdwg.mxu0
    %4470 = vmatpush.bf16.msra.mxu0 0
    %4471 = vmatpush.bf16.msra.mxu0 0
    %4472 = vmatpush.bf16.msra.mxu0 0
    %4473 = vmatpush.bf16.msra.mxu0 0
    %4474 = vmatpush.bf16.msra.mxu0 %v4440
    %4475 = vmatpush.bf16.msra.mxu0 %v4439
    %4476 = vmatpush.bf16.msra.mxu0 %v4438
    %4477 = vmatpush.bf16.msra.mxu0 %v4437
    %4478 = vmatmul.bf16.gmra.mxu0 %v4454
    %v4479 = vpop.f32.mrf.mxu0
    %v4480 = vadd.f32 %v4466, %v4479
    %v4481 = vpop.f32.mrf.mxu0
    %v4482 = vadd.f32 %v4468, %v4481
    %4483 = vdwg.mxu0
    %s4484 = scalar_lea.vmem [#allocation6], 6
    %v4485 = vld [vmem:[%s4484] sm:$0x1]
    %v4487 = vperm.slane %v4485, 0
    %v4489 = vadd.f32 %v4480, %v4487
    %v4490 = vadd.f32 %v4482, %v4487
    %v4491 = vmax.f32 %v4489, 0.0
    %v4492 = vmax.f32 %v4490, 0.0
    %v4493 = vrot.slane %v4491, 7
    %v4494 = vrot.slane %v4492, 7
    %v4495 = vsel %vm3355, %v4493, %v4494
    %v4496 = vsel %vm3355, %v4494, %v4493
    %v4497 = vsel %vm4012, 0.0, %v4496
    %v4498 = vsel %vm4013, 0.0, %v4495
    %v4499 = vrot.slane %v4491, 1
    %v4500 = vrot.slane %v4492, 1
    %v4501 = vsel %vm3380, %v4499, %v4500
    %v4502 = vsel %vm3380, %v4500, %v4499
    %v4503 = vsel %vm4024, 0.0, %v4501
    %v4504 = vsel %vm4025, 0.0, %v4502
    %4507 = vrot.lane.b32.xlu0 %v4491, 64
    %v4508 = vpop.permute.xlu0 %4507
    %4509 = vrot.lane.b32.xlu0 %v4492, 64
    %v4510 = vpop.permute.xlu0 %4509
    %v4513 = vsel %vm1409, %v4497, %v4508
    %v4514 = vsel %vm1409, %v4498, %v4510
    %v4515 = vpack.c.bf16 %v4514, %v4513
    %v4516 = vpack.c.bf16 %v4504, %v4503
    %s4517 = scalar_lea.vmem [#allocation4], 3840
    %v4518 = vld [vmem:[%s4517] sm:$0xf]
    %v4519 = vld [vmem:[%s4517 + $0x8] sm:$0xf]
    %v4520 = vld [vmem:[%s4517 + $0x10] sm:$0xf]
    %v4521 = vld [vmem:[%s4517 + $0x18] sm:$0xf]
    %v4522 = vld [vmem:[%s4517 + $0x20] sm:$0xf]
    %v4523 = vld [vmem:[%s4517 + $0x28] sm:$0xf]
    %v4524 = vld [vmem:[%s4517 + $0x30] sm:$0xf]
    %v4525 = vld [vmem:[%s4517 + $0x38] sm:$0xf]
    %v4526 = vld [vmem:[%s4517 + $0x40] sm:$0xf]
    %v4527 = vld [vmem:[%s4517 + $0x48] sm:$0xf]
    %v4528 = vld [vmem:[%s4517 + $0x50] sm:$0xf]
    %v4529 = vld [vmem:[%s4517 + $0x58] sm:$0xf]
    %v4530 = vld [vmem:[%s4517 + $0x60] sm:$0xf]
    %v4531 = vld [vmem:[%s4517 + $0x68] sm:$0xf]
    %v4532 = vld [vmem:[%s4517 + $0x70] sm:$0xf]
    %v4533 = vld [vmem:[%s4517 + $0x78] sm:$0xf]
    %v4534 = vld [vmem:[%s4517 + $0x80] sm:$0xf]
    %v4535 = vld [vmem:[%s4517 + $0x88] sm:$0xf]
    %v4536 = vld [vmem:[%s4517 + $0x90] sm:$0xf]
    %v4537 = vld [vmem:[%s4517 + $0x98] sm:$0xf]
    %v4538 = vld [vmem:[%s4517 + $0xa0] sm:$0xf]
    %v4539 = vld [vmem:[%s4517 + $0xa8] sm:$0xf]
    %v4540 = vld [vmem:[%s4517 + $0xb0] sm:$0xf]
    %v4541 = vld [vmem:[%s4517 + $0xb8] sm:$0xf]
    %v4566 = vunpack.c.l.b16 %v4518
    %v4567 = vunpack.c.l.b16 %v4519
    %v4568 = vunpack.c.l.b16 %v4520
    %v4569 = vunpack.c.l.b16 %v4521
    %v4570 = vunpack.c.l.b16 %v4522
    %v4571 = vunpack.c.l.b16 %v4523
    %v4572 = vunpack.c.l.b16 %v4524
    %v4573 = vunpack.c.l.b16 %v4525
    %v4574 = vunpack.c.l.b16 %v4526
    %v4575 = vunpack.c.l.b16 %v4527
    %v4576 = vunpack.c.l.b16 %v4528
    %v4577 = vunpack.c.l.b16 %v4529
    %v4578 = vunpack.c.l.b16 %v4530
    %v4579 = vunpack.c.l.b16 %v4531
    %v4580 = vunpack.c.l.b16 %v4532
    %v4581 = vunpack.c.l.b16 %v4533
    %v4582 = vunpack.c.l.b16 %v4534
    %v4583 = vunpack.c.l.b16 %v4535
    %v4584 = vunpack.c.l.b16 %v4536
    %v4585 = vunpack.c.l.b16 %v4537
    %v4586 = vunpack.c.l.b16 %v4538
    %v4587 = vunpack.c.l.b16 %v4539
    %v4588 = vunpack.c.l.b16 %v4540
    %v4589 = vunpack.c.l.b16 %v4541
    %v4590 = vpack.c.b16 %v4567, %v4566
    %v4591 = vpack.c.b16 %v4569, %v4568
    %v4592 = vpack.c.b16 %v4571, %v4570
    %v4593 = vpack.c.b16 %v4573, %v4572
    %v4594 = vpack.c.b16 %v4575, %v4574
    %v4595 = vpack.c.b16 %v4577, %v4576
    %v4596 = vpack.c.b16 %v4579, %v4578
    %v4597 = vpack.c.b16 %v4581, %v4580
    %v4598 = vpack.c.b16 %v4583, %v4582
    %v4599 = vpack.c.b16 %v4585, %v4584
    %v4600 = vpack.c.b16 %v4587, %v4586
    %v4601 = vpack.c.b16 %v4589, %v4588
    %4616 = vrot.lane.b32.xlu0 %v4489, 64
    %v4617 = vpop.permute.xlu0 %4616
    %4618 = vrot.lane.b32.xlu0 %v4490, 64
    %v4619 = vpop.permute.xlu0 %4618
    %v4623 = vsel %vm1409, %v4516, 0
    %4625 = vmatpush.bf16.msra.mxu0 %v4597
    %4626 = vmatpush.bf16.msra.mxu0 %v4596
    %4627 = vmatpush.bf16.msra.mxu0 %v4595
    %4628 = vmatpush.bf16.msra.mxu0 %v4594
    %4629 = vmatpush.bf16.msra.mxu0 %v4593
    %4630 = vmatpush.bf16.msra.mxu0 %v4592
    %4631 = vmatpush.bf16.msra.mxu0 %v4591
    %4632 = vmatpush.bf16.msra.mxu0 %v4590
    %4633 = vmatmul.bf16.gmra.mxu0 %v4515
    %v4634 = vpop.f32.mrf.mxu0
    %v4635 = vadd.f32 %v4617, %v4634
    %v4636 = vpop.f32.mrf.mxu0
    %v4637 = vadd.f32 %v4619, %v4636
    %4638 = vdwg.mxu0
    %4639 = vmatpush.bf16.msra.mxu0 0
    %4640 = vmatpush.bf16.msra.mxu0 0
    %4641 = vmatpush.bf16.msra.mxu0 0
    %4642 = vmatpush.bf16.msra.mxu0 0
    %4643 = vmatpush.bf16.msra.mxu0 %v4601
    %4644 = vmatpush.bf16.msra.mxu0 %v4600
    %4645 = vmatpush.bf16.msra.mxu0 %v4599
    %4646 = vmatpush.bf16.msra.mxu0 %v4598
    %4647 = vmatmul.bf16.gmra.mxu0 %v4623
    %v4648 = vpop.f32.mrf.mxu0
    %v4649 = vadd.f32 %v4635, %v4648
    %v4650 = vpop.f32.mrf.mxu0
    %v4651 = vadd.f32 %v4637, %v4650
    %4652 = vdwg.mxu0
    %v4653 = vmax.f32 %v4649, 0.0
    %v4654 = vmax.f32 %v4651, 0.0
    %v4655 = vrot.slane %v4653, 7
    %v4656 = vrot.slane %v4654, 7
    %v4657 = vsel %vm3355, %v4655, %v4656
    %v4658 = vsel %vm3355, %v4656, %v4655
    %v4659 = vsel %vm4012, 0.0, %v4658
    %v4660 = vsel %vm4013, 0.0, %v4657
    %v4661 = vrot.slane %v4653, 1
    %v4662 = vrot.slane %v4654, 1
    %v4663 = vsel %vm3380, %v4661, %v4662
    %v4664 = vsel %vm3380, %v4662, %v4661
    %v4665 = vsel %vm4024, 0.0, %v4663
    %v4666 = vsel %vm4025, 0.0, %v4664
    %4669 = vrot.lane.b32.xlu0 %v4653, 64
    %v4670 = vpop.permute.xlu0 %4669
    %4671 = vrot.lane.b32.xlu0 %v4654, 64
    %v4672 = vpop.permute.xlu0 %4671
    %v4675 = vsel %vm1409, %v4659, %v4670
    %v4676 = vsel %vm1409, %v4660, %v4672
    %v4677 = vpack.c.bf16 %v4676, %v4675
    %v4678 = vpack.c.bf16 %v4666, %v4665
    %s4679 = scalar_lea.vmem [#allocation4], 4224
    %v4680 = vld [vmem:[%s4679] sm:$0xf]
    %v4681 = vld [vmem:[%s4679 + $0x8] sm:$0xf]
    %v4682 = vld [vmem:[%s4679 + $0x10] sm:$0xf]
    %v4683 = vld [vmem:[%s4679 + $0x18] sm:$0xf]
    %v4684 = vld [vmem:[%s4679 + $0x20] sm:$0xf]
    %v4685 = vld [vmem:[%s4679 + $0x28] sm:$0xf]
    %v4686 = vld [vmem:[%s4679 + $0x30] sm:$0xf]
    %v4687 = vld [vmem:[%s4679 + $0x38] sm:$0xf]
    %v4688 = vld [vmem:[%s4679 + $0x40] sm:$0xf]
    %v4689 = vld [vmem:[%s4679 + $0x48] sm:$0xf]
    %v4690 = vld [vmem:[%s4679 + $0x50] sm:$0xf]
    %v4691 = vld [vmem:[%s4679 + $0x58] sm:$0xf]
    %v4692 = vld [vmem:[%s4679 + $0x60] sm:$0xf]
    %v4693 = vld [vmem:[%s4679 + $0x68] sm:$0xf]
    %v4694 = vld [vmem:[%s4679 + $0x70] sm:$0xf]
    %v4695 = vld [vmem:[%s4679 + $0x78] sm:$0xf]
    %v4696 = vld [vmem:[%s4679 + $0x80] sm:$0xf]
    %v4697 = vld [vmem:[%s4679 + $0x88] sm:$0xf]
    %v4698 = vld [vmem:[%s4679 + $0x90] sm:$0xf]
    %v4699 = vld [vmem:[%s4679 + $0x98] sm:$0xf]
    %v4700 = vld [vmem:[%s4679 + $0xa0] sm:$0xf]
    %v4701 = vld [vmem:[%s4679 + $0xa8] sm:$0xf]
    %v4702 = vld [vmem:[%s4679 + $0xb0] sm:$0xf]
    %v4703 = vld [vmem:[%s4679 + $0xb8] sm:$0xf]
    %s4704 = scalar_lea.vmem [#allocation6], 8
    %v4705 = vld [vmem:[%s4704] sm:$0x1]
    %v4707 = vperm.slane %v4705, 0
    %v4733 = vunpack.c.l.b16 %v4680
    %v4734 = vunpack.c.l.b16 %v4681
    %v4735 = vunpack.c.l.b16 %v4682
    %v4736 = vunpack.c.l.b16 %v4683
    %v4737 = vunpack.c.l.b16 %v4684
    %v4738 = vunpack.c.l.b16 %v4685
    %v4739 = vunpack.c.l.b16 %v4686
    %v4740 = vunpack.c.l.b16 %v4687
    %v4741 = vunpack.c.l.b16 %v4688
    %v4742 = vunpack.c.l.b16 %v4689
    %v4743 = vunpack.c.l.b16 %v4690
    %v4744 = vunpack.c.l.b16 %v4691
    %v4745 = vunpack.c.l.b16 %v4692
    %v4746 = vunpack.c.l.b16 %v4693
    %v4747 = vunpack.c.l.b16 %v4694
    %v4748 = vunpack.c.l.b16 %v4695
    %v4749 = vunpack.c.l.b16 %v4696
    %v4750 = vunpack.c.l.b16 %v4697
    %v4751 = vunpack.c.l.b16 %v4698
    %v4752 = vunpack.c.l.b16 %v4699
    %v4753 = vunpack.c.l.b16 %v4700
    %v4754 = vunpack.c.l.b16 %v4701
    %v4755 = vunpack.c.l.b16 %v4702
    %v4756 = vunpack.c.l.b16 %v4703
    %v4757 = vpack.c.b16 %v4734, %v4733
    %v4758 = vpack.c.b16 %v4736, %v4735
    %v4759 = vpack.c.b16 %v4738, %v4737
    %v4760 = vpack.c.b16 %v4740, %v4739
    %v4761 = vpack.c.b16 %v4742, %v4741
    %v4762 = vpack.c.b16 %v4744, %v4743
    %v4763 = vpack.c.b16 %v4746, %v4745
    %v4764 = vpack.c.b16 %v4748, %v4747
    %v4765 = vpack.c.b16 %v4750, %v4749
    %v4766 = vpack.c.b16 %v4752, %v4751
    %v4767 = vpack.c.b16 %v4754, %v4753
    %v4768 = vpack.c.b16 %v4756, %v4755
    %v4782 = vsel %vm1409, %v4678, 0
    %4784 = vmatpush.bf16.msra.mxu0 %v4764
    %4785 = vmatpush.bf16.msra.mxu0 %v4763
    %4786 = vmatpush.bf16.msra.mxu0 %v4762
    %4787 = vmatpush.bf16.msra.mxu0 %v4761
    %4788 = vmatpush.bf16.msra.mxu0 %v4760
    %4789 = vmatpush.bf16.msra.mxu0 %v4759
    %4790 = vmatpush.bf16.msra.mxu0 %v4758
    %4791 = vmatpush.bf16.msra.mxu0 %v4757
    %4792 = vmatmul.bf16.gmra.mxu0 %v4677
    %v4793 = vpop.f32.mrf.mxu0
    %v4794 = vadd.f32 %v4707, %v4793
    %v4795 = vpop.f32.mrf.mxu0
    %v4796 = vadd.f32 %v4707, %v4795
    %4797 = vdwg.mxu0
    %4798 = vmatpush.bf16.msra.mxu0 0
    %4799 = vmatpush.bf16.msra.mxu0 0
    %4800 = vmatpush.bf16.msra.mxu0 0
    %4801 = vmatpush.bf16.msra.mxu0 0
    %4802 = vmatpush.bf16.msra.mxu0 %v4768
    %4803 = vmatpush.bf16.msra.mxu0 %v4767
    %4804 = vmatpush.bf16.msra.mxu0 %v4766
    %4805 = vmatpush.bf16.msra.mxu0 %v4765
    %4806 = vmatmul.bf16.gmra.mxu0 %v4782
    %v4807 = vpop.f32.mrf.mxu0
    %v4808 = vadd.f32 %v4794, %v4807
    %v4809 = vpop.f32.mrf.mxu0
    %v4810 = vadd.f32 %v4796, %v4809
    %4811 = vdwg.mxu0
    %v4812 = vmax.f32 %v4808, 0.0
    %v4813 = vmax.f32 %v4810, 0.0
    %vm4814 = vcmask 64512
    %4815 = vst.msk [vmem:[%s5] sm:$0xff] %vm4814, %v4812
    %4816 = vst.msk [vmem:[%s5 + $0x8] sm:$0xff] %vm4814, %v4813
    %4819 = vrot.lane.b32.xlu0 %v4808, 120
    %v4820 = vpop.permute.xlu0 %4819
    %4821 = vrot.lane.b32.xlu0 %v4810, 120
    %v4822 = vpop.permute.xlu0 %4821
    %4825 = vst.msk [vmem:[%s6] sm:$0xff] %vm4814, %v4820
    %4826 = vst.msk [vmem:[%s6 + $0x8] sm:$0xff] %vm4814, %v4822
    // Predicated region
    $region34: #{residual_ds16_feat_sw_box_forward.1} parent=1 // pred_check
      _
    $region35: #{residual_ds16_feat_sw_box_forward.1} parent=1 // pred_check_branch
      %4828 = sbr.rel (0) target = $region37
    $region36: #{residual_ds16_feat_sw_box_forward.1} parent=1 // pred_region
      _
    $region37: #{residual_ds16_feat_sw_box_forward.1} parent=1 // pred_fallthru
      _
    // Predicated region
    $region38: #{residual_ds16_feat_sw_box_forward.1} parent=1 // pred_check
      _
    $region39: #{residual_ds16_feat_sw_box_forward.1} parent=1 // pred_check_branch
      %4830 = sbr.rel (0) target = $region41
    $region40: #{residual_ds16_feat_sw_box_forward.1} parent=1 // pred_region
      _
    $region41: #{residual_ds16_feat_sw_box_forward.1} parent=1 // pred_fallthru
      _
    // Predicated region
    $region42: #{residual_ds16_feat_sw_box_forward.1} parent=1 // pred_check
      _
    $region43: #{residual_ds16_feat_sw_box_forward.1} parent=1 // pred_check_branch
      %4832 = sbr.rel (0) target = $region45
    $region44: #{residual_ds16_feat_sw_box_forward.1} parent=1 // pred_region
      _
    $region45: #{residual_ds16_feat_sw_box_forward.1} parent=1 // pred_fallthru
      _
    // Predicated region
    $region46: #{residual_ds16_feat_sw_box_forward.1} parent=1 // pred_check
      _
    $region47: #{residual_ds16_feat_sw_box_forward.1} parent=1 // pred_check_branch
      %4834 = sbr.rel (0) target = $region49
    $region48: #{residual_ds16_feat_sw_box_forward.1} parent=1 // pred_region
      _
    $region49: #{residual_ds16_feat_sw_box_forward.1} parent=1 // pred_fallthru
      _
    %4835 = vsyncpa [#allocation3], 1
    %4836 = vsyncpa [#allocation5], 1

</llo_original>
